<compile_context>
chip_gen: v7x
topology: tpu7x:2x2x1
jax: 0.10.0
libtpu: 0.0.40
codegen_flags: <defaults>
</compile_context>

<pallas_src>
import math

import jax
import jax.numpy as jnp
from jax.experimental import pallas as pl
from jax.experimental.pallas import tpu as pltpu

_TM = 512                        # node-row tile
_TK = 512                        # adjacency-column (reduction) tile
_LANE = 128                      # lane padding for feature dims
_VMEM_LIMIT = 32 * 1024 * 1024   # explicit scoped-VMEM budget (actual use ~3 MiB)


def _round_up(n, m):
    return ((n + m - 1) // m) * m


def _pad2d(a, shape):
    return jnp.pad(a, ((0, shape[0] - a.shape[0]), (0, shape[1] - a.shape[1])))


# ---------------------------------------------------------------------------
# Kernel 1: row-tiled projection   xw = x1 @ W1           (feeds conv1 agg)
# ---------------------------------------------------------------------------
def _project_kernel(x_ref, w_ref, xw_ref):
    xw_ref[...] = jnp.dot(
        x_ref[...], w_ref[...], preferred_element_type=jnp.float32
    ).astype(xw_ref.dtype)


# ---------------------------------------------------------------------------
# Kernel 2: conv1 aggregation (K-tiled) + fused conv2 linear.
#   acc    += adj_q[i,k] @ xw[k]                  (f32, int8 adj dequant to bf16)
#   at last k:
#     h1    = acc * row_scale + b1                (GCNConv1 output, pre-relu = x2)
#     z     = cat(relu(h1), relu(re1)) @ W2       (one fused K=256 dot)
# ---------------------------------------------------------------------------
def _conv1_kernel(adj_ref, xw_ref, rs_ref, re1_ref, b1_ref, w2_ref, z_ref, acc_ref):
    k = pl.program_id(1)

    @pl.when(k == 0)
    def _():
        acc_ref[...] = jnp.zeros_like(acc_ref)

    a = adj_ref[...].astype(jnp.bfloat16)      # int8 -> bf16 (unscaled)
    acc_ref[...] += jnp.dot(a, xw_ref[...], preferred_element_type=jnp.float32)

    @pl.when(k == pl.num_programs(1) - 1)
    def _():
        h1 = acc_ref[...] * rs_ref[...] + b1_ref[...]      # per-row dequant scale
        h1r = jnp.maximum(h1, 0.0).astype(jnp.bfloat16)
        re1r = jnp.maximum(re1_ref[...], 0).astype(jnp.bfloat16)
        cat = jnp.concatenate([h1r, re1r], axis=1)         # (TM, Hp + Fp)
        # TODO(synk): F.dropout(p=0.2) is identity in eval mode; not applied.
        z_ref[...] = jnp.dot(
            cat, w2_ref[...], preferred_element_type=jnp.float32
        ).astype(z_ref.dtype)


# ---------------------------------------------------------------------------
# Kernel 3: conv2 aggregation (K-tiled) + fused scatter_mean partials.
#   acc     += adj_q[i,k] @ z[k]
#   at last k:
#     h2     = relu(acc * row_scale + b2)
#     out[i] = M[:, i-block] @ h2                (per-row-tile partial, summed in JAX)
# ---------------------------------------------------------------------------
def _conv2_pool_kernel(adj_ref, rs_ref, z_ref, b2_ref, m_ref, out_ref, acc_ref):
    k = pl.program_id(1)

    @pl.when(k == 0)
    def _():
        acc_ref[...] = jnp.zeros_like(acc_ref)

    a = adj_ref[...].astype(jnp.bfloat16)
    acc_ref[...] += jnp.dot(a, z_ref[...], preferred_element_type=jnp.float32)

    @pl.when(k == pl.num_programs(1) - 1)
    def _():
        h2 = jnp.maximum(acc_ref[...] * rs_ref[...] + b2_ref[...], 0.0)
        out_ref[...] = jnp.dot(
            m_ref[...], h2.astype(jnp.bfloat16), preferred_element_type=jnp.float32)


# ---------------------------------------------------------------------------
# pallas_call wrappers
# ---------------------------------------------------------------------------
def _run_project(x1p, w1p, *, tm):
    n_pad, f_pad = x1p.shape
    h_pad = w1p.shape[1]
    return pl.pallas_call(
        _project_kernel,
        out_shape=jax.ShapeDtypeStruct((n_pad, h_pad), jnp.bfloat16),
        grid_spec=pltpu.PrefetchScalarGridSpec(
            num_scalar_prefetch=0, grid=(n_pad // tm,),
            in_specs=[pl.BlockSpec((tm, f_pad), lambda i: (i, 0)),
                      pl.BlockSpec((f_pad, h_pad), lambda i: (0, 0))],
            out_specs=pl.BlockSpec((tm, h_pad), lambda i: (i, 0))),
        compiler_params=pltpu.CompilerParams(
            dimension_semantics=("parallel",),
            vmem_limit_bytes=_VMEM_LIMIT),
    )(x1p, w1p)


def _run_conv1(adj_q, xw, rs, re1, b1, w2, *, tm, tk):
    n_pad = adj_q.shape[0]
    h_pad = xw.shape[1]
    f_pad = re1.shape[1]
    o_pad = w2.shape[1]
    return pl.pallas_call(
        _conv1_kernel,
        out_shape=jax.ShapeDtypeStruct((n_pad, o_pad), jnp.bfloat16),
        grid_spec=pltpu.PrefetchScalarGridSpec(
            num_scalar_prefetch=0, grid=(n_pad // tm, n_pad // tk),
            in_specs=[
                pl.BlockSpec((tm, tk), lambda i, k: (i, k)),           # adj tile (int8)
                pl.BlockSpec((tk, h_pad), lambda i, k: (k, 0)),        # xw K-tile
                pl.BlockSpec((tm, 1), lambda i, k: (i, 0)),            # per-row scale
                pl.BlockSpec((tm, f_pad), lambda i, k: (i, 0)),        # re1 row tile
                pl.BlockSpec((1, h_pad), lambda i, k: (0, 0)),         # b1
                pl.BlockSpec((h_pad + f_pad, o_pad), lambda i, k: (0, 0)),  # fused W2
            ],
            out_specs=pl.BlockSpec((tm, o_pad), lambda i, k: (i, 0)),
            scratch_shapes=[pltpu.VMEM((tm, h_pad), jnp.float32)]),
        compiler_params=pltpu.CompilerParams(
            dimension_semantics=("parallel", "arbitrary"),
            vmem_limit_bytes=_VMEM_LIMIT),
    )(adj_q, xw, rs, re1, b1, w2)


def _run_conv2_pool(adj_q, rs, z, b2, m, *, tm, tk):
    n_pad = adj_q.shape[0]
    o_pad = z.shape[1]
    b = m.shape[0]
    n_row = n_pad // tm
    return pl.pallas_call(
        _conv2_pool_kernel,
        out_shape=jax.ShapeDtypeStruct((n_row, b, o_pad), jnp.float32),
        grid_spec=pltpu.PrefetchScalarGridSpec(
            num_scalar_prefetch=0, grid=(n_row, n_pad // tk),
            in_specs=[
                pl.BlockSpec((tm, tk), lambda i, k: (i, k)),           # adj tile (int8)
                pl.BlockSpec((tm, 1), lambda i, k: (i, 0)),            # per-row scale
                pl.BlockSpec((tk, o_pad), lambda i, k: (k, 0)),        # z K-tile
                pl.BlockSpec((1, o_pad), lambda i, k: (0, 0)),         # b2
                pl.BlockSpec((b, tm), lambda i, k: (0, i)),            # mean-pool cols
            ],
            out_specs=pl.BlockSpec((None, b, o_pad), lambda i, k: (i, 0, 0)),
            scratch_shapes=[pltpu.VMEM((tm, o_pad), jnp.float32)]),
        compiler_params=pltpu.CompilerParams(
            dimension_semantics=("parallel", "arbitrary"),
            vmem_limit_bytes=_VMEM_LIMIT),
    )(adj_q, rs, z, b2, m)


# ---------------------------------------------------------------------------
# Plain-JAX graph glue (adjacency build / gathers / padding).
# ---------------------------------------------------------------------------
def build_adj_int8(edge_index, num_nodes, n_pad):
    """PyG GCNConv normalization A_hat = D^{-1/2}(A+I)D^{-1/2}, messages flow
    edge_index[0] -> edge_index[1].  Built directly in the padded buffer and
    quantized to int8 with a per-row scale so that  adj ~= adj_q * rs."""
    src, dst = edge_index[0], edge_index[1]
    a = jnp.zeros((n_pad, n_pad), jnp.float32)
    a = a.at[dst, src].add(1.0)
    diag = jnp.arange(num_nodes)
    a = a.at[diag, diag].add(1.0)                    # self-loops on real nodes only
    deg = jnp.sum(a, axis=1)
    dinv = jnp.where(deg > 0.0, jax.lax.rsqrt(deg), 0.0)
    a = a * dinv[:, None] * dinv[None, :]
    row_max = jnp.max(a, axis=1, keepdims=True)      # (Np, 1); 0 on padded rows
    rs = row_max * (1.0 / 127.0)                     # per-row dequant scale
    q = jnp.where(row_max > 0.0, a * (127.0 / jnp.maximum(row_max, 1e-30)), 0.0)
    adj_q = jnp.round(q).astype(jnp.int8)
    return adj_q, rs


def build_mean_pool(batch, num_graphs, n_pad):
    batch_p = jnp.full((n_pad,), -1, batch.dtype).at[: batch.shape[0]].set(batch)
    onehot = (batch_p[None, :] ==
              jnp.arange(num_graphs, dtype=batch.dtype)[:, None]).astype(jnp.float32)
    counts = jnp.maximum(onehot.sum(axis=1, keepdims=True), 1.0)
    return (onehot / counts).astype(jnp.bfloat16)    # (B, Np) bf16


@jax.jit
def td_rumor_gcn_forward(x, edge_index, batch, root_index, params):
    n, f = x.shape
    h = params["W1"].shape[1]
    o = params["b2"].shape[0]
    b = root_index.shape[0]
    tm, tk = _TM, _TK

    blk = tm * tk // math.gcd(tm, tk)
    n_pad = _round_up(max(n, blk), blk)
    f_pad = _round_up(f, _LANE)
    h_pad = _round_up(h, _LANE)
    o_pad = _round_up(o, _LANE)

    x1 = x.astype(jnp.float32)

    # Only O(N^2) operand: normalized adjacency, int8 + per-row f32 scale.
    adj_q, rs = build_adj_int8(edge_index, n, n_pad)

    # root_extend #1 is a plain row gather of x1 -- no dense matmul.
    re1 = x1[root_index][batch]                                  # (N, F)
    re1_p = _pad2d(re1, (n_pad, f_pad)).astype(jnp.bfloat16)

    x1_p = _pad2d(x1, (n_pad, f_pad)).astype(jnp.bfloat16)
    w1_p = _pad2d(params["W1"], (f_pad, h_pad)).astype(jnp.bfloat16)
    b1_p = jnp.zeros((1, h_pad), jnp.float32).at[0, :h].set(params["b1"])

    # Fused conv2 weight: rows [0:h] act on relu(h1), rows [h_pad:h_pad+f] on relu(re1).
    w2 = params["W2"]
    w2_p = (jnp.zeros((h_pad + f_pad, o_pad), jnp.float32)
            .at[:h, :o].set(w2[:h])
            .at[h_pad:h_pad + f, :o].set(w2[h:])).astype(jnp.bfloat16)
    b2_p = jnp.zeros((1, o_pad), jnp.float32).at[0, :o].set(params["b2"])

    m = build_mean_pool(batch, b, n_pad)                         # (B, Np) bf16

    xw = _run_project(x1_p, w1_p, tm=tm)                         # (Np, Hp) bf16
    z = _run_conv1(adj_q, xw, rs, re1_p, b1_p, w2_p, tm=tm, tk=tk)    # (Np, Op) bf16
    partials = _run_conv2_pool(adj_q, rs, z, b2_p, m, tm=tm, tk=tk)   # (Nt, B, Op) f32
    pooled = jnp.sum(partials, axis=0)                           # (B, Op)

    # Pooled root_extend #2 over each graph == h1[root_index]; tiny (B, Np) matmul.
    adj_root = adj_q[root_index].astype(jnp.float32) * rs[root_index]     # (B, Np)
    root_h1 = (adj_root @ xw.astype(jnp.float32))[:, :h] + params["b1"]   # (B, H)

    return jnp.concatenate([pooled[:, :o], root_h1], axis=1)     # (B, O + H)


# ---------------------------------------------------------------------------
# Pure-JAX (f32) reference of the PyTorch forward, for a correctness check.
# ---------------------------------------------------------------------------
def gcn_norm_adj(edge_index, num_nodes):
    row, col = edge_index[0], edge_index[1]
    a = jnp.zeros((num_nodes, num_nodes), jnp.float32)
    a = a.at[col, row].add(1.0)
    a = a + jnp.eye(num_nodes, dtype=jnp.float32)
    deg = a.sum(axis=1)
    dinv = jnp.where(deg > 0, 1.0 / jnp.sqrt(deg), 0.0)
    return dinv[:, None] * a * dinv[None, :]


def reference_forward(x, edge_index, batch, root_index, params):
    x1 = x.astype(jnp.float32)
    n = x1.shape[0]
    b = root_index.shape[0]
    adj = gcn_norm_adj(edge_index, n)
    h1 = adj @ (x1 @ params["W1"]) + params["b1"]
    re1 = x1[root_index][batch]
    c = jax.nn.relu(jnp.concatenate([h1, re1], axis=1))
    h2 = jax.nn.relu(adj @ (c @ params["W2"]) + params["b2"])
    re2 = h1[root_index][batch]
    cat2 = jnp.concatenate([h2, re2], axis=1)
    sums = jax.ops.segment_sum(cat2, batch, num_segments=b)
    counts = jax.ops.segment_sum(jnp.ones((n,), jnp.float32), batch, num_segments=b)
    return sums / counts[:, None]


if __name__ == "__main__":
    key = jax.random.PRNGKey(0)
    kx, kw1, kw2 = jax.random.split(key, 3)

    in_feats, hid_feats, out_feats = 16, 32, 64
    nodes_per_graph, num_graphs = 8, 2
    n = nodes_per_graph * num_graphs

    # Two simple tree-shaped graphs, rooted at node 0 of each graph.
    tree = [(0, 1), (0, 2), (1, 3), (1, 4), (2, 5), (2, 6), (3, 7)]
    src, dst = [], []
    for g in range(num_graphs):
        off = g * nodes_per_graph
        for s, d in tree:
            src.append(s + off)
            dst.append(d + off)
    edge_index = jnp.array([src, dst], dtype=jnp.int32)          # (2, E)
    batch = jnp.repeat(jnp.arange(num_graphs, dtype=jnp.int32), nodes_per_graph)
    root_index = jnp.arange(num_graphs, dtype=jnp.int32) * nodes_per_graph

    x = jax.random.normal(kx, (n, in_feats), jnp.float32)        # data.x
    params = {
        "W1": jax.random.normal(kw1, (in_feats, hid_feats), jnp.float32) * 0.1,
        "b1": jnp.zeros((hid_feats,), jnp.float32),
        "W2": jax.random.normal(kw2, (hid_feats + in_feats, out_feats),
                                jnp.float32) * 0.1,
        "b2": jnp.zeros((out_feats,), jnp.float32),
    }

    out = td_rumor_gcn_forward(x, edge_index, batch, root_index, params)
    out = jax.block_until_ready(out)

    assert out.shape == (num_graphs, out_feats + hid_feats), out.shape

    ref = reference_forward(x, edge_index, batch, root_index, params)
    max_err = float(jnp.max(jnp.abs(out - ref)))
    assert jnp.allclose(out, ref, atol=5e-2, rtol=5e-2), max_err

    print("KERNEL_OK")
</pallas_src>

<mosaic_0001>
module attributes {stable_mosaic.version = 11 : i64} {
  func.func private @main(%arg0: i32) attributes {dimension_semantics = [#tpu.dimension_semantics<core_parallel>], iteration_bounds = array<i64: 2>, tpu.core_type = #tpu.core_type<sc_scalar_subcore>, window_params = []} {
    return
  }
}

module attributes {stable_mosaic.version = 11 : i64} {
  func.func private @main(%arg0: i32) attributes {dimension_semantics = [#tpu.dimension_semantics<core_parallel>], iteration_bounds = array<i64: 2>, tpu.core_type = #tpu.core_type<sc_scalar_subcore>, window_params = []} {
    return
  }
}

module attributes {stable_mosaic.version = 11 : i64} {
  func.func @_project_kernel(%arg0: i32, %arg1: memref<512x128xbf16, #tpu.memory_space<vmem>>, %arg2: memref<128x128xbf16, #tpu.memory_space<vmem>>, %arg3: memref<512x128xbf16, #tpu.memory_space<vmem>>) attributes {dimension_semantics = [#tpu.dimension_semantics<parallel>], iteration_bounds = array<i64: 1>, scalar_prefetch = 0 : i64, scratch_operands = 0 : i64, tpu.core_type = #tpu.core_type<tc>, window_params = [{transform_indices = @transform_0, window_bounds = array<i64: 512, 128>}, {pipeline_mode = #tpu.pipeline_mode<synchronous>, transform_indices = @transform_1, window_bounds = array<i64: 128, 128>}, {transform_indices = @transform_2, window_bounds = array<i64: 512, 128>}]} {
    %c0 = arith.constant 0 : index
    %c0_0 = arith.constant 0 : index
    %0 = vector.load %arg1[%c0, %c0_0] : memref<512x128xbf16, #tpu.memory_space<vmem>>, vector<512x128xbf16>
    %c0_1 = arith.constant 0 : index
    %c0_2 = arith.constant 0 : index
    %1 = vector.load %arg2[%c0_1, %c0_2] : memref<128x128xbf16, #tpu.memory_space<vmem>>, vector<128x128xbf16>
    %cst = arith.constant dense<0.000000e+00> : vector<512x128xf32>
    %2 = tpu.matmul %0, %1, %cst {dimension_numbers = #tpu.dot_dimension_numbers<[1], [0], [0], [1], [0, 0, 1, 1], [], []>} : vector<512x128xbf16>, vector<128x128xbf16>, vector<512x128xf32> -> vector<512x128xf32>
    %3 = arith.truncf %2 : vector<512x128xf32> to vector<512x128xbf16>
    %c0_3 = arith.constant 0 : index
    %c0_4 = arith.constant 0 : index
    %4 = vector.load %arg3[%c0_3, %c0_4] : memref<512x128xbf16, #tpu.memory_space<vmem>>, vector<512x128xbf16>
    tpu.vector_store %arg3[%c0_3, %c0_4], %3 {strides = array<i32>} : memref<512x128xbf16, #tpu.memory_space<vmem>>, vector<512x128xbf16>,
    return
  }
  func.func @transform_0(%arg0: i32) -> (i32, i32) {
    %c0_i32 = arith.constant 0 : i32
    %c0_i32_0 = arith.constant 0 : i32
    return %arg0, %c0_i32 : i32, i32
  }
  func.func @transform_1(%arg0: i32) -> (i32, i32) {
    %c0_i32 = arith.constant 0 : i32
    %c0_i32_0 = arith.constant 0 : i32
    %c0_i32_1 = arith.constant 0 : i32
    return %c0_i32, %c0_i32_0 : i32, i32
  }
  func.func @transform_2(%arg0: i32) -> (i32, i32) {
    %c0_i32 = arith.constant 0 : i32
    %c0_i32_0 = arith.constant 0 : i32
    return %arg0, %c0_i32 : i32, i32
  }
}

module attributes {stable_mosaic.version = 11 : i64} {
  func.func @_conv1_kernel(%arg0: i32, %arg1: i32, %arg2: memref<512x512xi8, #tpu.memory_space<vmem>>, %arg3: memref<512x128xbf16, #tpu.memory_space<vmem>>, %arg4: memref<512x1xf32, #tpu.memory_space<vmem>>, %arg5: memref<512x128xbf16, #tpu.memory_space<vmem>>, %arg6: memref<1x128xf32, #tpu.memory_space<vmem>>, %arg7: memref<256x128xbf16, #tpu.memory_space<vmem>>, %arg8: memref<512x128xbf16, #tpu.memory_space<vmem>>, %arg9: memref<512x128xf32, #tpu.memory_space<vmem>>) attributes {dimension_semantics = [#tpu.dimension_semantics<parallel>, #tpu.dimension_semantics<arbitrary>], iteration_bounds = array<i64: 1, 1>, scalar_prefetch = 0 : i64, scratch_operands = 1 : i64, tpu.core_type = #tpu.core_type<tc>, window_params = [{transform_indices = @transform_0, window_bounds = array<i64: 512, 512>}, {transform_indices = @transform_1, window_bounds = array<i64: 512, 128>}, {transform_indices = @transform_2, window_bounds = array<i64: 512, 1>}, {transform_indices = @transform_3, window_bounds = array<i64: 512, 128>}, {pipeline_mode = #tpu.pipeline_mode<synchronous>, transform_indices = @transform_4, window_bounds = array<i64: 1, 128>}, {pipeline_mode = #tpu.pipeline_mode<synchronous>, transform_indices = @transform_5, window_bounds = array<i64: 256, 128>}, {transform_indices = @transform_6, window_bounds = array<i64: 512, 128>}]} {
    %c0_i32 = arith.constant 0 : i32
    %0 = arith.cmpi eq, %arg1, %c0_i32 : i32
    %1 = arith.extui %0 : i1 to i32
    %c0_i32_0 = arith.constant 0 : i32
    %2 = arith.cmpi ne, %1, %c0_i32_0 : i32
    scf.if %2 {
      %cst_10 = arith.constant 0.000000e+00 : f32
      %13 = vector.broadcast %cst_10 : f32 to vector<512x128xf32>
      %c0_11 = arith.constant 0 : index
      %c0_12 = arith.constant 0 : index
      %14 = vector.load %arg9[%c0_11, %c0_12] : memref<512x128xf32, #tpu.memory_space<vmem>>, vector<512x128xf32>
      tpu.vector_store %arg9[%c0_11, %c0_12], %13 {strides = array<i32>} : memref<512x128xf32, #tpu.memory_space<vmem>>, vector<512x128xf32>,
    } else {
    }
    %c0 = arith.constant 0 : index
    %c0_1 = arith.constant 0 : index
    %3 = vector.load %arg2[%c0, %c0_1] : memref<512x512xi8, #tpu.memory_space<vmem>>, vector<512x512xi8>
    %4 = arith.sitofp %3 : vector<512x512xi8> to vector<512x512xbf16>
    %c0_2 = arith.constant 0 : index
    %c0_3 = arith.constant 0 : index
    %5 = vector.load %arg9[%c0_2, %c0_3] : memref<512x128xf32, #tpu.memory_space<vmem>>, vector<512x128xf32>
    %c0_4 = arith.constant 0 : index
    %c0_5 = arith.constant 0 : index
    %6 = vector.load %arg3[%c0_4, %c0_5] : memref<512x128xbf16, #tpu.memory_space<vmem>>, vector<512x128xbf16>
    %cst = arith.constant dense<0.000000e+00> : vector<512x128xf32>
    %7 = tpu.matmul %4, %6, %cst {dimension_numbers = #tpu.dot_dimension_numbers<[1], [0], [0], [1], [0, 0, 1, 1], [], []>} : vector<512x512xbf16>, vector<512x128xbf16>, vector<512x128xf32> -> vector<512x128xf32>
    %8 = arith.addf %5, %7 : vector<512x128xf32>
    %c0_6 = arith.constant 0 : index
    %c0_7 = arith.constant 0 : index
    %9 = vector.load %arg9[%c0_6, %c0_7] : memref<512x128xf32, #tpu.memory_space<vmem>>, vector<512x128xf32>
    tpu.vector_store %arg9[%c0_6, %c0_7], %8 {strides = array<i32>} : memref<512x128xf32, #tpu.memory_space<vmem>>, vector<512x128xf32>,
    %c0_i32_8 = arith.constant 0 : i32
    %10 = arith.cmpi eq, %arg1, %c0_i32_8 : i32
    %11 = arith.extui %10 : i1 to i32
    %c0_i32_9 = arith.constant 0 : i32
    %12 = arith.cmpi ne, %11, %c0_i32_9 : i32
    scf.if %12 {
      %c0_10 = arith.constant 0 : index
      %c0_11 = arith.constant 0 : index
      %13 = vector.load %arg9[%c0_10, %c0_11] : memref<512x128xf32, #tpu.memory_space<vmem>>, vector<512x128xf32>
      %c0_12 = arith.constant 0 : index
      %c0_13 = arith.constant 0 : index
      %14 = vector.load %arg4[%c0_12, %c0_13] : memref<512x1xf32, #tpu.memory_space<vmem>>, vector<512x1xf32>
      %15 = vector.broadcast %14 : vector<512x1xf32> to vector<512x128xf32>
      %16 = arith.mulf %13, %15 : vector<512x128xf32>
      %c0_14 = arith.constant 0 : index
      %c0_15 = arith.constant 0 : index
      %17 = vector.load %arg6[%c0_14, %c0_15] : memref<1x128xf32, #tpu.memory_space<vmem>>, vector<1x128xf32>
      %18 = vector.broadcast %17 : vector<1x128xf32> to vector<512x128xf32>
      %19 = arith.addf %16, %18 : vector<512x128xf32>
      %cst_16 = arith.constant 0.000000e+00 : f32
      %20 = vector.broadcast %cst_16 : f32 to vector<512x128xf32>
      %21 = arith.maximumf %19, %20 : vector<512x128xf32>
      %22 = arith.truncf %21 : vector<512x128xf32> to vector<512x128xbf16>
      %c0_17 = arith.constant 0 : index
      %c0_18 = arith.constant 0 : index
      %23 = vector.load %arg5[%c0_17, %c0_18] : memref<512x128xbf16, #tpu.memory_space<vmem>>, vector<512x128xbf16>
      %cst_19 = arith.constant 0.000000e+00 : bf16
      %24 = vector.broadcast %cst_19 : bf16 to vector<512x128xbf16>
      %25 = arith.maximumf %23, %24 : vector<512x128xbf16>
      %26 = tpu.concatenate %22, %25 in 1 : vector<512x128xbf16>, vector<512x128xbf16> -> vector<512x256xbf16>
      %c0_20 = arith.constant 0 : index
      %c0_21 = arith.constant 0 : index
      %27 = vector.load %arg7[%c0_20, %c0_21] : memref<256x128xbf16, #tpu.memory_space<vmem>>, vector<256x128xbf16>
      %cst_22 = arith.constant dense<0.000000e+00> : vector<512x128xf32>
      %28 = tpu.matmul %26, %27, %cst_22 {dimension_numbers = #tpu.dot_dimension_numbers<[1], [0], [0], [1], [0, 0, 1, 1], [], []>} : vector<512x256xbf16>, vector<256x128xbf16>, vector<512x128xf32> -> vector<512x128xf32>
      %29 = arith.truncf %28 : vector<512x128xf32> to vector<512x128xbf16>
      %c0_23 = arith.constant 0 : index
      %c0_24 = arith.constant 0 : index
      %30 = vector.load %arg8[%c0_23, %c0_24] : memref<512x128xbf16, #tpu.memory_space<vmem>>, vector<512x128xbf16>
      tpu.vector_store %arg8[%c0_23, %c0_24], %29 {strides = array<i32>} : memref<512x128xbf16, #tpu.memory_space<vmem>>, vector<512x128xbf16>,
    } else {
    }
    return
  }
  func.func @transform_0(%arg0: i32, %arg1: i32) -> (i32, i32) {
    %c0_i32 = arith.constant 0 : i32
    return %arg0, %arg1 : i32, i32
  }
  func.func @transform_1(%arg0: i32, %arg1: i32) -> (i32, i32) {
    %c0_i32 = arith.constant 0 : i32
    %c0_i32_0 = arith.constant 0 : i32
    return %arg1, %c0_i32 : i32, i32
  }
  func.func @transform_2(%arg0: i32, %arg1: i32) -> (i32, i32) {
    %c0_i32 = arith.constant 0 : i32
    %c0_i32_0 = arith.constant 0 : i32
    return %arg0, %c0_i32 : i32, i32
  }
  func.func @transform_3(%arg0: i32, %arg1: i32) -> (i32, i32) {
    %c0_i32 = arith.constant 0 : i32
    %c0_i32_0 = arith.constant 0 : i32
    return %arg0, %c0_i32 : i32, i32
  }
  func.func @transform_4(%arg0: i32, %arg1: i32) -> (i32, i32) {
    %c0_i32 = arith.constant 0 : i32
    %c0_i32_0 = arith.constant 0 : i32
    %c0_i32_1 = arith.constant 0 : i32
    return %c0_i32, %c0_i32_0 : i32, i32
  }
  func.func @transform_5(%arg0: i32, %arg1: i32) -> (i32, i32) {
    %c0_i32 = arith.constant 0 : i32
    %c0_i32_0 = arith.constant 0 : i32
    %c0_i32_1 = arith.constant 0 : i32
    return %c0_i32, %c0_i32_0 : i32, i32
  }
  func.func @transform_6(%arg0: i32, %arg1: i32) -> (i32, i32) {
    %c0_i32 = arith.constant 0 : i32
    %c0_i32_0 = arith.constant 0 : i32
    return %arg0, %c0_i32 : i32, i32
  }
}

module attributes {stable_mosaic.version = 11 : i64} {
  func.func @_conv2_pool_kernel(%arg0: i32, %arg1: i32, %arg2: memref<512x512xi8, #tpu.memory_space<vmem>>, %arg3: memref<512x1xf32, #tpu.memory_space<vmem>>, %arg4: memref<512x128xbf16, #tpu.memory_space<vmem>>, %arg5: memref<1x128xf32, #tpu.memory_space<vmem>>, %arg6: memref<2x512xbf16, #tpu.memory_space<vmem>>, %arg7: memref<1x2x128xf32, #tpu.memory_space<vmem>>, %arg8: memref<512x128xf32, #tpu.memory_space<vmem>>) attributes {dimension_semantics = [#tpu.dimension_semantics<parallel>, #tpu.dimension_semantics<arbitrary>], iteration_bounds = array<i64: 1, 1>, scalar_prefetch = 0 : i64, scratch_operands = 1 : i64, tpu.core_type = #tpu.core_type<tc>, window_params = [{transform_indices = @transform_0, window_bounds = array<i64: 512, 512>}, {transform_indices = @transform_1, window_bounds = array<i64: 512, 1>}, {transform_indices = @transform_2, window_bounds = array<i64: 512, 128>}, {pipeline_mode = #tpu.pipeline_mode<synchronous>, transform_indices = @transform_3, window_bounds = array<i64: 1, 128>}, {transform_indices = @transform_4, window_bounds = array<i64: 2, 512>}, {transform_indices = @transform_5, window_bounds = array<i64: 1, 2, 128>}]} {
    %c0_i32 = arith.constant 0 : i32
    %0 = arith.cmpi eq, %arg1, %c0_i32 : i32
    %1 = arith.extui %0 : i1 to i32
    %c0_i32_0 = arith.constant 0 : i32
    %2 = arith.cmpi ne, %1, %c0_i32_0 : i32
    scf.if %2 {
      %cst_10 = arith.constant 0.000000e+00 : f32
      %13 = vector.broadcast %cst_10 : f32 to vector<512x128xf32>
      %c0_11 = arith.constant 0 : index
      %c0_12 = arith.constant 0 : index
      %14 = vector.load %arg8[%c0_11, %c0_12] : memref<512x128xf32, #tpu.memory_space<vmem>>, vector<512x128xf32>
      tpu.vector_store %arg8[%c0_11, %c0_12], %13 {strides = array<i32>} : memref<512x128xf32, #tpu.memory_space<vmem>>, vector<512x128xf32>,
    } else {
    }
    %c0 = arith.constant 0 : index
    %c0_1 = arith.constant 0 : index
    %3 = vector.load %arg2[%c0, %c0_1] : memref<512x512xi8, #tpu.memory_space<vmem>>, vector<512x512xi8>
    %4 = arith.sitofp %3 : vector<512x512xi8> to vector<512x512xbf16>
    %c0_2 = arith.constant 0 : index
    %c0_3 = arith.constant 0 : index
    %5 = vector.load %arg8[%c0_2, %c0_3] : memref<512x128xf32, #tpu.memory_space<vmem>>, vector<512x128xf32>
    %c0_4 = arith.constant 0 : index
    %c0_5 = arith.constant 0 : index
    %6 = vector.load %arg4[%c0_4, %c0_5] : memref<512x128xbf16, #tpu.memory_space<vmem>>, vector<512x128xbf16>
    %cst = arith.constant dense<0.000000e+00> : vector<512x128xf32>
    %7 = tpu.matmul %4, %6, %cst {dimension_numbers = #tpu.dot_dimension_numbers<[1], [0], [0], [1], [0, 0, 1, 1], [], []>} : vector<512x512xbf16>, vector<512x128xbf16>, vector<512x128xf32> -> vector<512x128xf32>
    %8 = arith.addf %5, %7 : vector<512x128xf32>
    %c0_6 = arith.constant 0 : index
    %c0_7 = arith.constant 0 : index
    %9 = vector.load %arg8[%c0_6, %c0_7] : memref<512x128xf32, #tpu.memory_space<vmem>>, vector<512x128xf32>
    tpu.vector_store %arg8[%c0_6, %c0_7], %8 {strides = array<i32>} : memref<512x128xf32, #tpu.memory_space<vmem>>, vector<512x128xf32>,
    %c0_i32_8 = arith.constant 0 : i32
    %10 = arith.cmpi eq, %arg1, %c0_i32_8 : i32
    %11 = arith.extui %10 : i1 to i32
    %c0_i32_9 = arith.constant 0 : i32
    %12 = arith.cmpi ne, %11, %c0_i32_9 : i32
    scf.if %12 {
      %c0_10 = arith.constant 0 : index
      %c0_11 = arith.constant 0 : index
      %13 = vector.load %arg8[%c0_10, %c0_11] : memref<512x128xf32, #tpu.memory_space<vmem>>, vector<512x128xf32>
      %c0_12 = arith.constant 0 : index
      %c0_13 = arith.constant 0 : index
      %14 = vector.load %arg3[%c0_12, %c0_13] : memref<512x1xf32, #tpu.memory_space<vmem>>, vector<512x1xf32>
      %15 = vector.broadcast %14 : vector<512x1xf32> to vector<512x128xf32>
      %16 = arith.mulf %13, %15 : vector<512x128xf32>
      %c0_14 = arith.constant 0 : index
      %c0_15 = arith.constant 0 : index
      %17 = vector.load %arg5[%c0_14, %c0_15] : memref<1x128xf32, #tpu.memory_space<vmem>>, vector<1x128xf32>
      %18 = vector.broadcast %17 : vector<1x128xf32> to vector<512x128xf32>
      %19 = arith.addf %16, %18 : vector<512x128xf32>
      %cst_16 = arith.constant 0.000000e+00 : f32
      %20 = vector.broadcast %cst_16 : f32 to vector<512x128xf32>
      %21 = arith.maximumf %19, %20 : vector<512x128xf32>
      %c0_17 = arith.constant 0 : index
      %c0_18 = arith.constant 0 : index
      %22 = vector.load %arg6[%c0_17, %c0_18] : memref<2x512xbf16, #tpu.memory_space<vmem>>, vector<2x512xbf16>
      %23 = arith.truncf %21 : vector<512x128xf32> to vector<512x128xbf16>
      %cst_19 = arith.constant dense<0.000000e+00> : vector<2x128xf32>
      %24 = tpu.matmul %22, %23, %cst_19 {dimension_numbers = #tpu.dot_dimension_numbers<[1], [0], [0], [1], [0, 0, 1, 1], [], []>} : vector<2x512xbf16>, vector<512x128xbf16>, vector<2x128xf32> -> vector<2x128xf32>
      %c0_20 = arith.constant 0 : index
      %c0_21 = arith.constant 0 : index
      %c0_22 = arith.constant 0 : index
      %25 = vector.load %arg7[%c0_20, %c0_21, %c0_22] : memref<1x2x128xf32, #tpu.memory_space<vmem>>, vector<1x2x128xf32>
      %26 = vector.shape_cast %25 : vector<1x2x128xf32> to vector<2x128xf32>
      %27 = vector.shape_cast %24 : vector<2x128xf32> to vector<1x2x128xf32>
      tpu.vector_store %arg7[%c0_20, %c0_21, %c0_22], %27 {strides = array<i32>} : memref<1x2x128xf32, #tpu.memory_space<vmem>>, vector<1x2x128xf32>,
    } else {
    }
    return
  }
  func.func @transform_0(%arg0: i32, %arg1: i32) -> (i32, i32) {
    %c0_i32 = arith.constant 0 : i32
    return %arg0, %arg1 : i32, i32
  }
  func.func @transform_1(%arg0: i32, %arg1: i32) -> (i32, i32) {
    %c0_i32 = arith.constant 0 : i32
    %c0_i32_0 = arith.constant 0 : i32
    return %arg0, %c0_i32 : i32, i32
  }
  func.func @transform_2(%arg0: i32, %arg1: i32) -> (i32, i32) {
    %c0_i32 = arith.constant 0 : i32
    %c0_i32_0 = arith.constant 0 : i32
    return %arg1, %c0_i32 : i32, i32
  }
  func.func @transform_3(%arg0: i32, %arg1: i32) -> (i32, i32) {
    %c0_i32 = arith.constant 0 : i32
    %c0_i32_0 = arith.constant 0 : i32
    %c0_i32_1 = arith.constant 0 : i32
    return %c0_i32, %c0_i32_0 : i32, i32
  }
  func.func @transform_4(%arg0: i32, %arg1: i32) -> (i32, i32) {
    %c0_i32 = arith.constant 0 : i32
    %c0_i32_0 = arith.constant 0 : i32
    return %c0_i32, %arg0 : i32, i32
  }
  func.func @transform_5(%arg0: i32, %arg1: i32) -> (i32, i32, i32) {
    %c0_i32 = arith.constant 0 : i32
    %c0_i32_0 = arith.constant 0 : i32
    %c0_i32_1 = arith.constant 0 : i32
    return %arg0, %c0_i32, %c0_i32_0 : i32, i32, i32
  }
}

</mosaic_0001>

<llo_original>
// kernel: td_rumor_gcn_forward.3
$region0: #{td_rumor_gcn_forward.3}
  #allocation0 [shape = 'u32[]', space=smem, size = 0x4, offset = 0x4, fixed_abs, tag = 'smem constant byte address 0x4 - core index']
  #allocation1 [shape = 'u32[144,128]{1,0:T(1,128)}', space=vmem, size = 0x12000, scoped, tag = 'internal scratch']
  %s0 = inlined_call_operand.vmem [shape: bf16[512,128], index: 0, kind: input, shape index: {}]
  %s1 = inlined_call_operand.vmem [shape: bf16[128,128], index: 1, kind: input, shape index: {}]
  %s2 = inlined_call_operand.vmem [shape: bf16[512,128], index: 2, kind: output, shape index: {}]
  %s3 = sld [smem:[#allocation0]]
  $region18: #{td_rumor_gcn_forward.3} parent=0
    _
  %s5 = ssub.s32 1, %s3
  %s6 = scalar_select 0, %s5, %s3
  // Predicated region
  $region2: #{td_rumor_gcn_forward.3} parent=0 // pred_check
    _
  $region3: #{td_rumor_gcn_forward.3} parent=0 // pred_check_branch
    %8 = sbr.rel (0) target = $region5
  $region4: #{td_rumor_gcn_forward.3} parent=0 // pred_region
    _
  $region5: #{td_rumor_gcn_forward.3} parent=0 // pred_fallthru
    _
  // Predicated region
  $region6: #{td_rumor_gcn_forward.3} parent=0 // pred_check
    _
  $region7: #{td_rumor_gcn_forward.3} parent=0 // pred_check_branch
    %10 = sbr.rel (0) target = $region9
  $region8: #{td_rumor_gcn_forward.3} parent=0 // pred_region
    _
  $region9: #{td_rumor_gcn_forward.3} parent=0 // pred_fallthru
    _
  %v12 = vld [vmem:[%s0] sm:$0xf]
  %v13 = vld [vmem:[%s0 + $0x4] sm:$0xf]
  %v14 = vld [vmem:[%s0 + $0x8] sm:$0xf]
  %v15 = vld [vmem:[%s0 + $0xc] sm:$0xf]
  %v16 = vld [vmem:[%s0 + $0x10] sm:$0xf]
  %v17 = vld [vmem:[%s0 + $0x14] sm:$0xf]
  %v18 = vld [vmem:[%s0 + $0x18] sm:$0xf]
  %v19 = vld [vmem:[%s0 + $0x1c] sm:$0xf]
  %v20 = vld [vmem:[%s0 + $0x20] sm:$0xf]
  %v21 = vld [vmem:[%s0 + $0x24] sm:$0xf]
  %v22 = vld [vmem:[%s0 + $0x28] sm:$0xf]
  %v23 = vld [vmem:[%s0 + $0x2c] sm:$0xf]
  %v24 = vld [vmem:[%s0 + $0x30] sm:$0xf]
  %v25 = vld [vmem:[%s0 + $0x34] sm:$0xf]
  %v26 = vld [vmem:[%s0 + $0x38] sm:$0xf]
  %v27 = vld [vmem:[%s0 + $0x3c] sm:$0xf]
  %v28 = vld [vmem:[%s0 + $0x40] sm:$0xf]
  %v29 = vld [vmem:[%s0 + $0x44] sm:$0xf]
  %v30 = vld [vmem:[%s0 + $0x48] sm:$0xf]
  %v31 = vld [vmem:[%s0 + $0x4c] sm:$0xf]
  %v32 = vld [vmem:[%s0 + $0x50] sm:$0xf]
  %v33 = vld [vmem:[%s0 + $0x54] sm:$0xf]
  %v34 = vld [vmem:[%s0 + $0x58] sm:$0xf]
  %v35 = vld [vmem:[%s0 + $0x5c] sm:$0xf]
  %v36 = vld [vmem:[%s0 + $0x60] sm:$0xf]
  %v37 = vld [vmem:[%s0 + $0x64] sm:$0xf]
  %v38 = vld [vmem:[%s0 + $0x68] sm:$0xf]
  %v39 = vld [vmem:[%s0 + $0x6c] sm:$0xf]
  %v40 = vld [vmem:[%s0 + $0x70] sm:$0xf]
  %v41 = vld [vmem:[%s0 + $0x74] sm:$0xf]
  %v42 = vld [vmem:[%s0 + $0x78] sm:$0xf]
  %v43 = vld [vmem:[%s0 + $0x7c] sm:$0xf]
  %v44 = vld [vmem:[%s0 + $0x80] sm:$0xf]
  %v45 = vld [vmem:[%s0 + $0x84] sm:$0xf]
  %v46 = vld [vmem:[%s0 + $0x88] sm:$0xf]
  %v47 = vld [vmem:[%s0 + $0x8c] sm:$0xf]
  %v48 = vld [vmem:[%s0 + $0x90] sm:$0xf]
  %v49 = vld [vmem:[%s0 + $0x94] sm:$0xf]
  %v50 = vld [vmem:[%s0 + $0x98] sm:$0xf]
  %v51 = vld [vmem:[%s0 + $0x9c] sm:$0xf]
  %v52 = vld [vmem:[%s0 + $0xa0] sm:$0xf]
  %v53 = vld [vmem:[%s0 + $0xa4] sm:$0xf]
  %v54 = vld [vmem:[%s0 + $0xa8] sm:$0xf]
  %v55 = vld [vmem:[%s0 + $0xac] sm:$0xf]
  %v56 = vld [vmem:[%s0 + $0xb0] sm:$0xf]
  %v57 = vld [vmem:[%s0 + $0xb4] sm:$0xf]
  %v58 = vld [vmem:[%s0 + $0xb8] sm:$0xf]
  %v59 = vld [vmem:[%s0 + $0xbc] sm:$0xf]
  %v60 = vld [vmem:[%s0 + $0xc0] sm:$0xf]
  %v61 = vld [vmem:[%s0 + $0xc4] sm:$0xf]
  %v62 = vld [vmem:[%s0 + $0xc8] sm:$0xf]
  %v63 = vld [vmem:[%s0 + $0xcc] sm:$0xf]
  %v64 = vld [vmem:[%s0 + $0xd0] sm:$0xf]
  %v65 = vld [vmem:[%s0 + $0xd4] sm:$0xf]
  %v66 = vld [vmem:[%s0 + $0xd8] sm:$0xf]
  %v67 = vld [vmem:[%s0 + $0xdc] sm:$0xf]
  %v68 = vld [vmem:[%s0 + $0xe0] sm:$0xf]
  %v69 = vld [vmem:[%s0 + $0xe4] sm:$0xf]
  %v70 = vld [vmem:[%s0 + $0xe8] sm:$0xf]
  %v71 = vld [vmem:[%s0 + $0xec] sm:$0xf]
  %v72 = vld [vmem:[%s0 + $0xf0] sm:$0xf]
  %v73 = vld [vmem:[%s0 + $0xf4] sm:$0xf]
  %v74 = vld [vmem:[%s0 + $0xf8] sm:$0xf]
  %v75 = vld [vmem:[%s0 + $0xfc] sm:$0xf]
  %v76 = vld [vmem:[%s1] sm:$0xf]
  %v77 = vld [vmem:[%s1 + $0x4] sm:$0xf]
  %v78 = vld [vmem:[%s1 + $0x8] sm:$0xf]
  %v79 = vld [vmem:[%s1 + $0xc] sm:$0xf]
  %v80 = vld [vmem:[%s1 + $0x10] sm:$0xf]
  %v81 = vld [vmem:[%s1 + $0x14] sm:$0xf]
  %v82 = vld [vmem:[%s1 + $0x18] sm:$0xf]
  %v83 = vld [vmem:[%s1 + $0x1c] sm:$0xf]
  %v84 = vld [vmem:[%s1 + $0x20] sm:$0xf]
  %v85 = vld [vmem:[%s1 + $0x24] sm:$0xf]
  %v86 = vld [vmem:[%s1 + $0x28] sm:$0xf]
  %v87 = vld [vmem:[%s1 + $0x2c] sm:$0xf]
  %v88 = vld [vmem:[%s1 + $0x30] sm:$0xf]
  %v89 = vld [vmem:[%s1 + $0x34] sm:$0xf]
  %v90 = vld [vmem:[%s1 + $0x38] sm:$0xf]
  %v91 = vld [vmem:[%s1 + $0x3c] sm:$0xf]
  %v156 = vunpack.c.l.b16 %v12
  %v157 = vunpack.c.l.b16 %v13
  %v158 = vunpack.c.l.b16 %v14
  %v159 = vunpack.c.l.b16 %v15
  %v160 = vunpack.c.l.b16 %v16
  %v161 = vunpack.c.l.b16 %v17
  %v162 = vunpack.c.l.b16 %v18
  %v163 = vunpack.c.l.b16 %v19
  %v164 = vunpack.c.l.b16 %v20
  %v165 = vunpack.c.l.b16 %v21
  %v166 = vunpack.c.l.b16 %v22
  %v167 = vunpack.c.l.b16 %v23
  %v168 = vunpack.c.l.b16 %v24
  %v169 = vunpack.c.l.b16 %v25
  %v170 = vunpack.c.l.b16 %v26
  %v171 = vunpack.c.l.b16 %v27
  %v172 = vunpack.c.l.b16 %v28
  %v173 = vunpack.c.l.b16 %v29
  %v174 = vunpack.c.l.b16 %v30
  %v175 = vunpack.c.l.b16 %v31
  %v176 = vunpack.c.l.b16 %v32
  %v177 = vunpack.c.l.b16 %v33
  %v178 = vunpack.c.l.b16 %v34
  %v179 = vunpack.c.l.b16 %v35
  %v180 = vunpack.c.l.b16 %v36
  %v181 = vunpack.c.l.b16 %v37
  %v182 = vunpack.c.l.b16 %v38
  %v183 = vunpack.c.l.b16 %v39
  %v184 = vunpack.c.l.b16 %v40
  %v185 = vunpack.c.l.b16 %v41
  %v186 = vunpack.c.l.b16 %v42
  %v187 = vunpack.c.l.b16 %v43
  %v188 = vunpack.c.l.b16 %v44
  %v189 = vunpack.c.l.b16 %v45
  %v190 = vunpack.c.l.b16 %v46
  %v191 = vunpack.c.l.b16 %v47
  %v192 = vunpack.c.l.b16 %v48
  %v193 = vunpack.c.l.b16 %v49
  %v194 = vunpack.c.l.b16 %v50
  %v195 = vunpack.c.l.b16 %v51
  %v196 = vunpack.c.l.b16 %v52
  %v197 = vunpack.c.l.b16 %v53
  %v198 = vunpack.c.l.b16 %v54
  %v199 = vunpack.c.l.b16 %v55
  %v200 = vunpack.c.l.b16 %v56
  %v201 = vunpack.c.l.b16 %v57
  %v202 = vunpack.c.l.b16 %v58
  %v203 = vunpack.c.l.b16 %v59
  %v204 = vunpack.c.l.b16 %v60
  %v205 = vunpack.c.l.b16 %v61
  %v206 = vunpack.c.l.b16 %v62
  %v207 = vunpack.c.l.b16 %v63
  %v208 = vunpack.c.l.b16 %v64
  %v209 = vunpack.c.l.b16 %v65
  %v210 = vunpack.c.l.b16 %v66
  %v211 = vunpack.c.l.b16 %v67
  %v212 = vunpack.c.l.b16 %v68
  %v213 = vunpack.c.l.b16 %v69
  %v214 = vunpack.c.l.b16 %v70
  %v215 = vunpack.c.l.b16 %v71
  %v216 = vunpack.c.l.b16 %v72
  %v217 = vunpack.c.l.b16 %v73
  %v218 = vunpack.c.l.b16 %v74
  %v219 = vunpack.c.l.b16 %v75
  %v220 = vpack.c.b16 %v157, %v156
  %v221 = vpack.c.b16 %v159, %v158
  %v222 = vpack.c.b16 %v161, %v160
  %v223 = vpack.c.b16 %v163, %v162
  %v224 = vpack.c.b16 %v165, %v164
  %v225 = vpack.c.b16 %v167, %v166
  %v226 = vpack.c.b16 %v169, %v168
  %v227 = vpack.c.b16 %v171, %v170
  %v228 = vpack.c.b16 %v173, %v172
  %v229 = vpack.c.b16 %v175, %v174
  %v230 = vpack.c.b16 %v177, %v176
  %v231 = vpack.c.b16 %v179, %v178
  %v232 = vpack.c.b16 %v181, %v180
  %v233 = vpack.c.b16 %v183, %v182
  %v234 = vpack.c.b16 %v185, %v184
  %v235 = vpack.c.b16 %v187, %v186
  %v236 = vpack.c.b16 %v189, %v188
  %v237 = vpack.c.b16 %v191, %v190
  %v238 = vpack.c.b16 %v193, %v192
  %v239 = vpack.c.b16 %v195, %v194
  %v240 = vpack.c.b16 %v197, %v196
  %v241 = vpack.c.b16 %v199, %v198
  %v242 = vpack.c.b16 %v201, %v200
  %v243 = vpack.c.b16 %v203, %v202
  %v244 = vpack.c.b16 %v205, %v204
  %v245 = vpack.c.b16 %v207, %v206
  %v246 = vpack.c.b16 %v209, %v208
  %v247 = vpack.c.b16 %v211, %v210
  %v248 = vpack.c.b16 %v213, %v212
  %v249 = vpack.c.b16 %v215, %v214
  %v250 = vpack.c.b16 %v217, %v216
  %v251 = vpack.c.b16 %v219, %v218
  %v300 = vunpack.c.l.b16 %v76
  %v301 = vunpack.c.l.b16 %v77
  %v302 = vunpack.c.l.b16 %v78
  %v303 = vunpack.c.l.b16 %v79
  %v304 = vunpack.c.l.b16 %v80
  %v305 = vunpack.c.l.b16 %v81
  %v306 = vunpack.c.l.b16 %v82
  %v307 = vunpack.c.l.b16 %v83
  %v308 = vunpack.c.l.b16 %v84
  %v309 = vunpack.c.l.b16 %v85
  %v310 = vunpack.c.l.b16 %v86
  %v311 = vunpack.c.l.b16 %v87
  %v312 = vunpack.c.l.b16 %v88
  %v313 = vunpack.c.l.b16 %v89
  %v314 = vunpack.c.l.b16 %v90
  %v315 = vunpack.c.l.b16 %v91
  %v316 = vpack.c.b16 %v301, %v300
  %v317 = vpack.c.b16 %v303, %v302
  %v318 = vpack.c.b16 %v305, %v304
  %v319 = vpack.c.b16 %v307, %v306
  %v320 = vpack.c.b16 %v309, %v308
  %v321 = vpack.c.b16 %v311, %v310
  %v322 = vpack.c.b16 %v313, %v312
  %v323 = vpack.c.b16 %v315, %v314
  %332 = vmatprep.subr.bf16.mxu0 0
  %333 = vmatpush1.bf16.msra.mxu0 %v316
  %334 = vmatprep.subr.bf16.mxu0 0
  %335 = vmatpush1.bf16.msra.mxu0 %v317
  %336 = vmatprep.subr.bf16.mxu0 0
  %337 = vmatpush1.bf16.msra.mxu0 %v318
  %338 = vmatprep.subr.bf16.mxu0 0
  %339 = vmatpush1.bf16.msra.mxu0 %v319
  %340 = vmatprep.subr.bf16.mxu0 0
  %341 = vmatpush1.bf16.msra.mxu0 %v320
  %342 = vmatprep.subr.bf16.mxu0 0
  %343 = vmatpush1.bf16.msra.mxu0 %v321
  %344 = vmatprep.subr.bf16.mxu0 0
  %345 = vmatpush1.bf16.msra.mxu0 %v322
  %346 = vmatprep.subr.bf16.mxu0 0
  %347 = vmatpush1.bf16.msra.mxu0 %v323
  %348 = vmatprep.subr.bf16.mxu0 0
  %349 = vmatpush1.bf16.msra.mxu0 0
  %350 = vmatprep.subr.bf16.mxu0 0
  %351 = vmatpush1.bf16.msra.mxu0 0
  %352 = vmatprep.subr.bf16.mxu0 0
  %353 = vmatpush1.bf16.msra.mxu0 0
  %354 = vmatprep.subr.bf16.mxu0 0
  %355 = vmatpush1.bf16.msra.mxu0 0
  %356 = vmatprep.subr.bf16.mxu0 0
  %357 = vmatpush1.bf16.msra.mxu0 0
  %358 = vmatprep.subr.bf16.mxu0 0
  %359 = vmatpush1.bf16.msra.mxu0 0
  %360 = vmatprep.subr.bf16.mxu0 0
  %361 = vmatpush1.bf16.msra.mxu0 0
  %362 = vmatprep.subr.bf16.mxu0 0
  %363 = vmatpush1.bf16.msra.mxu0 0
  %364 = vmatprep.mubr.bf16.mxu0 0
  %365 = vmatmul.mubr.bf16.gmra.mrb[0].mxu0 %v220
  %v366 = vpop.f32.mrb[0].mxu0
  %v367 = vadd.f32 0.0, %v366
  %v368 = vpop.f32.mrb[0].mxu0
  %v369 = vpop.f32.mrb[0].mxu0
  %v370 = vadd.f32 0.0, %v369
  %v371 = vpop.f32.mrb[0].mxu0
  %372 = vmatprep.mubr.bf16.mxu0 0
  %373 = vmatmul.mubr.bf16.gmra.mrb[0].mxu0 %v221
  %v374 = vpop.f32.mrb[0].mxu0
  %v375 = vadd.f32 0.0, %v374
  %v376 = vpop.f32.mrb[0].mxu0
  %v377 = vpop.f32.mrb[0].mxu0
  %v378 = vadd.f32 0.0, %v377
  %v379 = vpop.f32.mrb[0].mxu0
  %380 = vmatprep.mubr.bf16.mxu0 0
  %381 = vmatmul.mubr.bf16.gmra.mrb[0].mxu0 %v222
  %v382 = vpop.f32.mrb[0].mxu0
  %v383 = vadd.f32 0.0, %v382
  %v384 = vpop.f32.mrb[0].mxu0
  %v385 = vpop.f32.mrb[0].mxu0
  %v386 = vadd.f32 0.0, %v385
  %v387 = vpop.f32.mrb[0].mxu0
  %388 = vmatprep.mubr.bf16.mxu0 0
  %389 = vmatmul.mubr.bf16.gmra.mrb[0].mxu0 %v223
  %v390 = vpop.f32.mrb[0].mxu0
  %v391 = vadd.f32 0.0, %v390
  %v392 = vpop.f32.mrb[0].mxu0
  %v393 = vpop.f32.mrb[0].mxu0
  %v394 = vadd.f32 0.0, %v393
  %v395 = vpop.f32.mrb[0].mxu0
  %396 = vmatprep.mubr.bf16.mxu0 0
  %397 = vmatmul.mubr.bf16.gmra.mrb[0].mxu0 %v224
  %v398 = vpop.f32.mrb[0].mxu0
  %v399 = vadd.f32 0.0, %v398
  %v400 = vpop.f32.mrb[0].mxu0
  %v401 = vpop.f32.mrb[0].mxu0
  %v402 = vadd.f32 0.0, %v401
  %v403 = vpop.f32.mrb[0].mxu0
  %404 = vmatprep.mubr.bf16.mxu0 0
  %405 = vmatmul.mubr.bf16.gmra.mrb[0].mxu0 %v225
  %v406 = vpop.f32.mrb[0].mxu0
  %v407 = vadd.f32 0.0, %v406
  %v408 = vpop.f32.mrb[0].mxu0
  %v409 = vpop.f32.mrb[0].mxu0
  %v410 = vadd.f32 0.0, %v409
  %v411 = vpop.f32.mrb[0].mxu0
  %412 = vmatprep.mubr.bf16.mxu0 0
  %413 = vmatmul.mubr.bf16.gmra.mrb[0].mxu0 %v226
  %v414 = vpop.f32.mrb[0].mxu0
  %v415 = vadd.f32 0.0, %v414
  %v416 = vpop.f32.mrb[0].mxu0
  %v417 = vpop.f32.mrb[0].mxu0
  %v418 = vadd.f32 0.0, %v417
  %v419 = vpop.f32.mrb[0].mxu0
  %420 = vmatprep.mubr.bf16.mxu0 0
  %421 = vmatmul.mubr.bf16.gmra.mrb[0].mxu0 %v227
  %v422 = vpop.f32.mrb[0].mxu0
  %v423 = vadd.f32 0.0, %v422
  %v424 = vpop.f32.mrb[0].mxu0
  %v425 = vpop.f32.mrb[0].mxu0
  %v426 = vadd.f32 0.0, %v425
  %v427 = vpop.f32.mrb[0].mxu0
  %428 = vmatprep.mubr.bf16.mxu0 0
  %429 = vmatmul.mubr.bf16.gmra.mrb[0].mxu0 %v228
  %v430 = vpop.f32.mrb[0].mxu0
  %v431 = vadd.f32 0.0, %v430
  %v432 = vpop.f32.mrb[0].mxu0
  %v433 = vpop.f32.mrb[0].mxu0
  %v434 = vadd.f32 0.0, %v433
  %v435 = vpop.f32.mrb[0].mxu0
  %436 = vmatprep.mubr.bf16.mxu0 0
  %437 = vmatmul.mubr.bf16.gmra.mrb[0].mxu0 %v229
  %v438 = vpop.f32.mrb[0].mxu0
  %v439 = vadd.f32 0.0, %v438
  %v440 = vpop.f32.mrb[0].mxu0
  %v441 = vpop.f32.mrb[0].mxu0
  %v442 = vadd.f32 0.0, %v441
  %v443 = vpop.f32.mrb[0].mxu0
  %444 = vmatprep.mubr.bf16.mxu0 0
  %445 = vmatmul.mubr.bf16.gmra.mrb[0].mxu0 %v230
  %v446 = vpop.f32.mrb[0].mxu0
  %v447 = vadd.f32 0.0, %v446
  %v448 = vpop.f32.mrb[0].mxu0
  %v449 = vpop.f32.mrb[0].mxu0
  %v450 = vadd.f32 0.0, %v449
  %v451 = vpop.f32.mrb[0].mxu0
  %452 = vmatprep.mubr.bf16.mxu0 0
  %453 = vmatmul.mubr.bf16.gmra.mrb[0].mxu0 %v231
  %v454 = vpop.f32.mrb[0].mxu0
  %v455 = vadd.f32 0.0, %v454
  %v456 = vpop.f32.mrb[0].mxu0
  %v457 = vpop.f32.mrb[0].mxu0
  %v458 = vadd.f32 0.0, %v457
  %v459 = vpop.f32.mrb[0].mxu0
  %460 = vmatprep.mubr.bf16.mxu0 0
  %461 = vmatmul.mubr.bf16.gmra.mrb[0].mxu0 %v232
  %v462 = vpop.f32.mrb[0].mxu0
  %v463 = vadd.f32 0.0, %v462
  %v464 = vpop.f32.mrb[0].mxu0
  %v465 = vpop.f32.mrb[0].mxu0
  %v466 = vadd.f32 0.0, %v465
  %v467 = vpop.f32.mrb[0].mxu0
  %468 = vmatprep.mubr.bf16.mxu0 0
  %469 = vmatmul.mubr.bf16.gmra.mrb[0].mxu0 %v233
  %v470 = vpop.f32.mrb[0].mxu0
  %v471 = vadd.f32 0.0, %v470
  %v472 = vpop.f32.mrb[0].mxu0
  %v473 = vpop.f32.mrb[0].mxu0
  %v474 = vadd.f32 0.0, %v473
  %v475 = vpop.f32.mrb[0].mxu0
  %476 = vmatprep.mubr.bf16.mxu0 0
  %477 = vmatmul.mubr.bf16.gmra.mrb[0].mxu0 %v234
  %v478 = vpop.f32.mrb[0].mxu0
  %v479 = vadd.f32 0.0, %v478
  %v480 = vpop.f32.mrb[0].mxu0
  %v481 = vpop.f32.mrb[0].mxu0
  %v482 = vadd.f32 0.0, %v481
  %v483 = vpop.f32.mrb[0].mxu0
  %484 = vmatprep.mubr.bf16.mxu0 0
  %485 = vmatmul.mubr.bf16.gmra.mrb[0].mxu0 %v235
  %v486 = vpop.f32.mrb[0].mxu0
  %v487 = vadd.f32 0.0, %v486
  %v488 = vpop.f32.mrb[0].mxu0
  %v489 = vpop.f32.mrb[0].mxu0
  %v490 = vadd.f32 0.0, %v489
  %v491 = vpop.f32.mrb[0].mxu0
  %492 = vmatprep.mubr.bf16.mxu0 0
  %493 = vmatmul.mubr.bf16.gmra.mrb[0].mxu0 %v236
  %v494 = vpop.f32.mrb[0].mxu0
  %v495 = vadd.f32 0.0, %v494
  %v496 = vpop.f32.mrb[0].mxu0
  %v497 = vpop.f32.mrb[0].mxu0
  %v498 = vadd.f32 0.0, %v497
  %v499 = vpop.f32.mrb[0].mxu0
  %500 = vmatprep.mubr.bf16.mxu0 0
  %501 = vmatmul.mubr.bf16.gmra.mrb[0].mxu0 %v237
  %v502 = vpop.f32.mrb[0].mxu0
  %v503 = vadd.f32 0.0, %v502
  %v504 = vpop.f32.mrb[0].mxu0
  %v505 = vpop.f32.mrb[0].mxu0
  %v506 = vadd.f32 0.0, %v505
  %v507 = vpop.f32.mrb[0].mxu0
  %508 = vmatprep.mubr.bf16.mxu0 0
  %509 = vmatmul.mubr.bf16.gmra.mrb[0].mxu0 %v238
  %v510 = vpop.f32.mrb[0].mxu0
  %v511 = vadd.f32 0.0, %v510
  %v512 = vpop.f32.mrb[0].mxu0
  %v513 = vpop.f32.mrb[0].mxu0
  %v514 = vadd.f32 0.0, %v513
  %v515 = vpop.f32.mrb[0].mxu0
  %516 = vmatprep.mubr.bf16.mxu0 0
  %517 = vmatmul.mubr.bf16.gmra.mrb[0].mxu0 %v239
  %v518 = vpop.f32.mrb[0].mxu0
  %v519 = vadd.f32 0.0, %v518
  %v520 = vpop.f32.mrb[0].mxu0
  %v521 = vpop.f32.mrb[0].mxu0
  %v522 = vadd.f32 0.0, %v521
  %v523 = vpop.f32.mrb[0].mxu0
  %524 = vmatprep.mubr.bf16.mxu0 0
  %525 = vmatmul.mubr.bf16.gmra.mrb[0].mxu0 %v240
  %v526 = vpop.f32.mrb[0].mxu0
  %v527 = vadd.f32 0.0, %v526
  %v528 = vpop.f32.mrb[0].mxu0
  %v529 = vpop.f32.mrb[0].mxu0
  %v530 = vadd.f32 0.0, %v529
  %v531 = vpop.f32.mrb[0].mxu0
  %532 = vmatprep.mubr.bf16.mxu0 0
  %533 = vmatmul.mubr.bf16.gmra.mrb[0].mxu0 %v241
  %v534 = vpop.f32.mrb[0].mxu0
  %v535 = vadd.f32 0.0, %v534
  %v536 = vpop.f32.mrb[0].mxu0
  %v537 = vpop.f32.mrb[0].mxu0
  %v538 = vadd.f32 0.0, %v537
  %v539 = vpop.f32.mrb[0].mxu0
  %540 = vmatprep.mubr.bf16.mxu0 0
  %541 = vmatmul.mubr.bf16.gmra.mrb[0].mxu0 %v242
  %v542 = vpop.f32.mrb[0].mxu0
  %v543 = vadd.f32 0.0, %v542
  %v544 = vpop.f32.mrb[0].mxu0
  %v545 = vpop.f32.mrb[0].mxu0
  %v546 = vadd.f32 0.0, %v545
  %v547 = vpop.f32.mrb[0].mxu0
  %548 = vmatprep.mubr.bf16.mxu0 0
  %549 = vmatmul.mubr.bf16.gmra.mrb[0].mxu0 %v243
  %v550 = vpop.f32.mrb[0].mxu0
  %v551 = vadd.f32 0.0, %v550
  %v552 = vpop.f32.mrb[0].mxu0
  %v553 = vpop.f32.mrb[0].mxu0
  %v554 = vadd.f32 0.0, %v553
  %v555 = vpop.f32.mrb[0].mxu0
  %556 = vmatprep.mubr.bf16.mxu0 0
  %557 = vmatmul.mubr.bf16.gmra.mrb[0].mxu0 %v244
  %v558 = vpop.f32.mrb[0].mxu0
  %v559 = vadd.f32 0.0, %v558
  %v560 = vpop.f32.mrb[0].mxu0
  %v561 = vpop.f32.mrb[0].mxu0
  %v562 = vadd.f32 0.0, %v561
  %v563 = vpop.f32.mrb[0].mxu0
  %564 = vmatprep.mubr.bf16.mxu0 0
  %565 = vmatmul.mubr.bf16.gmra.mrb[0].mxu0 %v245
  %v566 = vpop.f32.mrb[0].mxu0
  %v567 = vadd.f32 0.0, %v566
  %v568 = vpop.f32.mrb[0].mxu0
  %v569 = vpop.f32.mrb[0].mxu0
  %v570 = vadd.f32 0.0, %v569
  %v571 = vpop.f32.mrb[0].mxu0
  %572 = vmatprep.mubr.bf16.mxu0 0
  %573 = vmatmul.mubr.bf16.gmra.mrb[0].mxu0 %v246
  %v574 = vpop.f32.mrb[0].mxu0
  %v575 = vadd.f32 0.0, %v574
  %v576 = vpop.f32.mrb[0].mxu0
  %v577 = vpop.f32.mrb[0].mxu0
  %v578 = vadd.f32 0.0, %v577
  %v579 = vpop.f32.mrb[0].mxu0
  %580 = vmatprep.mubr.bf16.mxu0 0
  %581 = vmatmul.mubr.bf16.gmra.mrb[0].mxu0 %v247
  %v582 = vpop.f32.mrb[0].mxu0
  %v583 = vadd.f32 0.0, %v582
  %v584 = vpop.f32.mrb[0].mxu0
  %v585 = vpop.f32.mrb[0].mxu0
  %v586 = vadd.f32 0.0, %v585
  %v587 = vpop.f32.mrb[0].mxu0
  %588 = vmatprep.mubr.bf16.mxu0 0
  %589 = vmatmul.mubr.bf16.gmra.mrb[0].mxu0 %v248
  %v590 = vpop.f32.mrb[0].mxu0
  %v591 = vadd.f32 0.0, %v590
  %v592 = vpop.f32.mrb[0].mxu0
  %v593 = vpop.f32.mrb[0].mxu0
  %v594 = vadd.f32 0.0, %v593
  %v595 = vpop.f32.mrb[0].mxu0
  %596 = vmatprep.mubr.bf16.mxu0 0
  %597 = vmatmul.mubr.bf16.gmra.mrb[0].mxu0 %v249
  %v598 = vpop.f32.mrb[0].mxu0
  %v599 = vadd.f32 0.0, %v598
  %v600 = vpop.f32.mrb[0].mxu0
  %v601 = vpop.f32.mrb[0].mxu0
  %v602 = vadd.f32 0.0, %v601
  %v603 = vpop.f32.mrb[0].mxu0
  %604 = vmatprep.mubr.bf16.mxu0 0
  %605 = vmatmul.mubr.bf16.gmra.mrb[0].mxu0 %v250
  %v606 = vpop.f32.mrb[0].mxu0
  %v607 = vadd.f32 0.0, %v606
  %v608 = vpop.f32.mrb[0].mxu0
  %v609 = vpop.f32.mrb[0].mxu0
  %v610 = vadd.f32 0.0, %v609
  %v611 = vpop.f32.mrb[0].mxu0
  %612 = vmatprep.mubr.bf16.mxu0 0
  %613 = vmatmul.mubr.bf16.gmra.mrb[0].mxu0 %v251
  %v614 = vpop.f32.mrb[0].mxu0
  %v615 = vadd.f32 0.0, %v614
  %v616 = vpop.f32.mrb[0].mxu0
  %v617 = vpop.f32.mrb[0].mxu0
  %v618 = vadd.f32 0.0, %v617
  %v619 = vpop.f32.mrb[0].mxu0
  %620 = vdwg.mxu0
  %v621 = vpack.c.bf16 %v370, %v367
  %v622 = vpack.c.bf16 %v378, %v375
  %v623 = vpack.c.bf16 %v386, %v383
  %v624 = vpack.c.bf16 %v394, %v391
  %v625 = vpack.c.bf16 %v402, %v399
  %v626 = vpack.c.bf16 %v410, %v407
  %v627 = vpack.c.bf16 %v418, %v415
  %v628 = vpack.c.bf16 %v426, %v423
  %v629 = vpack.c.bf16 %v434, %v431
  %v630 = vpack.c.bf16 %v442, %v439
  %v631 = vpack.c.bf16 %v450, %v447
  %v632 = vpack.c.bf16 %v458, %v455
  %v633 = vpack.c.bf16 %v466, %v463
  %v634 = vpack.c.bf16 %v474, %v471
  %v635 = vpack.c.bf16 %v482, %v479
  %v636 = vpack.c.bf16 %v490, %v487
  %v637 = vpack.c.bf16 %v498, %v495
  %v638 = vpack.c.bf16 %v506, %v503
  %v639 = vpack.c.bf16 %v514, %v511
  %v640 = vpack.c.bf16 %v522, %v519
  %v641 = vpack.c.bf16 %v530, %v527
  %v642 = vpack.c.bf16 %v538, %v535
  %v643 = vpack.c.bf16 %v546, %v543
  %v644 = vpack.c.bf16 %v554, %v551
  %v645 = vpack.c.bf16 %v562, %v559
  %v646 = vpack.c.bf16 %v570, %v567
  %v647 = vpack.c.bf16 %v578, %v575
  %v648 = vpack.c.bf16 %v586, %v583
  %v649 = vpack.c.bf16 %v594, %v591
  %v650 = vpack.c.bf16 %v602, %v599
  %v651 = vpack.c.bf16 %v610, %v607
  %v652 = vpack.c.bf16 %v618, %v615
  %v685 = vunpack.c.l.b16 %v621
  %v686 = vunpack.c.h.b16 %v621
  %v687 = vunpack.c.l.b16 %v622
  %v688 = vunpack.c.h.b16 %v622
  %v689 = vunpack.c.l.b16 %v623
  %v690 = vunpack.c.h.b16 %v623
  %v691 = vunpack.c.l.b16 %v624
  %v692 = vunpack.c.h.b16 %v624
  %v693 = vunpack.c.l.b16 %v625
  %v694 = vunpack.c.h.b16 %v625
  %v695 = vunpack.c.l.b16 %v626
  %v696 = vunpack.c.h.b16 %v626
  %v697 = vunpack.c.l.b16 %v627
  %v698 = vunpack.c.h.b16 %v627
  %v699 = vunpack.c.l.b16 %v628
  %v700 = vunpack.c.h.b16 %v628
  %v701 = vunpack.c.l.b16 %v629
  %v702 = vunpack.c.h.b16 %v629
  %v703 = vunpack.c.l.b16 %v630
  %v704 = vunpack.c.h.b16 %v630
  %v705 = vunpack.c.l.b16 %v631
  %v706 = vunpack.c.h.b16 %v631
  %v707 = vunpack.c.l.b16 %v632
  %v708 = vunpack.c.h.b16 %v632
  %v709 = vunpack.c.l.b16 %v633
  %v710 = vunpack.c.h.b16 %v633
  %v711 = vunpack.c.l.b16 %v634
  %v712 = vunpack.c.h.b16 %v634
  %v713 = vunpack.c.l.b16 %v635
  %v714 = vunpack.c.h.b16 %v635
  %v715 = vunpack.c.l.b16 %v636
  %v716 = vunpack.c.h.b16 %v636
  %v717 = vunpack.c.l.b16 %v637
  %v718 = vunpack.c.h.b16 %v637
  %v719 = vunpack.c.l.b16 %v638
  %v720 = vunpack.c.h.b16 %v638
  %v721 = vunpack.c.l.b16 %v639
  %v722 = vunpack.c.h.b16 %v639
  %v723 = vunpack.c.l.b16 %v640
  %v724 = vunpack.c.h.b16 %v640
  %v725 = vunpack.c.l.b16 %v641
  %v726 = vunpack.c.h.b16 %v641
  %v727 = vunpack.c.l.b16 %v642
  %v728 = vunpack.c.h.b16 %v642
  %v729 = vunpack.c.l.b16 %v643
  %v730 = vunpack.c.h.b16 %v643
  %v731 = vunpack.c.l.b16 %v644
  %v732 = vunpack.c.h.b16 %v644
  %v733 = vunpack.c.l.b16 %v645
  %v734 = vunpack.c.h.b16 %v645
  %v735 = vunpack.c.l.b16 %v646
  %v736 = vunpack.c.h.b16 %v646
  %v737 = vunpack.c.l.b16 %v647
  %v738 = vunpack.c.h.b16 %v647
  %v739 = vunpack.c.l.b16 %v648
  %v740 = vunpack.c.h.b16 %v648
  %v741 = vunpack.c.l.b16 %v649
  %v742 = vunpack.c.h.b16 %v649
  %v743 = vunpack.c.l.b16 %v650
  %v744 = vunpack.c.h.b16 %v650
  %v745 = vunpack.c.l.b16 %v651
  %v746 = vunpack.c.h.b16 %v651
  %v747 = vunpack.c.l.b16 %v652
  %v748 = vunpack.c.h.b16 %v652
  %v749 = vpack.c.b16 %v685, %v685
  %v750 = vpack.c.b16 %v686, %v686
  %v751 = vpack.c.b16 %v687, %v687
  %v752 = vpack.c.b16 %v688, %v688
  %v753 = vpack.c.b16 %v689, %v689
  %v754 = vpack.c.b16 %v690, %v690
  %v755 = vpack.c.b16 %v691, %v691
  %v756 = vpack.c.b16 %v692, %v692
  %v757 = vpack.c.b16 %v693, %v693
  %v758 = vpack.c.b16 %v694, %v694
  %v759 = vpack.c.b16 %v695, %v695
  %v760 = vpack.c.b16 %v696, %v696
  %v761 = vpack.c.b16 %v697, %v697
  %v762 = vpack.c.b16 %v698, %v698
  %v763 = vpack.c.b16 %v699, %v699
  %v764 = vpack.c.b16 %v700, %v700
  %v765 = vpack.c.b16 %v701, %v701
  %v766 = vpack.c.b16 %v702, %v702
  %v767 = vpack.c.b16 %v703, %v703
  %v768 = vpack.c.b16 %v704, %v704
  %v769 = vpack.c.b16 %v705, %v705
  %v770 = vpack.c.b16 %v706, %v706
  %v771 = vpack.c.b16 %v707, %v707
  %v772 = vpack.c.b16 %v708, %v708
  %v773 = vpack.c.b16 %v709, %v709
  %v774 = vpack.c.b16 %v710, %v710
  %v775 = vpack.c.b16 %v711, %v711
  %v776 = vpack.c.b16 %v712, %v712
  %v777 = vpack.c.b16 %v713, %v713
  %v778 = vpack.c.b16 %v714, %v714
  %v779 = vpack.c.b16 %v715, %v715
  %v780 = vpack.c.b16 %v716, %v716
  %v781 = vpack.c.b16 %v717, %v717
  %v782 = vpack.c.b16 %v718, %v718
  %v783 = vpack.c.b16 %v719, %v719
  %v784 = vpack.c.b16 %v720, %v720
  %v785 = vpack.c.b16 %v721, %v721
  %v786 = vpack.c.b16 %v722, %v722
  %v787 = vpack.c.b16 %v723, %v723
  %v788 = vpack.c.b16 %v724, %v724
  %v789 = vpack.c.b16 %v725, %v725
  %v790 = vpack.c.b16 %v726, %v726
  %v791 = vpack.c.b16 %v727, %v727
  %v792 = vpack.c.b16 %v728, %v728
  %v793 = vpack.c.b16 %v729, %v729
  %v794 = vpack.c.b16 %v730, %v730
  %v795 = vpack.c.b16 %v731, %v731
  %v796 = vpack.c.b16 %v732, %v732
  %v797 = vpack.c.b16 %v733, %v733
  %v798 = vpack.c.b16 %v734, %v734
  %v799 = vpack.c.b16 %v735, %v735
  %v800 = vpack.c.b16 %v736, %v736
  %v801 = vpack.c.b16 %v737, %v737
  %v802 = vpack.c.b16 %v738, %v738
  %v803 = vpack.c.b16 %v739, %v739
  %v804 = vpack.c.b16 %v740, %v740
  %v805 = vpack.c.b16 %v741, %v741
  %v806 = vpack.c.b16 %v742, %v742
  %v807 = vpack.c.b16 %v743, %v743
  %v808 = vpack.c.b16 %v744, %v744
  %v809 = vpack.c.b16 %v745, %v745
  %v810 = vpack.c.b16 %v746, %v746
  %v811 = vpack.c.b16 %v747, %v747
  %v812 = vpack.c.b16 %v748, %v748
  %877 = vst [vmem:[%s2] sm:$0xf] %v749
  %878 = vst [vmem:[%s2 + $0x4] sm:$0xf] %v750
  %879 = vst [vmem:[%s2 + $0x8] sm:$0xf] %v751
  %880 = vst [vmem:[%s2 + $0xc] sm:$0xf] %v752
  %881 = vst [vmem:[%s2 + $0x10] sm:$0xf] %v753
  %882 = vst [vmem:[%s2 + $0x14] sm:$0xf] %v754
  %883 = vst [vmem:[%s2 + $0x18] sm:$0xf] %v755
  %884 = vst [vmem:[%s2 + $0x1c] sm:$0xf] %v756
  %885 = vst [vmem:[%s2 + $0x20] sm:$0xf] %v757
  %886 = vst [vmem:[%s2 + $0x24] sm:$0xf] %v758
  %887 = vst [vmem:[%s2 + $0x28] sm:$0xf] %v759
  %888 = vst [vmem:[%s2 + $0x2c] sm:$0xf] %v760
  %889 = vst [vmem:[%s2 + $0x30] sm:$0xf] %v761
  %890 = vst [vmem:[%s2 + $0x34] sm:$0xf] %v762
  %891 = vst [vmem:[%s2 + $0x38] sm:$0xf] %v763
  %892 = vst [vmem:[%s2 + $0x3c] sm:$0xf] %v764
  %893 = vst [vmem:[%s2 + $0x40] sm:$0xf] %v765
  %894 = vst [vmem:[%s2 + $0x44] sm:$0xf] %v766
  %895 = vst [vmem:[%s2 + $0x48] sm:$0xf] %v767
  %896 = vst [vmem:[%s2 + $0x4c] sm:$0xf] %v768
  %897 = vst [vmem:[%s2 + $0x50] sm:$0xf] %v769
  %898 = vst [vmem:[%s2 + $0x54] sm:$0xf] %v770
  %899 = vst [vmem:[%s2 + $0x58] sm:$0xf] %v771
  %900 = vst [vmem:[%s2 + $0x5c] sm:$0xf] %v772
  %901 = vst [vmem:[%s2 + $0x60] sm:$0xf] %v773
  %902 = vst [vmem:[%s2 + $0x64] sm:$0xf] %v774
  %903 = vst [vmem:[%s2 + $0x68] sm:$0xf] %v775
  %904 = vst [vmem:[%s2 + $0x6c] sm:$0xf] %v776
  %905 = vst [vmem:[%s2 + $0x70] sm:$0xf] %v777
  %906 = vst [vmem:[%s2 + $0x74] sm:$0xf] %v778
  %907 = vst [vmem:[%s2 + $0x78] sm:$0xf] %v779
  %908 = vst [vmem:[%s2 + $0x7c] sm:$0xf] %v780
  %909 = vst [vmem:[%s2 + $0x80] sm:$0xf] %v781
  %910 = vst [vmem:[%s2 + $0x84] sm:$0xf] %v782
  %911 = vst [vmem:[%s2 + $0x88] sm:$0xf] %v783
  %912 = vst [vmem:[%s2 + $0x8c] sm:$0xf] %v784
  %913 = vst [vmem:[%s2 + $0x90] sm:$0xf] %v785
  %914 = vst [vmem:[%s2 + $0x94] sm:$0xf] %v786
  %915 = vst [vmem:[%s2 + $0x98] sm:$0xf] %v787
  %916 = vst [vmem:[%s2 + $0x9c] sm:$0xf] %v788
  %917 = vst [vmem:[%s2 + $0xa0] sm:$0xf] %v789
  %918 = vst [vmem:[%s2 + $0xa4] sm:$0xf] %v790
  %919 = vst [vmem:[%s2 + $0xa8] sm:$0xf] %v791
  %920 = vst [vmem:[%s2 + $0xac] sm:$0xf] %v792
  %921 = vst [vmem:[%s2 + $0xb0] sm:$0xf] %v793
  %922 = vst [vmem:[%s2 + $0xb4] sm:$0xf] %v794
  %923 = vst [vmem:[%s2 + $0xb8] sm:$0xf] %v795
  %924 = vst [vmem:[%s2 + $0xbc] sm:$0xf] %v796
  %925 = vst [vmem:[%s2 + $0xc0] sm:$0xf] %v797
  %926 = vst [vmem:[%s2 + $0xc4] sm:$0xf] %v798
  %927 = vst [vmem:[%s2 + $0xc8] sm:$0xf] %v799
  %928 = vst [vmem:[%s2 + $0xcc] sm:$0xf] %v800
  %929 = vst [vmem:[%s2 + $0xd0] sm:$0xf] %v801
  %930 = vst [vmem:[%s2 + $0xd4] sm:$0xf] %v802
  %931 = vst [vmem:[%s2 + $0xd8] sm:$0xf] %v803
  %932 = vst [vmem:[%s2 + $0xdc] sm:$0xf] %v804
  %933 = vst [vmem:[%s2 + $0xe0] sm:$0xf] %v805
  %934 = vst [vmem:[%s2 + $0xe4] sm:$0xf] %v806
  %935 = vst [vmem:[%s2 + $0xe8] sm:$0xf] %v807
  %936 = vst [vmem:[%s2 + $0xec] sm:$0xf] %v808
  %937 = vst [vmem:[%s2 + $0xf0] sm:$0xf] %v809
  %938 = vst [vmem:[%s2 + $0xf4] sm:$0xf] %v810
  %939 = vst [vmem:[%s2 + $0xf8] sm:$0xf] %v811
  %940 = vst [vmem:[%s2 + $0xfc] sm:$0xf] %v812
  // Predicated region
  $region10: #{td_rumor_gcn_forward.3} parent=0 // pred_check
    _
  $region11: #{td_rumor_gcn_forward.3} parent=0 // pred_check_branch
    %942 = sbr.rel (0) target = $region13
  $region12: #{td_rumor_gcn_forward.3} parent=0 // pred_region
    _
  $region13: #{td_rumor_gcn_forward.3} parent=0 // pred_fallthru
    _
  // Predicated region
  $region14: #{td_rumor_gcn_forward.3} parent=0 // pred_check
    _
  $region15: #{td_rumor_gcn_forward.3} parent=0 // pred_check_branch
    %944 = sbr.rel (0) target = $region17
  $region16: #{td_rumor_gcn_forward.3} parent=0 // pred_region
    _
  $region17: #{td_rumor_gcn_forward.3} parent=0 // pred_fallthru
    _

// kernel: td_rumor_gcn_forward.5
$region0: #{td_rumor_gcn_forward.5}
  #allocation0 [shape = 'u32[]', space=smem, size = 0x4, offset = 0x4, fixed_abs, tag = 'smem constant byte address 0x4 - core index']
  #allocation1 [shape = 'u32[144,128]{1,0:T(1,128)}', space=vmem, size = 0x12000, scoped, tag = 'internal scratch']
  #allocation2 [shape = 'f32[512,128]{1,0:T(8,128)}', space=vmem, size = 0x40000, scoped, tag = 'scratch operand']
  %s0 = inlined_call_operand.vmem [shape: s8[512,512], index: 0, kind: input, shape index: {}]
  %s1 = inlined_call_operand.vmem [shape: f32[512,1], index: 1, kind: input, shape index: {}]
  %s2 = inlined_call_operand.vmem [shape: bf16[512,128], index: 2, kind: input, shape index: {}]
  %s3 = inlined_call_operand.vmem [shape: f32[1,128], index: 3, kind: input, shape index: {}]
  %s4 = inlined_call_operand.vmem [shape: bf16[2,512], index: 4, kind: input, shape index: {}]
  %s5 = inlined_call_operand.vmem [shape: f32[1,2,128], index: 5, kind: output, shape index: {}]
  %s6 = sld [smem:[#allocation0]]
  $region38: #{td_rumor_gcn_forward.5} parent=0
    _
  %s8 = ssub.s32 1, %s6
  %s9 = scalar_select 0, %s8, %s6
  // Predicated region
  $region2: #{td_rumor_gcn_forward.5} parent=0 // pred_check
    _
  $region3: #{td_rumor_gcn_forward.5} parent=0 // pred_check_branch
    %11 = sbr.rel (0) target = $region5
  $region4: #{td_rumor_gcn_forward.5} parent=0 // pred_region
    _
  $region5: #{td_rumor_gcn_forward.5} parent=0 // pred_fallthru
    _
  // Predicated region
  $region6: #{td_rumor_gcn_forward.5} parent=0 // pred_check
    _
  $region7: #{td_rumor_gcn_forward.5} parent=0 // pred_check_branch
    %13 = sbr.rel (0) target = $region9
  $region8: #{td_rumor_gcn_forward.5} parent=0 // pred_region
    _
  $region9: #{td_rumor_gcn_forward.5} parent=0 // pred_fallthru
    _
  // Predicated region
  $region10: #{td_rumor_gcn_forward.5} parent=0 // pred_check
    _
  $region11: #{td_rumor_gcn_forward.5} parent=0 // pred_check_branch
    %15 = sbr.rel (0) target = $region13
  $region12: #{td_rumor_gcn_forward.5} parent=0 // pred_region
    _
  $region13: #{td_rumor_gcn_forward.5} parent=0 // pred_fallthru
    _
  // Predicated region
  $region14: #{td_rumor_gcn_forward.5} parent=0 // pred_check
    _
  $region15: #{td_rumor_gcn_forward.5} parent=0 // pred_check_branch
    %17 = sbr.rel (0) target = $region17
  $region16: #{td_rumor_gcn_forward.5} parent=0 // pred_region
    _
  $region17: #{td_rumor_gcn_forward.5} parent=0 // pred_fallthru
    _
  // Predicated region
  $region18: #{td_rumor_gcn_forward.5} parent=0 // pred_check
    _
  $region19: #{td_rumor_gcn_forward.5} parent=0 // pred_check_branch
    %19 = sbr.rel (0) target = $region21
  $region20: #{td_rumor_gcn_forward.5} parent=0 // pred_region
    _
  $region21: #{td_rumor_gcn_forward.5} parent=0 // pred_fallthru
    _
  %p21 = scmp.eq.s32.totalorder 0, 0
  // Predicated region
  $region22: #{td_rumor_gcn_forward.5} parent=0 // pred_check
    %p22 = pneg %p21
  $region23: #{td_rumor_gcn_forward.5} parent=0 // pred_check_branch
    %24 = sbr.rel (%p22) target = $region25
  $region24: #{td_rumor_gcn_forward.5} parent=0 // pred_region
    %25 = vst [vmem:[#allocation2] sm:$0xff] 0.0
    %26 = vst [vmem:[#allocation2 + $0x8] sm:$0xff] 0.0
    %27 = vst [vmem:[#allocation2 + $0x10] sm:$0xff] 0.0
    %28 = vst [vmem:[#allocation2 + $0x18] sm:$0xff] 0.0
    %29 = vst [vmem:[#allocation2 + $0x20] sm:$0xff] 0.0
    %30 = vst [vmem:[#allocation2 + $0x28] sm:$0xff] 0.0
    %31 = vst [vmem:[#allocation2 + $0x30] sm:$0xff] 0.0
    %32 = vst [vmem:[#allocation2 + $0x38] sm:$0xff] 0.0
    %33 = vst [vmem:[#allocation2 + $0x40] sm:$0xff] 0.0
    %34 = vst [vmem:[#allocation2 + $0x48] sm:$0xff] 0.0
    %35 = vst [vmem:[#allocation2 + $0x50] sm:$0xff] 0.0
    %36 = vst [vmem:[#allocation2 + $0x58] sm:$0xff] 0.0
    %37 = vst [vmem:[#allocation2 + $0x60] sm:$0xff] 0.0
    %38 = vst [vmem:[#allocation2 + $0x68] sm:$0xff] 0.0
    %39 = vst [vmem:[#allocation2 + $0x70] sm:$0xff] 0.0
    %40 = vst [vmem:[#allocation2 + $0x78] sm:$0xff] 0.0
    %41 = vst [vmem:[#allocation2 + $0x80] sm:$0xff] 0.0
    %42 = vst [vmem:[#allocation2 + $0x88] sm:$0xff] 0.0
    %43 = vst [vmem:[#allocation2 + $0x90] sm:$0xff] 0.0
    %44 = vst [vmem:[#allocation2 + $0x98] sm:$0xff] 0.0
    %45 = vst [vmem:[#allocation2 + $0xa0] sm:$0xff] 0.0
    %46 = vst [vmem:[#allocation2 + $0xa8] sm:$0xff] 0.0
    %47 = vst [vmem:[#allocation2 + $0xb0] sm:$0xff] 0.0
    %48 = vst [vmem:[#allocation2 + $0xb8] sm:$0xff] 0.0
    %49 = vst [vmem:[#allocation2 + $0xc0] sm:$0xff] 0.0
    %50 = vst [vmem:[#allocation2 + $0xc8] sm:$0xff] 0.0
    %51 = vst [vmem:[#allocation2 + $0xd0] sm:$0xff] 0.0
    %52 = vst [vmem:[#allocation2 + $0xd8] sm:$0xff] 0.0
    %53 = vst [vmem:[#allocation2 + $0xe0] sm:$0xff] 0.0
    %54 = vst [vmem:[#allocation2 + $0xe8] sm:$0xff] 0.0
    %55 = vst [vmem:[#allocation2 + $0xf0] sm:$0xff] 0.0
    %56 = vst [vmem:[#allocation2 + $0xf8] sm:$0xff] 0.0
    %57 = vst [vmem:[#allocation2 + $0x100] sm:$0xff] 0.0
    %58 = vst [vmem:[#allocation2 + $0x108] sm:$0xff] 0.0
    %59 = vst [vmem:[#allocation2 + $0x110] sm:$0xff] 0.0
    %60 = vst [vmem:[#allocation2 + $0x118] sm:$0xff] 0.0
    %61 = vst [vmem:[#allocation2 + $0x120] sm:$0xff] 0.0
    %62 = vst [vmem:[#allocation2 + $0x128] sm:$0xff] 0.0
    %63 = vst [vmem:[#allocation2 + $0x130] sm:$0xff] 0.0
    %64 = vst [vmem:[#allocation2 + $0x138] sm:$0xff] 0.0
    %65 = vst [vmem:[#allocation2 + $0x140] sm:$0xff] 0.0
    %66 = vst [vmem:[#allocation2 + $0x148] sm:$0xff] 0.0
    %67 = vst [vmem:[#allocation2 + $0x150] sm:$0xff] 0.0
    %68 = vst [vmem:[#allocation2 + $0x158] sm:$0xff] 0.0
    %69 = vst [vmem:[#allocation2 + $0x160] sm:$0xff] 0.0
    %70 = vst [vmem:[#allocation2 + $0x168] sm:$0xff] 0.0
    %71 = vst [vmem:[#allocation2 + $0x170] sm:$0xff] 0.0
    %72 = vst [vmem:[#allocation2 + $0x178] sm:$0xff] 0.0
    %73 = vst [vmem:[#allocation2 + $0x180] sm:$0xff] 0.0
    %74 = vst [vmem:[#allocation2 + $0x188] sm:$0xff] 0.0
    %75 = vst [vmem:[#allocation2 + $0x190] sm:$0xff] 0.0
    %76 = vst [vmem:[#allocation2 + $0x198] sm:$0xff] 0.0
    %77 = vst [vmem:[#allocation2 + $0x1a0] sm:$0xff] 0.0
    %78 = vst [vmem:[#allocation2 + $0x1a8] sm:$0xff] 0.0
    %79 = vst [vmem:[#allocation2 + $0x1b0] sm:$0xff] 0.0
    %80 = vst [vmem:[#allocation2 + $0x1b8] sm:$0xff] 0.0
    %81 = vst [vmem:[#allocation2 + $0x1c0] sm:$0xff] 0.0
    %82 = vst [vmem:[#allocation2 + $0x1c8] sm:$0xff] 0.0
    %83 = vst [vmem:[#allocation2 + $0x1d0] sm:$0xff] 0.0
    %84 = vst [vmem:[#allocation2 + $0x1d8] sm:$0xff] 0.0
    %85 = vst [vmem:[#allocation2 + $0x1e0] sm:$0xff] 0.0
    %86 = vst [vmem:[#allocation2 + $0x1e8] sm:$0xff] 0.0
    %87 = vst [vmem:[#allocation2 + $0x1f0] sm:$0xff] 0.0
    %88 = vst [vmem:[#allocation2 + $0x1f8] sm:$0xff] 0.0
  $region25: #{td_rumor_gcn_forward.5} parent=0 // pred_fallthru
    _
  %v89 = vld [vmem:[%s0] sm:$0xff]
  %v90 = vld [vmem:[%s0 + $0x8] sm:$0xff]
  %v91 = vld [vmem:[%s0 + $0x10] sm:$0xff]
  %v92 = vld [vmem:[%s0 + $0x18] sm:$0xff]
  %v93 = vld [vmem:[%s0 + $0x20] sm:$0xff]
  %v94 = vld [vmem:[%s0 + $0x28] sm:$0xff]
  %v95 = vld [vmem:[%s0 + $0x30] sm:$0xff]
  %v96 = vld [vmem:[%s0 + $0x38] sm:$0xff]
  %v97 = vld [vmem:[%s0 + $0x40] sm:$0xff]
  %v98 = vld [vmem:[%s0 + $0x48] sm:$0xff]
  %v99 = vld [vmem:[%s0 + $0x50] sm:$0xff]
  %v100 = vld [vmem:[%s0 + $0x58] sm:$0xff]
  %v101 = vld [vmem:[%s0 + $0x60] sm:$0xff]
  %v102 = vld [vmem:[%s0 + $0x68] sm:$0xff]
  %v103 = vld [vmem:[%s0 + $0x70] sm:$0xff]
  %v104 = vld [vmem:[%s0 + $0x78] sm:$0xff]
  %v105 = vld [vmem:[%s0 + $0x80] sm:$0xff]
  %v106 = vld [vmem:[%s0 + $0x88] sm:$0xff]
  %v107 = vld [vmem:[%s0 + $0x90] sm:$0xff]
  %v108 = vld [vmem:[%s0 + $0x98] sm:$0xff]
  %v109 = vld [vmem:[%s0 + $0xa0] sm:$0xff]
  %v110 = vld [vmem:[%s0 + $0xa8] sm:$0xff]
  %v111 = vld [vmem:[%s0 + $0xb0] sm:$0xff]
  %v112 = vld [vmem:[%s0 + $0xb8] sm:$0xff]
  %v113 = vld [vmem:[%s0 + $0xc0] sm:$0xff]
  %v114 = vld [vmem:[%s0 + $0xc8] sm:$0xff]
  %v115 = vld [vmem:[%s0 + $0xd0] sm:$0xff]
  %v116 = vld [vmem:[%s0 + $0xd8] sm:$0xff]
  %v117 = vld [vmem:[%s0 + $0xe0] sm:$0xff]
  %v118 = vld [vmem:[%s0 + $0xe8] sm:$0xff]
  %v119 = vld [vmem:[%s0 + $0xf0] sm:$0xff]
  %v120 = vld [vmem:[%s0 + $0xf8] sm:$0xff]
  %v121 = vld [vmem:[%s0 + $0x100] sm:$0xff]
  %v122 = vld [vmem:[%s0 + $0x108] sm:$0xff]
  %v123 = vld [vmem:[%s0 + $0x110] sm:$0xff]
  %v124 = vld [vmem:[%s0 + $0x118] sm:$0xff]
  %v125 = vld [vmem:[%s0 + $0x120] sm:$0xff]
  %v126 = vld [vmem:[%s0 + $0x128] sm:$0xff]
  %v127 = vld [vmem:[%s0 + $0x130] sm:$0xff]
  %v128 = vld [vmem:[%s0 + $0x138] sm:$0xff]
  %v129 = vld [vmem:[%s0 + $0x140] sm:$0xff]
  %v130 = vld [vmem:[%s0 + $0x148] sm:$0xff]
  %v131 = vld [vmem:[%s0 + $0x150] sm:$0xff]
  %v132 = vld [vmem:[%s0 + $0x158] sm:$0xff]
  %v133 = vld [vmem:[%s0 + $0x160] sm:$0xff]
  %v134 = vld [vmem:[%s0 + $0x168] sm:$0xff]
  %v135 = vld [vmem:[%s0 + $0x170] sm:$0xff]
  %v136 = vld [vmem:[%s0 + $0x178] sm:$0xff]
  %v137 = vld [vmem:[%s0 + $0x180] sm:$0xff]
  %v138 = vld [vmem:[%s0 + $0x188] sm:$0xff]
  %v139 = vld [vmem:[%s0 + $0x190] sm:$0xff]
  %v140 = vld [vmem:[%s0 + $0x198] sm:$0xff]
  %v141 = vld [vmem:[%s0 + $0x1a0] sm:$0xff]
  %v142 = vld [vmem:[%s0 + $0x1a8] sm:$0xff]
  %v143 = vld [vmem:[%s0 + $0x1b0] sm:$0xff]
  %v144 = vld [vmem:[%s0 + $0x1b8] sm:$0xff]
  %v145 = vld [vmem:[%s0 + $0x1c0] sm:$0xff]
  %v146 = vld [vmem:[%s0 + $0x1c8] sm:$0xff]
  %v147 = vld [vmem:[%s0 + $0x1d0] sm:$0xff]
  %v148 = vld [vmem:[%s0 + $0x1d8] sm:$0xff]
  %v149 = vld [vmem:[%s0 + $0x1e0] sm:$0xff]
  %v150 = vld [vmem:[%s0 + $0x1e8] sm:$0xff]
  %v151 = vld [vmem:[%s0 + $0x1f0] sm:$0xff]
  %v152 = vld [vmem:[%s0 + $0x1f8] sm:$0xff]
  %v153 = vunpack.c.l.s8.bf16 %v89
  %v154 = vunpack.c.l.s8.bf16 %v90
  %v155 = vunpack.c.l.s8.bf16 %v91
  %v156 = vunpack.c.l.s8.bf16 %v92
  %v157 = vunpack.c.h.s8.bf16 %v89
  %v158 = vunpack.c.h.s8.bf16 %v90
  %v159 = vunpack.c.h.s8.bf16 %v91
  %v160 = vunpack.c.h.s8.bf16 %v92
  %v161 = vunpack.c.l.s8.bf16 %v93
  %v162 = vunpack.c.l.s8.bf16 %v94
  %v163 = vunpack.c.l.s8.bf16 %v95
  %v164 = vunpack.c.l.s8.bf16 %v96
  %v165 = vunpack.c.h.s8.bf16 %v93
  %v166 = vunpack.c.h.s8.bf16 %v94
  %v167 = vunpack.c.h.s8.bf16 %v95
  %v168 = vunpack.c.h.s8.bf16 %v96
  %v169 = vunpack.c.l.s8.bf16 %v97
  %v170 = vunpack.c.l.s8.bf16 %v98
  %v171 = vunpack.c.l.s8.bf16 %v99
  %v172 = vunpack.c.l.s8.bf16 %v100
  %v173 = vunpack.c.h.s8.bf16 %v97
  %v174 = vunpack.c.h.s8.bf16 %v98
  %v175 = vunpack.c.h.s8.bf16 %v99
  %v176 = vunpack.c.h.s8.bf16 %v100
  %v177 = vunpack.c.l.s8.bf16 %v101
  %v178 = vunpack.c.l.s8.bf16 %v102
  %v179 = vunpack.c.l.s8.bf16 %v103
  %v180 = vunpack.c.l.s8.bf16 %v104
  %v181 = vunpack.c.h.s8.bf16 %v101
  %v182 = vunpack.c.h.s8.bf16 %v102
  %v183 = vunpack.c.h.s8.bf16 %v103
  %v184 = vunpack.c.h.s8.bf16 %v104
  %v185 = vunpack.c.l.s8.bf16 %v105
  %v186 = vunpack.c.l.s8.bf16 %v106
  %v187 = vunpack.c.l.s8.bf16 %v107
  %v188 = vunpack.c.l.s8.bf16 %v108
  %v189 = vunpack.c.h.s8.bf16 %v105
  %v190 = vunpack.c.h.s8.bf16 %v106
  %v191 = vunpack.c.h.s8.bf16 %v107
  %v192 = vunpack.c.h.s8.bf16 %v108
  %v193 = vunpack.c.l.s8.bf16 %v109
  %v194 = vunpack.c.l.s8.bf16 %v110
  %v195 = vunpack.c.l.s8.bf16 %v111
  %v196 = vunpack.c.l.s8.bf16 %v112
  %v197 = vunpack.c.h.s8.bf16 %v109
  %v198 = vunpack.c.h.s8.bf16 %v110
  %v199 = vunpack.c.h.s8.bf16 %v111
  %v200 = vunpack.c.h.s8.bf16 %v112
  %v201 = vunpack.c.l.s8.bf16 %v113
  %v202 = vunpack.c.l.s8.bf16 %v114
  %v203 = vunpack.c.l.s8.bf16 %v115
  %v204 = vunpack.c.l.s8.bf16 %v116
  %v205 = vunpack.c.h.s8.bf16 %v113
  %v206 = vunpack.c.h.s8.bf16 %v114
  %v207 = vunpack.c.h.s8.bf16 %v115
  %v208 = vunpack.c.h.s8.bf16 %v116
  %v209 = vunpack.c.l.s8.bf16 %v117
  %v210 = vunpack.c.l.s8.bf16 %v118
  %v211 = vunpack.c.l.s8.bf16 %v119
  %v212 = vunpack.c.l.s8.bf16 %v120
  %v213 = vunpack.c.h.s8.bf16 %v117
  %v214 = vunpack.c.h.s8.bf16 %v118
  %v215 = vunpack.c.h.s8.bf16 %v119
  %v216 = vunpack.c.h.s8.bf16 %v120
  %v217 = vunpack.c.l.s8.bf16 %v121
  %v218 = vunpack.c.l.s8.bf16 %v122
  %v219 = vunpack.c.l.s8.bf16 %v123
  %v220 = vunpack.c.l.s8.bf16 %v124
  %v221 = vunpack.c.h.s8.bf16 %v121
  %v222 = vunpack.c.h.s8.bf16 %v122
  %v223 = vunpack.c.h.s8.bf16 %v123
  %v224 = vunpack.c.h.s8.bf16 %v124
  %v225 = vunpack.c.l.s8.bf16 %v125
  %v226 = vunpack.c.l.s8.bf16 %v126
  %v227 = vunpack.c.l.s8.bf16 %v127
  %v228 = vunpack.c.l.s8.bf16 %v128
  %v229 = vunpack.c.h.s8.bf16 %v125
  %v230 = vunpack.c.h.s8.bf16 %v126
  %v231 = vunpack.c.h.s8.bf16 %v127
  %v232 = vunpack.c.h.s8.bf16 %v128
  %v233 = vunpack.c.l.s8.bf16 %v129
  %v234 = vunpack.c.l.s8.bf16 %v130
  %v235 = vunpack.c.l.s8.bf16 %v131
  %v236 = vunpack.c.l.s8.bf16 %v132
  %v237 = vunpack.c.h.s8.bf16 %v129
  %v238 = vunpack.c.h.s8.bf16 %v130
  %v239 = vunpack.c.h.s8.bf16 %v131
  %v240 = vunpack.c.h.s8.bf16 %v132
  %v241 = vunpack.c.l.s8.bf16 %v133
  %v242 = vunpack.c.l.s8.bf16 %v134
  %v243 = vunpack.c.l.s8.bf16 %v135
  %v244 = vunpack.c.l.s8.bf16 %v136
  %v245 = vunpack.c.h.s8.bf16 %v133
  %v246 = vunpack.c.h.s8.bf16 %v134
  %v247 = vunpack.c.h.s8.bf16 %v135
  %v248 = vunpack.c.h.s8.bf16 %v136
  %v249 = vunpack.c.l.s8.bf16 %v137
  %v250 = vunpack.c.l.s8.bf16 %v138
  %v251 = vunpack.c.l.s8.bf16 %v139
  %v252 = vunpack.c.l.s8.bf16 %v140
  %v253 = vunpack.c.h.s8.bf16 %v137
  %v254 = vunpack.c.h.s8.bf16 %v138
  %v255 = vunpack.c.h.s8.bf16 %v139
  %v256 = vunpack.c.h.s8.bf16 %v140
  %v257 = vunpack.c.l.s8.bf16 %v141
  %v258 = vunpack.c.l.s8.bf16 %v142
  %v259 = vunpack.c.l.s8.bf16 %v143
  %v260 = vunpack.c.l.s8.bf16 %v144
  %v261 = vunpack.c.h.s8.bf16 %v141
  %v262 = vunpack.c.h.s8.bf16 %v142
  %v263 = vunpack.c.h.s8.bf16 %v143
  %v264 = vunpack.c.h.s8.bf16 %v144
  %v265 = vunpack.c.l.s8.bf16 %v145
  %v266 = vunpack.c.l.s8.bf16 %v146
  %v267 = vunpack.c.l.s8.bf16 %v147
  %v268 = vunpack.c.l.s8.bf16 %v148
  %v269 = vunpack.c.h.s8.bf16 %v145
  %v270 = vunpack.c.h.s8.bf16 %v146
  %v271 = vunpack.c.h.s8.bf16 %v147
  %v272 = vunpack.c.h.s8.bf16 %v148
  %v273 = vunpack.c.l.s8.bf16 %v149
  %v274 = vunpack.c.l.s8.bf16 %v150
  %v275 = vunpack.c.l.s8.bf16 %v151
  %v276 = vunpack.c.l.s8.bf16 %v152
  %v277 = vunpack.c.h.s8.bf16 %v149
  %v278 = vunpack.c.h.s8.bf16 %v150
  %v279 = vunpack.c.h.s8.bf16 %v151
  %v280 = vunpack.c.h.s8.bf16 %v152
  %v281 = vld [vmem:[#allocation2] sm:$0xff]
  %v282 = vld [vmem:[#allocation2 + $0x8] sm:$0xff]
  %v283 = vld [vmem:[#allocation2 + $0x10] sm:$0xff]
  %v284 = vld [vmem:[#allocation2 + $0x18] sm:$0xff]
  %v285 = vld [vmem:[#allocation2 + $0x20] sm:$0xff]
  %v286 = vld [vmem:[#allocation2 + $0x28] sm:$0xff]
  %v287 = vld [vmem:[#allocation2 + $0x30] sm:$0xff]
  %v288 = vld [vmem:[#allocation2 + $0x38] sm:$0xff]
  %v289 = vld [vmem:[#allocation2 + $0x40] sm:$0xff]
  %v290 = vld [vmem:[#allocation2 + $0x48] sm:$0xff]
  %v291 = vld [vmem:[#allocation2 + $0x50] sm:$0xff]
  %v292 = vld [vmem:[#allocation2 + $0x58] sm:$0xff]
  %v293 = vld [vmem:[#allocation2 + $0x60] sm:$0xff]
  %v294 = vld [vmem:[#allocation2 + $0x68] sm:$0xff]
  %v295 = vld [vmem:[#allocation2 + $0x70] sm:$0xff]
  %v296 = vld [vmem:[#allocation2 + $0x78] sm:$0xff]
  %v297 = vld [vmem:[#allocation2 + $0x80] sm:$0xff]
  %v298 = vld [vmem:[#allocation2 + $0x88] sm:$0xff]
  %v299 = vld [vmem:[#allocation2 + $0x90] sm:$0xff]
  %v300 = vld [vmem:[#allocation2 + $0x98] sm:$0xff]
  %v301 = vld [vmem:[#allocation2 + $0xa0] sm:$0xff]
  %v302 = vld [vmem:[#allocation2 + $0xa8] sm:$0xff]
  %v303 = vld [vmem:[#allocation2 + $0xb0] sm:$0xff]
  %v304 = vld [vmem:[#allocation2 + $0xb8] sm:$0xff]
  %v305 = vld [vmem:[#allocation2 + $0xc0] sm:$0xff]
  %v306 = vld [vmem:[#allocation2 + $0xc8] sm:$0xff]
  %v307 = vld [vmem:[#allocation2 + $0xd0] sm:$0xff]
  %v308 = vld [vmem:[#allocation2 + $0xd8] sm:$0xff]
  %v309 = vld [vmem:[#allocation2 + $0xe0] sm:$0xff]
  %v310 = vld [vmem:[#allocation2 + $0xe8] sm:$0xff]
  %v311 = vld [vmem:[#allocation2 + $0xf0] sm:$0xff]
  %v312 = vld [vmem:[#allocation2 + $0xf8] sm:$0xff]
  %v313 = vld [vmem:[#allocation2 + $0x100] sm:$0xff]
  %v314 = vld [vmem:[#allocation2 + $0x108] sm:$0xff]
  %v315 = vld [vmem:[#allocation2 + $0x110] sm:$0xff]
  %v316 = vld [vmem:[#allocation2 + $0x118] sm:$0xff]
  %v317 = vld [vmem:[#allocation2 + $0x120] sm:$0xff]
  %v318 = vld [vmem:[#allocation2 + $0x128] sm:$0xff]
  %v319 = vld [vmem:[#allocation2 + $0x130] sm:$0xff]
  %v320 = vld [vmem:[#allocation2 + $0x138] sm:$0xff]
  %v321 = vld [vmem:[#allocation2 + $0x140] sm:$0xff]
  %v322 = vld [vmem:[#allocation2 + $0x148] sm:$0xff]
  %v323 = vld [vmem:[#allocation2 + $0x150] sm:$0xff]
  %v324 = vld [vmem:[#allocation2 + $0x158] sm:$0xff]
  %v325 = vld [vmem:[#allocation2 + $0x160] sm:$0xff]
  %v326 = vld [vmem:[#allocation2 + $0x168] sm:$0xff]
  %v327 = vld [vmem:[#allocation2 + $0x170] sm:$0xff]
  %v328 = vld [vmem:[#allocation2 + $0x178] sm:$0xff]
  %v329 = vld [vmem:[#allocation2 + $0x180] sm:$0xff]
  %v330 = vld [vmem:[#allocation2 + $0x188] sm:$0xff]
  %v331 = vld [vmem:[#allocation2 + $0x190] sm:$0xff]
  %v332 = vld [vmem:[#allocation2 + $0x198] sm:$0xff]
  %v333 = vld [vmem:[#allocation2 + $0x1a0] sm:$0xff]
  %v334 = vld [vmem:[#allocation2 + $0x1a8] sm:$0xff]
  %v335 = vld [vmem:[#allocation2 + $0x1b0] sm:$0xff]
  %v336 = vld [vmem:[#allocation2 + $0x1b8] sm:$0xff]
  %v337 = vld [vmem:[#allocation2 + $0x1c0] sm:$0xff]
  %v338 = vld [vmem:[#allocation2 + $0x1c8] sm:$0xff]
  %v339 = vld [vmem:[#allocation2 + $0x1d0] sm:$0xff]
  %v340 = vld [vmem:[#allocation2 + $0x1d8] sm:$0xff]
  %v341 = vld [vmem:[#allocation2 + $0x1e0] sm:$0xff]
  %v342 = vld [vmem:[#allocation2 + $0x1e8] sm:$0xff]
  %v343 = vld [vmem:[#allocation2 + $0x1f0] sm:$0xff]
  %v344 = vld [vmem:[#allocation2 + $0x1f8] sm:$0xff]
  %v345 = vld [vmem:[%s2] sm:$0xf]
  %v346 = vld [vmem:[%s2 + $0x4] sm:$0xf]
  %v347 = vld [vmem:[%s2 + $0x8] sm:$0xf]
  %v348 = vld [vmem:[%s2 + $0xc] sm:$0xf]
  %v349 = vld [vmem:[%s2 + $0x10] sm:$0xf]
  %v350 = vld [vmem:[%s2 + $0x14] sm:$0xf]
  %v351 = vld [vmem:[%s2 + $0x18] sm:$0xf]
  %v352 = vld [vmem:[%s2 + $0x1c] sm:$0xf]
  %v353 = vld [vmem:[%s2 + $0x20] sm:$0xf]
  %v354 = vld [vmem:[%s2 + $0x24] sm:$0xf]
  %v355 = vld [vmem:[%s2 + $0x28] sm:$0xf]
  %v356 = vld [vmem:[%s2 + $0x2c] sm:$0xf]
  %v357 = vld [vmem:[%s2 + $0x30] sm:$0xf]
  %v358 = vld [vmem:[%s2 + $0x34] sm:$0xf]
  %v359 = vld [vmem:[%s2 + $0x38] sm:$0xf]
  %v360 = vld [vmem:[%s2 + $0x3c] sm:$0xf]
  %v361 = vld [vmem:[%s2 + $0x40] sm:$0xf]
  %v362 = vld [vmem:[%s2 + $0x44] sm:$0xf]
  %v363 = vld [vmem:[%s2 + $0x48] sm:$0xf]
  %v364 = vld [vmem:[%s2 + $0x4c] sm:$0xf]
  %v365 = vld [vmem:[%s2 + $0x50] sm:$0xf]
  %v366 = vld [vmem:[%s2 + $0x54] sm:$0xf]
  %v367 = vld [vmem:[%s2 + $0x58] sm:$0xf]
  %v368 = vld [vmem:[%s2 + $0x5c] sm:$0xf]
  %v369 = vld [vmem:[%s2 + $0x60] sm:$0xf]
  %v370 = vld [vmem:[%s2 + $0x64] sm:$0xf]
  %v371 = vld [vmem:[%s2 + $0x68] sm:$0xf]
  %v372 = vld [vmem:[%s2 + $0x6c] sm:$0xf]
  %v373 = vld [vmem:[%s2 + $0x70] sm:$0xf]
  %v374 = vld [vmem:[%s2 + $0x74] sm:$0xf]
  %v375 = vld [vmem:[%s2 + $0x78] sm:$0xf]
  %v376 = vld [vmem:[%s2 + $0x7c] sm:$0xf]
  %v377 = vld [vmem:[%s2 + $0x80] sm:$0xf]
  %v378 = vld [vmem:[%s2 + $0x84] sm:$0xf]
  %v379 = vld [vmem:[%s2 + $0x88] sm:$0xf]
  %v380 = vld [vmem:[%s2 + $0x8c] sm:$0xf]
  %v381 = vld [vmem:[%s2 + $0x90] sm:$0xf]
  %v382 = vld [vmem:[%s2 + $0x94] sm:$0xf]
  %v383 = vld [vmem:[%s2 + $0x98] sm:$0xf]
  %v384 = vld [vmem:[%s2 + $0x9c] sm:$0xf]
  %v385 = vld [vmem:[%s2 + $0xa0] sm:$0xf]
  %v386 = vld [vmem:[%s2 + $0xa4] sm:$0xf]
  %v387 = vld [vmem:[%s2 + $0xa8] sm:$0xf]
  %v388 = vld [vmem:[%s2 + $0xac] sm:$0xf]
  %v389 = vld [vmem:[%s2 + $0xb0] sm:$0xf]
  %v390 = vld [vmem:[%s2 + $0xb4] sm:$0xf]
  %v391 = vld [vmem:[%s2 + $0xb8] sm:$0xf]
  %v392 = vld [vmem:[%s2 + $0xbc] sm:$0xf]
  %v393 = vld [vmem:[%s2 + $0xc0] sm:$0xf]
  %v394 = vld [vmem:[%s2 + $0xc4] sm:$0xf]
  %v395 = vld [vmem:[%s2 + $0xc8] sm:$0xf]
  %v396 = vld [vmem:[%s2 + $0xcc] sm:$0xf]
  %v397 = vld [vmem:[%s2 + $0xd0] sm:$0xf]
  %v398 = vld [vmem:[%s2 + $0xd4] sm:$0xf]
  %v399 = vld [vmem:[%s2 + $0xd8] sm:$0xf]
  %v400 = vld [vmem:[%s2 + $0xdc] sm:$0xf]
  %v401 = vld [vmem:[%s2 + $0xe0] sm:$0xf]
  %v402 = vld [vmem:[%s2 + $0xe4] sm:$0xf]
  %v403 = vld [vmem:[%s2 + $0xe8] sm:$0xf]
  %v404 = vld [vmem:[%s2 + $0xec] sm:$0xf]
  %v405 = vld [vmem:[%s2 + $0xf0] sm:$0xf]
  %v406 = vld [vmem:[%s2 + $0xf4] sm:$0xf]
  %v407 = vld [vmem:[%s2 + $0xf8] sm:$0xf]
  %v408 = vld [vmem:[%s2 + $0xfc] sm:$0xf]
  %v473 = vunpack.c.l.b16 %v345
  %v474 = vunpack.c.l.b16 %v346
  %v475 = vunpack.c.l.b16 %v347
  %v476 = vunpack.c.l.b16 %v348
  %v477 = vunpack.c.l.b16 %v349
  %v478 = vunpack.c.l.b16 %v350
  %v479 = vunpack.c.l.b16 %v351
  %v480 = vunpack.c.l.b16 %v352
  %v481 = vunpack.c.l.b16 %v353
  %v482 = vunpack.c.l.b16 %v354
  %v483 = vunpack.c.l.b16 %v355
  %v484 = vunpack.c.l.b16 %v356
  %v485 = vunpack.c.l.b16 %v357
  %v486 = vunpack.c.l.b16 %v358
  %v487 = vunpack.c.l.b16 %v359
  %v488 = vunpack.c.l.b16 %v360
  %v489 = vunpack.c.l.b16 %v361
  %v490 = vunpack.c.l.b16 %v362
  %v491 = vunpack.c.l.b16 %v363
  %v492 = vunpack.c.l.b16 %v364
  %v493 = vunpack.c.l.b16 %v365
  %v494 = vunpack.c.l.b16 %v366
  %v495 = vunpack.c.l.b16 %v367
  %v496 = vunpack.c.l.b16 %v368
  %v497 = vunpack.c.l.b16 %v369
  %v498 = vunpack.c.l.b16 %v370
  %v499 = vunpack.c.l.b16 %v371
  %v500 = vunpack.c.l.b16 %v372
  %v501 = vunpack.c.l.b16 %v373
  %v502 = vunpack.c.l.b16 %v374
  %v503 = vunpack.c.l.b16 %v375
  %v504 = vunpack.c.l.b16 %v376
  %v505 = vunpack.c.l.b16 %v377
  %v506 = vunpack.c.l.b16 %v378
  %v507 = vunpack.c.l.b16 %v379
  %v508 = vunpack.c.l.b16 %v380
  %v509 = vunpack.c.l.b16 %v381
  %v510 = vunpack.c.l.b16 %v382
  %v511 = vunpack.c.l.b16 %v383
  %v512 = vunpack.c.l.b16 %v384
  %v513 = vunpack.c.l.b16 %v385
  %v514 = vunpack.c.l.b16 %v386
  %v515 = vunpack.c.l.b16 %v387
  %v516 = vunpack.c.l.b16 %v388
  %v517 = vunpack.c.l.b16 %v389
  %v518 = vunpack.c.l.b16 %v390
  %v519 = vunpack.c.l.b16 %v391
  %v520 = vunpack.c.l.b16 %v392
  %v521 = vunpack.c.l.b16 %v393
  %v522 = vunpack.c.l.b16 %v394
  %v523 = vunpack.c.l.b16 %v395
  %v524 = vunpack.c.l.b16 %v396
  %v525 = vunpack.c.l.b16 %v397
  %v526 = vunpack.c.l.b16 %v398
  %v527 = vunpack.c.l.b16 %v399
  %v528 = vunpack.c.l.b16 %v400
  %v529 = vunpack.c.l.b16 %v401
  %v530 = vunpack.c.l.b16 %v402
  %v531 = vunpack.c.l.b16 %v403
  %v532 = vunpack.c.l.b16 %v404
  %v533 = vunpack.c.l.b16 %v405
  %v534 = vunpack.c.l.b16 %v406
  %v535 = vunpack.c.l.b16 %v407
  %v536 = vunpack.c.l.b16 %v408
  %v537 = vpack.c.b16 %v474, %v473
  %v538 = vpack.c.b16 %v476, %v475
  %v539 = vpack.c.b16 %v478, %v477
  %v540 = vpack.c.b16 %v480, %v479
  %v541 = vpack.c.b16 %v482, %v481
  %v542 = vpack.c.b16 %v484, %v483
  %v543 = vpack.c.b16 %v486, %v485
  %v544 = vpack.c.b16 %v488, %v487
  %v545 = vpack.c.b16 %v490, %v489
  %v546 = vpack.c.b16 %v492, %v491
  %v547 = vpack.c.b16 %v494, %v493
  %v548 = vpack.c.b16 %v496, %v495
  %v549 = vpack.c.b16 %v498, %v497
  %v550 = vpack.c.b16 %v500, %v499
  %v551 = vpack.c.b16 %v502, %v501
  %v552 = vpack.c.b16 %v504, %v503
  %v553 = vpack.c.b16 %v506, %v505
  %v554 = vpack.c.b16 %v508, %v507
  %v555 = vpack.c.b16 %v510, %v509
  %v556 = vpack.c.b16 %v512, %v511
  %v557 = vpack.c.b16 %v514, %v513
  %v558 = vpack.c.b16 %v516, %v515
  %v559 = vpack.c.b16 %v518, %v517
  %v560 = vpack.c.b16 %v520, %v519
  %v561 = vpack.c.b16 %v522, %v521
  %v562 = vpack.c.b16 %v524, %v523
  %v563 = vpack.c.b16 %v526, %v525
  %v564 = vpack.c.b16 %v528, %v527
  %v565 = vpack.c.b16 %v530, %v529
  %v566 = vpack.c.b16 %v532, %v531
  %v567 = vpack.c.b16 %v534, %v533
  %v568 = vpack.c.b16 %v536, %v535
  %601 = vmatprep.subr.bf16.mxu0 0
  %602 = vmatpush1.bf16.msra.mxu0 %v537
  %603 = vmatprep.subr.bf16.mxu0 0
  %604 = vmatpush1.bf16.msra.mxu0 %v538
  %605 = vmatprep.subr.bf16.mxu0 0
  %606 = vmatpush1.bf16.msra.mxu0 %v539
  %607 = vmatprep.subr.bf16.mxu0 0
  %608 = vmatpush1.bf16.msra.mxu0 %v540
  %609 = vmatprep.subr.bf16.mxu0 0
  %610 = vmatpush1.bf16.msra.mxu0 %v541
  %611 = vmatprep.subr.bf16.mxu0 0
  %612 = vmatpush1.bf16.msra.mxu0 %v542
  %613 = vmatprep.subr.bf16.mxu0 0
  %614 = vmatpush1.bf16.msra.mxu0 %v543
  %615 = vmatprep.subr.bf16.mxu0 0
  %616 = vmatpush1.bf16.msra.mxu0 %v544
  %617 = vmatprep.subr.bf16.mxu0 0
  %618 = vmatpush1.bf16.msra.mxu0 %v545
  %619 = vmatprep.subr.bf16.mxu0 0
  %620 = vmatpush1.bf16.msra.mxu0 %v546
  %621 = vmatprep.subr.bf16.mxu0 0
  %622 = vmatpush1.bf16.msra.mxu0 %v547
  %623 = vmatprep.subr.bf16.mxu0 0
  %624 = vmatpush1.bf16.msra.mxu0 %v548
  %625 = vmatprep.subr.bf16.mxu0 0
  %626 = vmatpush1.bf16.msra.mxu0 %v549
  %627 = vmatprep.subr.bf16.mxu0 0
  %628 = vmatpush1.bf16.msra.mxu0 %v550
  %629 = vmatprep.subr.bf16.mxu0 0
  %630 = vmatpush1.bf16.msra.mxu0 %v551
  %631 = vmatprep.subr.bf16.mxu0 0
  %632 = vmatpush1.bf16.msra.mxu0 %v552
  %633 = vmatprep.mubr.bf16.mxu0 %v154
  %634 = vmatmul.mubr.bf16.gmra.mrb[0].mxu0 %v153
  %v635 = vpop.f32.mrb[0].mxu0
  %v636 = vadd.f32 0.0, %v635
  %v637 = vpop.f32.mrb[0].mxu0
  %v638 = vpop.f32.mrb[0].mxu0
  %v639 = vadd.f32 0.0, %v638
  %v640 = vpop.f32.mrb[0].mxu0
  %641 = vmatprep.mubr.bf16.mxu0 %v158
  %642 = vmatmul.mubr.bf16.gmra.mrb[0].mxu0 %v157
  %v643 = vpop.f32.mrb[0].mxu0
  %v644 = vadd.f32 0.0, %v643
  %v645 = vpop.f32.mrb[0].mxu0
  %v646 = vpop.f32.mrb[0].mxu0
  %v647 = vadd.f32 0.0, %v646
  %v648 = vpop.f32.mrb[0].mxu0
  %649 = vmatprep.mubr.bf16.mxu0 %v162
  %650 = vmatmul.mubr.bf16.gmra.mrb[0].mxu0 %v161
  %v651 = vpop.f32.mrb[0].mxu0
  %v652 = vadd.f32 0.0, %v651
  %v653 = vpop.f32.mrb[0].mxu0
  %v654 = vpop.f32.mrb[0].mxu0
  %v655 = vadd.f32 0.0, %v654
  %v656 = vpop.f32.mrb[0].mxu0
  %657 = vmatprep.mubr.bf16.mxu0 %v166
  %658 = vmatmul.mubr.bf16.gmra.mrb[0].mxu0 %v165
  %v659 = vpop.f32.mrb[0].mxu0
  %v660 = vadd.f32 0.0, %v659
  %v661 = vpop.f32.mrb[0].mxu0
  %v662 = vpop.f32.mrb[0].mxu0
  %v663 = vadd.f32 0.0, %v662
  %v664 = vpop.f32.mrb[0].mxu0
  %665 = vmatprep.mubr.bf16.mxu0 %v170
  %666 = vmatmul.mubr.bf16.gmra.mrb[0].mxu0 %v169
  %v667 = vpop.f32.mrb[0].mxu0
  %v668 = vadd.f32 0.0, %v667
  %v669 = vpop.f32.mrb[0].mxu0
  %v670 = vpop.f32.mrb[0].mxu0
  %v671 = vadd.f32 0.0, %v670
  %v672 = vpop.f32.mrb[0].mxu0
  %673 = vmatprep.mubr.bf16.mxu0 %v174
  %674 = vmatmul.mubr.bf16.gmra.mrb[0].mxu0 %v173
  %v675 = vpop.f32.mrb[0].mxu0
  %v676 = vadd.f32 0.0, %v675
  %v677 = vpop.f32.mrb[0].mxu0
  %v678 = vpop.f32.mrb[0].mxu0
  %v679 = vadd.f32 0.0, %v678
  %v680 = vpop.f32.mrb[0].mxu0
  %681 = vmatprep.mubr.bf16.mxu0 %v178
  %682 = vmatmul.mubr.bf16.gmra.mrb[0].mxu0 %v177
  %v683 = vpop.f32.mrb[0].mxu0
  %v684 = vadd.f32 0.0, %v683
  %v685 = vpop.f32.mrb[0].mxu0
  %v686 = vpop.f32.mrb[0].mxu0
  %v687 = vadd.f32 0.0, %v686
  %v688 = vpop.f32.mrb[0].mxu0
  %689 = vmatprep.mubr.bf16.mxu0 %v182
  %690 = vmatmul.mubr.bf16.gmra.mrb[0].mxu0 %v181
  %v691 = vpop.f32.mrb[0].mxu0
  %v692 = vadd.f32 0.0, %v691
  %v693 = vpop.f32.mrb[0].mxu0
  %v694 = vpop.f32.mrb[0].mxu0
  %v695 = vadd.f32 0.0, %v694
  %v696 = vpop.f32.mrb[0].mxu0
  %697 = vmatprep.mubr.bf16.mxu0 %v186
  %698 = vmatmul.mubr.bf16.gmra.mrb[0].mxu0 %v185
  %v699 = vpop.f32.mrb[0].mxu0
  %v700 = vadd.f32 0.0, %v699
  %v701 = vpop.f32.mrb[0].mxu0
  %v702 = vpop.f32.mrb[0].mxu0
  %v703 = vadd.f32 0.0, %v702
  %v704 = vpop.f32.mrb[0].mxu0
  %705 = vmatprep.mubr.bf16.mxu0 %v190
  %706 = vmatmul.mubr.bf16.gmra.mrb[0].mxu0 %v189
  %v707 = vpop.f32.mrb[0].mxu0
  %v708 = vadd.f32 0.0, %v707
  %v709 = vpop.f32.mrb[0].mxu0
  %v710 = vpop.f32.mrb[0].mxu0
  %v711 = vadd.f32 0.0, %v710
  %v712 = vpop.f32.mrb[0].mxu0
  %713 = vmatprep.mubr.bf16.mxu0 %v194
  %714 = vmatmul.mubr.bf16.gmra.mrb[0].mxu0 %v193
  %v715 = vpop.f32.mrb[0].mxu0
  %v716 = vadd.f32 0.0, %v715
  %v717 = vpop.f32.mrb[0].mxu0
  %v718 = vpop.f32.mrb[0].mxu0
  %v719 = vadd.f32 0.0, %v718
  %v720 = vpop.f32.mrb[0].mxu0
  %721 = vmatprep.mubr.bf16.mxu0 %v198
  %722 = vmatmul.mubr.bf16.gmra.mrb[0].mxu0 %v197
  %v723 = vpop.f32.mrb[0].mxu0
  %v724 = vadd.f32 0.0, %v723
  %v725 = vpop.f32.mrb[0].mxu0
  %v726 = vpop.f32.mrb[0].mxu0
  %v727 = vadd.f32 0.0, %v726
  %v728 = vpop.f32.mrb[0].mxu0
  %729 = vmatprep.mubr.bf16.mxu0 %v202
  %730 = vmatmul.mubr.bf16.gmra.mrb[0].mxu0 %v201
  %v731 = vpop.f32.mrb[0].mxu0
  %v732 = vadd.f32 0.0, %v731
  %v733 = vpop.f32.mrb[0].mxu0
  %v734 = vpop.f32.mrb[0].mxu0
  %v735 = vadd.f32 0.0, %v734
  %v736 = vpop.f32.mrb[0].mxu0
  %737 = vmatprep.mubr.bf16.mxu0 %v206
  %738 = vmatmul.mubr.bf16.gmra.mrb[0].mxu0 %v205
  %v739 = vpop.f32.mrb[0].mxu0
  %v740 = vadd.f32 0.0, %v739
  %v741 = vpop.f32.mrb[0].mxu0
  %v742 = vpop.f32.mrb[0].mxu0
  %v743 = vadd.f32 0.0, %v742
  %v744 = vpop.f32.mrb[0].mxu0
  %745 = vmatprep.mubr.bf16.mxu0 %v210
  %746 = vmatmul.mubr.bf16.gmra.mrb[0].mxu0 %v209
  %v747 = vpop.f32.mrb[0].mxu0
  %v748 = vadd.f32 0.0, %v747
  %v749 = vpop.f32.mrb[0].mxu0
  %v750 = vpop.f32.mrb[0].mxu0
  %v751 = vadd.f32 0.0, %v750
  %v752 = vpop.f32.mrb[0].mxu0
  %753 = vmatprep.mubr.bf16.mxu0 %v214
  %754 = vmatmul.mubr.bf16.gmra.mrb[0].mxu0 %v213
  %v755 = vpop.f32.mrb[0].mxu0
  %v756 = vadd.f32 0.0, %v755
  %v757 = vpop.f32.mrb[0].mxu0
  %v758 = vpop.f32.mrb[0].mxu0
  %v759 = vadd.f32 0.0, %v758
  %v760 = vpop.f32.mrb[0].mxu0
  %761 = vmatprep.mubr.bf16.mxu0 %v218
  %762 = vmatmul.mubr.bf16.gmra.mrb[0].mxu0 %v217
  %v763 = vpop.f32.mrb[0].mxu0
  %v764 = vadd.f32 0.0, %v763
  %v765 = vpop.f32.mrb[0].mxu0
  %v766 = vpop.f32.mrb[0].mxu0
  %v767 = vadd.f32 0.0, %v766
  %v768 = vpop.f32.mrb[0].mxu0
  %769 = vmatprep.mubr.bf16.mxu0 %v222
  %770 = vmatmul.mubr.bf16.gmra.mrb[0].mxu0 %v221
  %v771 = vpop.f32.mrb[0].mxu0
  %v772 = vadd.f32 0.0, %v771
  %v773 = vpop.f32.mrb[0].mxu0
  %v774 = vpop.f32.mrb[0].mxu0
  %v775 = vadd.f32 0.0, %v774
  %v776 = vpop.f32.mrb[0].mxu0
  %777 = vmatprep.mubr.bf16.mxu0 %v226
  %778 = vmatmul.mubr.bf16.gmra.mrb[0].mxu0 %v225
  %v779 = vpop.f32.mrb[0].mxu0
  %v780 = vadd.f32 0.0, %v779
  %v781 = vpop.f32.mrb[0].mxu0
  %v782 = vpop.f32.mrb[0].mxu0
  %v783 = vadd.f32 0.0, %v782
  %v784 = vpop.f32.mrb[0].mxu0
  %785 = vmatprep.mubr.bf16.mxu0 %v230
  %786 = vmatmul.mubr.bf16.gmra.mrb[0].mxu0 %v229
  %v787 = vpop.f32.mrb[0].mxu0
  %v788 = vadd.f32 0.0, %v787
  %v789 = vpop.f32.mrb[0].mxu0
  %v790 = vpop.f32.mrb[0].mxu0
  %v791 = vadd.f32 0.0, %v790
  %v792 = vpop.f32.mrb[0].mxu0
  %793 = vmatprep.mubr.bf16.mxu0 %v234
  %794 = vmatmul.mubr.bf16.gmra.mrb[0].mxu0 %v233
  %v795 = vpop.f32.mrb[0].mxu0
  %v796 = vadd.f32 0.0, %v795
  %v797 = vpop.f32.mrb[0].mxu0
  %v798 = vpop.f32.mrb[0].mxu0
  %v799 = vadd.f32 0.0, %v798
  %v800 = vpop.f32.mrb[0].mxu0
  %801 = vmatprep.mubr.bf16.mxu0 %v238
  %802 = vmatmul.mubr.bf16.gmra.mrb[0].mxu0 %v237
  %v803 = vpop.f32.mrb[0].mxu0
  %v804 = vadd.f32 0.0, %v803
  %v805 = vpop.f32.mrb[0].mxu0
  %v806 = vpop.f32.mrb[0].mxu0
  %v807 = vadd.f32 0.0, %v806
  %v808 = vpop.f32.mrb[0].mxu0
  %809 = vmatprep.mubr.bf16.mxu0 %v242
  %810 = vmatmul.mubr.bf16.gmra.mrb[0].mxu0 %v241
  %v811 = vpop.f32.mrb[0].mxu0
  %v812 = vadd.f32 0.0, %v811
  %v813 = vpop.f32.mrb[0].mxu0
  %v814 = vpop.f32.mrb[0].mxu0
  %v815 = vadd.f32 0.0, %v814
  %v816 = vpop.f32.mrb[0].mxu0
  %817 = vmatprep.mubr.bf16.mxu0 %v246
  %818 = vmatmul.mubr.bf16.gmra.mrb[0].mxu0 %v245
  %v819 = vpop.f32.mrb[0].mxu0
  %v820 = vadd.f32 0.0, %v819
  %v821 = vpop.f32.mrb[0].mxu0
  %v822 = vpop.f32.mrb[0].mxu0
  %v823 = vadd.f32 0.0, %v822
  %v824 = vpop.f32.mrb[0].mxu0
  %825 = vmatprep.mubr.bf16.mxu0 %v250
  %826 = vmatmul.mubr.bf16.gmra.mrb[0].mxu0 %v249
  %v827 = vpop.f32.mrb[0].mxu0
  %v828 = vadd.f32 0.0, %v827
  %v829 = vpop.f32.mrb[0].mxu0
  %v830 = vpop.f32.mrb[0].mxu0
  %v831 = vadd.f32 0.0, %v830
  %v832 = vpop.f32.mrb[0].mxu0
  %833 = vmatprep.mubr.bf16.mxu0 %v254
  %834 = vmatmul.mubr.bf16.gmra.mrb[0].mxu0 %v253
  %v835 = vpop.f32.mrb[0].mxu0
  %v836 = vadd.f32 0.0, %v835
  %v837 = vpop.f32.mrb[0].mxu0
  %v838 = vpop.f32.mrb[0].mxu0
  %v839 = vadd.f32 0.0, %v838
  %v840 = vpop.f32.mrb[0].mxu0
  %841 = vmatprep.mubr.bf16.mxu0 %v258
  %842 = vmatmul.mubr.bf16.gmra.mrb[0].mxu0 %v257
  %v843 = vpop.f32.mrb[0].mxu0
  %v844 = vadd.f32 0.0, %v843
  %v845 = vpop.f32.mrb[0].mxu0
  %v846 = vpop.f32.mrb[0].mxu0
  %v847 = vadd.f32 0.0, %v846
  %v848 = vpop.f32.mrb[0].mxu0
  %849 = vmatprep.mubr.bf16.mxu0 %v262
  %850 = vmatmul.mubr.bf16.gmra.mrb[0].mxu0 %v261
  %v851 = vpop.f32.mrb[0].mxu0
  %v852 = vadd.f32 0.0, %v851
  %v853 = vpop.f32.mrb[0].mxu0
  %v854 = vpop.f32.mrb[0].mxu0
  %v855 = vadd.f32 0.0, %v854
  %v856 = vpop.f32.mrb[0].mxu0
  %857 = vmatprep.mubr.bf16.mxu0 %v266
  %858 = vmatmul.mubr.bf16.gmra.mrb[0].mxu0 %v265
  %v859 = vpop.f32.mrb[0].mxu0
  %v860 = vadd.f32 0.0, %v859
  %v861 = vpop.f32.mrb[0].mxu0
  %v862 = vpop.f32.mrb[0].mxu0
  %v863 = vadd.f32 0.0, %v862
  %v864 = vpop.f32.mrb[0].mxu0
  %865 = vmatprep.mubr.bf16.mxu0 %v270
  %866 = vmatmul.mubr.bf16.gmra.mrb[0].mxu0 %v269
  %v867 = vpop.f32.mrb[0].mxu0
  %v868 = vadd.f32 0.0, %v867
  %v869 = vpop.f32.mrb[0].mxu0
  %v870 = vpop.f32.mrb[0].mxu0
  %v871 = vadd.f32 0.0, %v870
  %v872 = vpop.f32.mrb[0].mxu0
  %873 = vmatprep.mubr.bf16.mxu0 %v274
  %874 = vmatmul.mubr.bf16.gmra.mrb[0].mxu0 %v273
  %v875 = vpop.f32.mrb[0].mxu0
  %v876 = vadd.f32 0.0, %v875
  %v877 = vpop.f32.mrb[0].mxu0
  %v878 = vpop.f32.mrb[0].mxu0
  %v879 = vadd.f32 0.0, %v878
  %v880 = vpop.f32.mrb[0].mxu0
  %881 = vmatprep.mubr.bf16.mxu0 %v278
  %882 = vmatmul.mubr.bf16.gmra.mrb[0].mxu0 %v277
  %v883 = vpop.f32.mrb[0].mxu0
  %v884 = vadd.f32 0.0, %v883
  %v885 = vpop.f32.mrb[0].mxu0
  %v886 = vpop.f32.mrb[0].mxu0
  %v887 = vadd.f32 0.0, %v886
  %v888 = vpop.f32.mrb[0].mxu0
  %889 = vdwg.mxu0
  %890 = vmatprep.subr.bf16.mxu0 0
  %891 = vmatpush1.bf16.msra.mxu0 %v553
  %892 = vmatprep.subr.bf16.mxu0 0
  %893 = vmatpush1.bf16.msra.mxu0 %v554
  %894 = vmatprep.subr.bf16.mxu0 0
  %895 = vmatpush1.bf16.msra.mxu0 %v555
  %896 = vmatprep.subr.bf16.mxu0 0
  %897 = vmatpush1.bf16.msra.mxu0 %v556
  %898 = vmatprep.subr.bf16.mxu0 0
  %899 = vmatpush1.bf16.msra.mxu0 %v557
  %900 = vmatprep.subr.bf16.mxu0 0
  %901 = vmatpush1.bf16.msra.mxu0 %v558
  %902 = vmatprep.subr.bf16.mxu0 0
  %903 = vmatpush1.bf16.msra.mxu0 %v559
  %904 = vmatprep.subr.bf16.mxu0 0
  %905 = vmatpush1.bf16.msra.mxu0 %v560
  %906 = vmatprep.subr.bf16.mxu0 0
  %907 = vmatpush1.bf16.msra.mxu0 %v561
  %908 = vmatprep.subr.bf16.mxu0 0
  %909 = vmatpush1.bf16.msra.mxu0 %v562
  %910 = vmatprep.subr.bf16.mxu0 0
  %911 = vmatpush1.bf16.msra.mxu0 %v563
  %912 = vmatprep.subr.bf16.mxu0 0
  %913 = vmatpush1.bf16.msra.mxu0 %v564
  %914 = vmatprep.subr.bf16.mxu0 0
  %915 = vmatpush1.bf16.msra.mxu0 %v565
  %916 = vmatprep.subr.bf16.mxu0 0
  %917 = vmatpush1.bf16.msra.mxu0 %v566
  %918 = vmatprep.subr.bf16.mxu0 0
  %919 = vmatpush1.bf16.msra.mxu0 %v567
  %920 = vmatprep.subr.bf16.mxu0 0
  %921 = vmatpush1.bf16.msra.mxu0 %v568
  %922 = vmatprep.mubr.bf16.mxu0 %v156
  %923 = vmatmul.mubr.bf16.gmra.mrb[0].mxu0 %v155
  %v924 = vpop.f32.mrb[0].mxu0
  %v925 = vadd.f32 %v636, %v924
  %v926 = vpop.f32.mrb[0].mxu0
  %v927 = vpop.f32.mrb[0].mxu0
  %v928 = vadd.f32 %v639, %v927
  %v929 = vpop.f32.mrb[0].mxu0
  %930 = vmatprep.mubr.bf16.mxu0 %v160
  %931 = vmatmul.mubr.bf16.gmra.mrb[0].mxu0 %v159
  %v932 = vpop.f32.mrb[0].mxu0
  %v933 = vadd.f32 %v644, %v932
  %v934 = vpop.f32.mrb[0].mxu0
  %v935 = vpop.f32.mrb[0].mxu0
  %v936 = vadd.f32 %v647, %v935
  %v937 = vpop.f32.mrb[0].mxu0
  %938 = vmatprep.mubr.bf16.mxu0 %v164
  %939 = vmatmul.mubr.bf16.gmra.mrb[0].mxu0 %v163
  %v940 = vpop.f32.mrb[0].mxu0
  %v941 = vadd.f32 %v652, %v940
  %v942 = vpop.f32.mrb[0].mxu0
  %v943 = vpop.f32.mrb[0].mxu0
  %v944 = vadd.f32 %v655, %v943
  %v945 = vpop.f32.mrb[0].mxu0
  %946 = vmatprep.mubr.bf16.mxu0 %v168
  %947 = vmatmul.mubr.bf16.gmra.mrb[0].mxu0 %v167
  %v948 = vpop.f32.mrb[0].mxu0
  %v949 = vadd.f32 %v660, %v948
  %v950 = vpop.f32.mrb[0].mxu0
  %v951 = vpop.f32.mrb[0].mxu0
  %v952 = vadd.f32 %v663, %v951
  %v953 = vpop.f32.mrb[0].mxu0
  %954 = vmatprep.mubr.bf16.mxu0 %v172
  %955 = vmatmul.mubr.bf16.gmra.mrb[0].mxu0 %v171
  %v956 = vpop.f32.mrb[0].mxu0
  %v957 = vadd.f32 %v668, %v956
  %v958 = vpop.f32.mrb[0].mxu0
  %v959 = vpop.f32.mrb[0].mxu0
  %v960 = vadd.f32 %v671, %v959
  %v961 = vpop.f32.mrb[0].mxu0
  %962 = vmatprep.mubr.bf16.mxu0 %v176
  %963 = vmatmul.mubr.bf16.gmra.mrb[0].mxu0 %v175
  %v964 = vpop.f32.mrb[0].mxu0
  %v965 = vadd.f32 %v676, %v964
  %v966 = vpop.f32.mrb[0].mxu0
  %v967 = vpop.f32.mrb[0].mxu0
  %v968 = vadd.f32 %v679, %v967
  %v969 = vpop.f32.mrb[0].mxu0
  %970 = vmatprep.mubr.bf16.mxu0 %v180
  %971 = vmatmul.mubr.bf16.gmra.mrb[0].mxu0 %v179
  %v972 = vpop.f32.mrb[0].mxu0
  %v973 = vadd.f32 %v684, %v972
  %v974 = vpop.f32.mrb[0].mxu0
  %v975 = vpop.f32.mrb[0].mxu0
  %v976 = vadd.f32 %v687, %v975
  %v977 = vpop.f32.mrb[0].mxu0
  %978 = vmatprep.mubr.bf16.mxu0 %v184
  %979 = vmatmul.mubr.bf16.gmra.mrb[0].mxu0 %v183
  %v980 = vpop.f32.mrb[0].mxu0
  %v981 = vadd.f32 %v692, %v980
  %v982 = vpop.f32.mrb[0].mxu0
  %v983 = vpop.f32.mrb[0].mxu0
  %v984 = vadd.f32 %v695, %v983
  %v985 = vpop.f32.mrb[0].mxu0
  %986 = vmatprep.mubr.bf16.mxu0 %v188
  %987 = vmatmul.mubr.bf16.gmra.mrb[0].mxu0 %v187
  %v988 = vpop.f32.mrb[0].mxu0
  %v989 = vadd.f32 %v700, %v988
  %v990 = vpop.f32.mrb[0].mxu0
  %v991 = vpop.f32.mrb[0].mxu0
  %v992 = vadd.f32 %v703, %v991
  %v993 = vpop.f32.mrb[0].mxu0
  %994 = vmatprep.mubr.bf16.mxu0 %v192
  %995 = vmatmul.mubr.bf16.gmra.mrb[0].mxu0 %v191
  %v996 = vpop.f32.mrb[0].mxu0
  %v997 = vadd.f32 %v708, %v996
  %v998 = vpop.f32.mrb[0].mxu0
  %v999 = vpop.f32.mrb[0].mxu0
  %v1000 = vadd.f32 %v711, %v999
  %v1001 = vpop.f32.mrb[0].mxu0
  %1002 = vmatprep.mubr.bf16.mxu0 %v196
  %1003 = vmatmul.mubr.bf16.gmra.mrb[0].mxu0 %v195
  %v1004 = vpop.f32.mrb[0].mxu0
  %v1005 = vadd.f32 %v716, %v1004
  %v1006 = vpop.f32.mrb[0].mxu0
  %v1007 = vpop.f32.mrb[0].mxu0
  %v1008 = vadd.f32 %v719, %v1007
  %v1009 = vpop.f32.mrb[0].mxu0
  %1010 = vmatprep.mubr.bf16.mxu0 %v200
  %1011 = vmatmul.mubr.bf16.gmra.mrb[0].mxu0 %v199
  %v1012 = vpop.f32.mrb[0].mxu0
  %v1013 = vadd.f32 %v724, %v1012
  %v1014 = vpop.f32.mrb[0].mxu0
  %v1015 = vpop.f32.mrb[0].mxu0
  %v1016 = vadd.f32 %v727, %v1015
  %v1017 = vpop.f32.mrb[0].mxu0
  %1018 = vmatprep.mubr.bf16.mxu0 %v204
  %1019 = vmatmul.mubr.bf16.gmra.mrb[0].mxu0 %v203
  %v1020 = vpop.f32.mrb[0].mxu0
  %v1021 = vadd.f32 %v732, %v1020
  %v1022 = vpop.f32.mrb[0].mxu0
  %v1023 = vpop.f32.mrb[0].mxu0
  %v1024 = vadd.f32 %v735, %v1023
  %v1025 = vpop.f32.mrb[0].mxu0
  %1026 = vmatprep.mubr.bf16.mxu0 %v208
  %1027 = vmatmul.mubr.bf16.gmra.mrb[0].mxu0 %v207
  %v1028 = vpop.f32.mrb[0].mxu0
  %v1029 = vadd.f32 %v740, %v1028
  %v1030 = vpop.f32.mrb[0].mxu0
  %v1031 = vpop.f32.mrb[0].mxu0
  %v1032 = vadd.f32 %v743, %v1031
  %v1033 = vpop.f32.mrb[0].mxu0
  %1034 = vmatprep.mubr.bf16.mxu0 %v212
  %1035 = vmatmul.mubr.bf16.gmra.mrb[0].mxu0 %v211
  %v1036 = vpop.f32.mrb[0].mxu0
  %v1037 = vadd.f32 %v748, %v1036
  %v1038 = vpop.f32.mrb[0].mxu0
  %v1039 = vpop.f32.mrb[0].mxu0
  %v1040 = vadd.f32 %v751, %v1039
  %v1041 = vpop.f32.mrb[0].mxu0
  %1042 = vmatprep.mubr.bf16.mxu0 %v216
  %1043 = vmatmul.mubr.bf16.gmra.mrb[0].mxu0 %v215
  %v1044 = vpop.f32.mrb[0].mxu0
  %v1045 = vadd.f32 %v756, %v1044
  %v1046 = vpop.f32.mrb[0].mxu0
  %v1047 = vpop.f32.mrb[0].mxu0
  %v1048 = vadd.f32 %v759, %v1047
  %v1049 = vpop.f32.mrb[0].mxu0
  %1050 = vmatprep.mubr.bf16.mxu0 %v220
  %1051 = vmatmul.mubr.bf16.gmra.mrb[0].mxu0 %v219
  %v1052 = vpop.f32.mrb[0].mxu0
  %v1053 = vadd.f32 %v764, %v1052
  %v1054 = vpop.f32.mrb[0].mxu0
  %v1055 = vpop.f32.mrb[0].mxu0
  %v1056 = vadd.f32 %v767, %v1055
  %v1057 = vpop.f32.mrb[0].mxu0
  %1058 = vmatprep.mubr.bf16.mxu0 %v224
  %1059 = vmatmul.mubr.bf16.gmra.mrb[0].mxu0 %v223
  %v1060 = vpop.f32.mrb[0].mxu0
  %v1061 = vadd.f32 %v772, %v1060
  %v1062 = vpop.f32.mrb[0].mxu0
  %v1063 = vpop.f32.mrb[0].mxu0
  %v1064 = vadd.f32 %v775, %v1063
  %v1065 = vpop.f32.mrb[0].mxu0
  %1066 = vmatprep.mubr.bf16.mxu0 %v228
  %1067 = vmatmul.mubr.bf16.gmra.mrb[0].mxu0 %v227
  %v1068 = vpop.f32.mrb[0].mxu0
  %v1069 = vadd.f32 %v780, %v1068
  %v1070 = vpop.f32.mrb[0].mxu0
  %v1071 = vpop.f32.mrb[0].mxu0
  %v1072 = vadd.f32 %v783, %v1071
  %v1073 = vpop.f32.mrb[0].mxu0
  %1074 = vmatprep.mubr.bf16.mxu0 %v232
  %1075 = vmatmul.mubr.bf16.gmra.mrb[0].mxu0 %v231
  %v1076 = vpop.f32.mrb[0].mxu0
  %v1077 = vadd.f32 %v788, %v1076
  %v1078 = vpop.f32.mrb[0].mxu0
  %v1079 = vpop.f32.mrb[0].mxu0
  %v1080 = vadd.f32 %v791, %v1079
  %v1081 = vpop.f32.mrb[0].mxu0
  %1082 = vmatprep.mubr.bf16.mxu0 %v236
  %1083 = vmatmul.mubr.bf16.gmra.mrb[0].mxu0 %v235
  %v1084 = vpop.f32.mrb[0].mxu0
  %v1085 = vadd.f32 %v796, %v1084
  %v1086 = vpop.f32.mrb[0].mxu0
  %v1087 = vpop.f32.mrb[0].mxu0
  %v1088 = vadd.f32 %v799, %v1087
  %v1089 = vpop.f32.mrb[0].mxu0
  %1090 = vmatprep.mubr.bf16.mxu0 %v240
  %1091 = vmatmul.mubr.bf16.gmra.mrb[0].mxu0 %v239
  %v1092 = vpop.f32.mrb[0].mxu0
  %v1093 = vadd.f32 %v804, %v1092
  %v1094 = vpop.f32.mrb[0].mxu0
  %v1095 = vpop.f32.mrb[0].mxu0
  %v1096 = vadd.f32 %v807, %v1095
  %v1097 = vpop.f32.mrb[0].mxu0
  %1098 = vmatprep.mubr.bf16.mxu0 %v244
  %1099 = vmatmul.mubr.bf16.gmra.mrb[0].mxu0 %v243
  %v1100 = vpop.f32.mrb[0].mxu0
  %v1101 = vadd.f32 %v812, %v1100
  %v1102 = vpop.f32.mrb[0].mxu0
  %v1103 = vpop.f32.mrb[0].mxu0
  %v1104 = vadd.f32 %v815, %v1103
  %v1105 = vpop.f32.mrb[0].mxu0
  %1106 = vmatprep.mubr.bf16.mxu0 %v248
  %1107 = vmatmul.mubr.bf16.gmra.mrb[0].mxu0 %v247
  %v1108 = vpop.f32.mrb[0].mxu0
  %v1109 = vadd.f32 %v820, %v1108
  %v1110 = vpop.f32.mrb[0].mxu0
  %v1111 = vpop.f32.mrb[0].mxu0
  %v1112 = vadd.f32 %v823, %v1111
  %v1113 = vpop.f32.mrb[0].mxu0
  %1114 = vmatprep.mubr.bf16.mxu0 %v252
  %1115 = vmatmul.mubr.bf16.gmra.mrb[0].mxu0 %v251
  %v1116 = vpop.f32.mrb[0].mxu0
  %v1117 = vadd.f32 %v828, %v1116
  %v1118 = vpop.f32.mrb[0].mxu0
  %v1119 = vpop.f32.mrb[0].mxu0
  %v1120 = vadd.f32 %v831, %v1119
  %v1121 = vpop.f32.mrb[0].mxu0
  %1122 = vmatprep.mubr.bf16.mxu0 %v256
  %1123 = vmatmul.mubr.bf16.gmra.mrb[0].mxu0 %v255
  %v1124 = vpop.f32.mrb[0].mxu0
  %v1125 = vadd.f32 %v836, %v1124
  %v1126 = vpop.f32.mrb[0].mxu0
  %v1127 = vpop.f32.mrb[0].mxu0
  %v1128 = vadd.f32 %v839, %v1127
  %v1129 = vpop.f32.mrb[0].mxu0
  %1130 = vmatprep.mubr.bf16.mxu0 %v260
  %1131 = vmatmul.mubr.bf16.gmra.mrb[0].mxu0 %v259
  %v1132 = vpop.f32.mrb[0].mxu0
  %v1133 = vadd.f32 %v844, %v1132
  %v1134 = vpop.f32.mrb[0].mxu0
  %v1135 = vpop.f32.mrb[0].mxu0
  %v1136 = vadd.f32 %v847, %v1135
  %v1137 = vpop.f32.mrb[0].mxu0
  %1138 = vmatprep.mubr.bf16.mxu0 %v264
  %1139 = vmatmul.mubr.bf16.gmra.mrb[0].mxu0 %v263
  %v1140 = vpop.f32.mrb[0].mxu0
  %v1141 = vadd.f32 %v852, %v1140
  %v1142 = vpop.f32.mrb[0].mxu0
  %v1143 = vpop.f32.mrb[0].mxu0
  %v1144 = vadd.f32 %v855, %v1143
  %v1145 = vpop.f32.mrb[0].mxu0
  %1146 = vmatprep.mubr.bf16.mxu0 %v268
  %1147 = vmatmul.mubr.bf16.gmra.mrb[0].mxu0 %v267
  %v1148 = vpop.f32.mrb[0].mxu0
  %v1149 = vadd.f32 %v860, %v1148
  %v1150 = vpop.f32.mrb[0].mxu0
  %v1151 = vpop.f32.mrb[0].mxu0
  %v1152 = vadd.f32 %v863, %v1151
  %v1153 = vpop.f32.mrb[0].mxu0
  %1154 = vmatprep.mubr.bf16.mxu0 %v272
  %1155 = vmatmul.mubr.bf16.gmra.mrb[0].mxu0 %v271
  %v1156 = vpop.f32.mrb[0].mxu0
  %v1157 = vadd.f32 %v868, %v1156
  %v1158 = vpop.f32.mrb[0].mxu0
  %v1159 = vpop.f32.mrb[0].mxu0
  %v1160 = vadd.f32 %v871, %v1159
  %v1161 = vpop.f32.mrb[0].mxu0
  %1162 = vmatprep.mubr.bf16.mxu0 %v276
  %1163 = vmatmul.mubr.bf16.gmra.mrb[0].mxu0 %v275
  %v1164 = vpop.f32.mrb[0].mxu0
  %v1165 = vadd.f32 %v876, %v1164
  %v1166 = vpop.f32.mrb[0].mxu0
  %v1167 = vpop.f32.mrb[0].mxu0
  %v1168 = vadd.f32 %v879, %v1167
  %v1169 = vpop.f32.mrb[0].mxu0
  %1170 = vmatprep.mubr.bf16.mxu0 %v280
  %1171 = vmatmul.mubr.bf16.gmra.mrb[0].mxu0 %v279
  %v1172 = vpop.f32.mrb[0].mxu0
  %v1173 = vadd.f32 %v884, %v1172
  %v1174 = vpop.f32.mrb[0].mxu0
  %v1175 = vpop.f32.mrb[0].mxu0
  %v1176 = vadd.f32 %v887, %v1175
  %v1177 = vpop.f32.mrb[0].mxu0
  %1178 = vdwg.mxu0
  %v1179 = vadd.f32 %v281, %v925
  %v1180 = vadd.f32 %v282, %v928
  %v1181 = vadd.f32 %v283, %v933
  %v1182 = vadd.f32 %v284, %v936
  %v1183 = vadd.f32 %v285, %v941
  %v1184 = vadd.f32 %v286, %v944
  %v1185 = vadd.f32 %v287, %v949
  %v1186 = vadd.f32 %v288, %v952
  %v1187 = vadd.f32 %v289, %v957
  %v1188 = vadd.f32 %v290, %v960
  %v1189 = vadd.f32 %v291, %v965
  %v1190 = vadd.f32 %v292, %v968
  %v1191 = vadd.f32 %v293, %v973
  %v1192 = vadd.f32 %v294, %v976
  %v1193 = vadd.f32 %v295, %v981
  %v1194 = vadd.f32 %v296, %v984
  %v1195 = vadd.f32 %v297, %v989
  %v1196 = vadd.f32 %v298, %v992
  %v1197 = vadd.f32 %v299, %v997
  %v1198 = vadd.f32 %v300, %v1000
  %v1199 = vadd.f32 %v301, %v1005
  %v1200 = vadd.f32 %v302, %v1008
  %v1201 = vadd.f32 %v303, %v1013
  %v1202 = vadd.f32 %v304, %v1016
  %v1203 = vadd.f32 %v305, %v1021
  %v1204 = vadd.f32 %v306, %v1024
  %v1205 = vadd.f32 %v307, %v1029
  %v1206 = vadd.f32 %v308, %v1032
  %v1207 = vadd.f32 %v309, %v1037
  %v1208 = vadd.f32 %v310, %v1040
  %v1209 = vadd.f32 %v311, %v1045
  %v1210 = vadd.f32 %v312, %v1048
  %v1211 = vadd.f32 %v313, %v1053
  %v1212 = vadd.f32 %v314, %v1056
  %v1213 = vadd.f32 %v315, %v1061
  %v1214 = vadd.f32 %v316, %v1064
  %v1215 = vadd.f32 %v317, %v1069
  %v1216 = vadd.f32 %v318, %v1072
  %v1217 = vadd.f32 %v319, %v1077
  %v1218 = vadd.f32 %v320, %v1080
  %v1219 = vadd.f32 %v321, %v1085
  %v1220 = vadd.f32 %v322, %v1088
  %v1221 = vadd.f32 %v323, %v1093
  %v1222 = vadd.f32 %v324, %v1096
  %v1223 = vadd.f32 %v325, %v1101
  %v1224 = vadd.f32 %v326, %v1104
  %v1225 = vadd.f32 %v327, %v1109
  %v1226 = vadd.f32 %v328, %v1112
  %v1227 = vadd.f32 %v329, %v1117
  %v1228 = vadd.f32 %v330, %v1120
  %v1229 = vadd.f32 %v331, %v1125
  %v1230 = vadd.f32 %v332, %v1128
  %v1231 = vadd.f32 %v333, %v1133
  %v1232 = vadd.f32 %v334, %v1136
  %v1233 = vadd.f32 %v335, %v1141
  %v1234 = vadd.f32 %v336, %v1144
  %v1235 = vadd.f32 %v337, %v1149
  %v1236 = vadd.f32 %v338, %v1152
  %v1237 = vadd.f32 %v339, %v1157
  %v1238 = vadd.f32 %v340, %v1160
  %v1239 = vadd.f32 %v341, %v1165
  %v1240 = vadd.f32 %v342, %v1168
  %v1241 = vadd.f32 %v343, %v1173
  %v1242 = vadd.f32 %v344, %v1176
  %1243 = vst [vmem:[#allocation2] sm:$0xff] %v1179
  %1244 = vst [vmem:[#allocation2 + $0x8] sm:$0xff] %v1180
  %1245 = vst [vmem:[#allocation2 + $0x10] sm:$0xff] %v1181
  %1246 = vst [vmem:[#allocation2 + $0x18] sm:$0xff] %v1182
  %1247 = vst [vmem:[#allocation2 + $0x20] sm:$0xff] %v1183
  %1248 = vst [vmem:[#allocation2 + $0x28] sm:$0xff] %v1184
  %1249 = vst [vmem:[#allocation2 + $0x30] sm:$0xff] %v1185
  %1250 = vst [vmem:[#allocation2 + $0x38] sm:$0xff] %v1186
  %1251 = vst [vmem:[#allocation2 + $0x40] sm:$0xff] %v1187
  %1252 = vst [vmem:[#allocation2 + $0x48] sm:$0xff] %v1188
  %1253 = vst [vmem:[#allocation2 + $0x50] sm:$0xff] %v1189
  %1254 = vst [vmem:[#allocation2 + $0x58] sm:$0xff] %v1190
  %1255 = vst [vmem:[#allocation2 + $0x60] sm:$0xff] %v1191
  %1256 = vst [vmem:[#allocation2 + $0x68] sm:$0xff] %v1192
  %1257 = vst [vmem:[#allocation2 + $0x70] sm:$0xff] %v1193
  %1258 = vst [vmem:[#allocation2 + $0x78] sm:$0xff] %v1194
  %1259 = vst [vmem:[#allocation2 + $0x80] sm:$0xff] %v1195
  %1260 = vst [vmem:[#allocation2 + $0x88] sm:$0xff] %v1196
  %1261 = vst [vmem:[#allocation2 + $0x90] sm:$0xff] %v1197
  %1262 = vst [vmem:[#allocation2 + $0x98] sm:$0xff] %v1198
  %1263 = vst [vmem:[#allocation2 + $0xa0] sm:$0xff] %v1199
  %1264 = vst [vmem:[#allocation2 + $0xa8] sm:$0xff] %v1200
  %1265 = vst [vmem:[#allocation2 + $0xb0] sm:$0xff] %v1201
  %1266 = vst [vmem:[#allocation2 + $0xb8] sm:$0xff] %v1202
  %1267 = vst [vmem:[#allocation2 + $0xc0] sm:$0xff] %v1203
  %1268 = vst [vmem:[#allocation2 + $0xc8] sm:$0xff] %v1204
  %1269 = vst [vmem:[#allocation2 + $0xd0] sm:$0xff] %v1205
  %1270 = vst [vmem:[#allocation2 + $0xd8] sm:$0xff] %v1206
  %1271 = vst [vmem:[#allocation2 + $0xe0] sm:$0xff] %v1207
  %1272 = vst [vmem:[#allocation2 + $0xe8] sm:$0xff] %v1208
  %1273 = vst [vmem:[#allocation2 + $0xf0] sm:$0xff] %v1209
  %1274 = vst [vmem:[#allocation2 + $0xf8] sm:$0xff] %v1210
  %1275 = vst [vmem:[#allocation2 + $0x100] sm:$0xff] %v1211
  %1276 = vst [vmem:[#allocation2 + $0x108] sm:$0xff] %v1212
  %1277 = vst [vmem:[#allocation2 + $0x110] sm:$0xff] %v1213
  %1278 = vst [vmem:[#allocation2 + $0x118] sm:$0xff] %v1214
  %1279 = vst [vmem:[#allocation2 + $0x120] sm:$0xff] %v1215
  %1280 = vst [vmem:[#allocation2 + $0x128] sm:$0xff] %v1216
  %1281 = vst [vmem:[#allocation2 + $0x130] sm:$0xff] %v1217
  %1282 = vst [vmem:[#allocation2 + $0x138] sm:$0xff] %v1218
  %1283 = vst [vmem:[#allocation2 + $0x140] sm:$0xff] %v1219
  %1284 = vst [vmem:[#allocation2 + $0x148] sm:$0xff] %v1220
  %1285 = vst [vmem:[#allocation2 + $0x150] sm:$0xff] %v1221
  %1286 = vst [vmem:[#allocation2 + $0x158] sm:$0xff] %v1222
  %1287 = vst [vmem:[#allocation2 + $0x160] sm:$0xff] %v1223
  %1288 = vst [vmem:[#allocation2 + $0x168] sm:$0xff] %v1224
  %1289 = vst [vmem:[#allocation2 + $0x170] sm:$0xff] %v1225
  %1290 = vst [vmem:[#allocation2 + $0x178] sm:$0xff] %v1226
  %1291 = vst [vmem:[#allocation2 + $0x180] sm:$0xff] %v1227
  %1292 = vst [vmem:[#allocation2 + $0x188] sm:$0xff] %v1228
  %1293 = vst [vmem:[#allocation2 + $0x190] sm:$0xff] %v1229
  %1294 = vst [vmem:[#allocation2 + $0x198] sm:$0xff] %v1230
  %1295 = vst [vmem:[#allocation2 + $0x1a0] sm:$0xff] %v1231
  %1296 = vst [vmem:[#allocation2 + $0x1a8] sm:$0xff] %v1232
  %1297 = vst [vmem:[#allocation2 + $0x1b0] sm:$0xff] %v1233
  %1298 = vst [vmem:[#allocation2 + $0x1b8] sm:$0xff] %v1234
  %1299 = vst [vmem:[#allocation2 + $0x1c0] sm:$0xff] %v1235
  %1300 = vst [vmem:[#allocation2 + $0x1c8] sm:$0xff] %v1236
  %1301 = vst [vmem:[#allocation2 + $0x1d0] sm:$0xff] %v1237
  %1302 = vst [vmem:[#allocation2 + $0x1d8] sm:$0xff] %v1238
  %1303 = vst [vmem:[#allocation2 + $0x1e0] sm:$0xff] %v1239
  %1304 = vst [vmem:[#allocation2 + $0x1e8] sm:$0xff] %v1240
  %1305 = vst [vmem:[#allocation2 + $0x1f0] sm:$0xff] %v1241
  %1306 = vst [vmem:[#allocation2 + $0x1f8] sm:$0xff] %v1242
  // Predicated region
  $region26: #{td_rumor_gcn_forward.5} parent=0 // pred_check
    %p1307 = pneg %p21
  $region27: #{td_rumor_gcn_forward.5} parent=0 // pred_check_branch
    %1309 = sbr.rel (%p1307) target = $region29
  $region28: #{td_rumor_gcn_forward.5} parent=0 // pred_region
    %v1310 = vld [vmem:[#allocation2] sm:$0xff]
    %v1311 = vld [vmem:[#allocation2 + $0x8] sm:$0xff]
    %v1312 = vld [vmem:[#allocation2 + $0x10] sm:$0xff]
    %v1313 = vld [vmem:[#allocation2 + $0x18] sm:$0xff]
    %v1314 = vld [vmem:[#allocation2 + $0x20] sm:$0xff]
    %v1315 = vld [vmem:[#allocation2 + $0x28] sm:$0xff]
    %v1316 = vld [vmem:[#allocation2 + $0x30] sm:$0xff]
    %v1317 = vld [vmem:[#allocation2 + $0x38] sm:$0xff]
    %v1318 = vld [vmem:[#allocation2 + $0x40] sm:$0xff]
    %v1319 = vld [vmem:[#allocation2 + $0x48] sm:$0xff]
    %v1320 = vld [vmem:[#allocation2 + $0x50] sm:$0xff]
    %v1321 = vld [vmem:[#allocation2 + $0x58] sm:$0xff]
    %v1322 = vld [vmem:[#allocation2 + $0x60] sm:$0xff]
    %v1323 = vld [vmem:[#allocation2 + $0x68] sm:$0xff]
    %v1324 = vld [vmem:[#allocation2 + $0x70] sm:$0xff]
    %v1325 = vld [vmem:[#allocation2 + $0x78] sm:$0xff]
    %v1326 = vld [vmem:[#allocation2 + $0x80] sm:$0xff]
    %v1327 = vld [vmem:[#allocation2 + $0x88] sm:$0xff]
    %v1328 = vld [vmem:[#allocation2 + $0x90] sm:$0xff]
    %v1329 = vld [vmem:[#allocation2 + $0x98] sm:$0xff]
    %v1330 = vld [vmem:[#allocation2 + $0xa0] sm:$0xff]
    %v1331 = vld [vmem:[#allocation2 + $0xa8] sm:$0xff]
    %v1332 = vld [vmem:[#allocation2 + $0xb0] sm:$0xff]
    %v1333 = vld [vmem:[#allocation2 + $0xb8] sm:$0xff]
    %v1334 = vld [vmem:[#allocation2 + $0xc0] sm:$0xff]
    %v1335 = vld [vmem:[#allocation2 + $0xc8] sm:$0xff]
    %v1336 = vld [vmem:[#allocation2 + $0xd0] sm:$0xff]
    %v1337 = vld [vmem:[#allocation2 + $0xd8] sm:$0xff]
    %v1338 = vld [vmem:[#allocation2 + $0xe0] sm:$0xff]
    %v1339 = vld [vmem:[#allocation2 + $0xe8] sm:$0xff]
    %v1340 = vld [vmem:[#allocation2 + $0xf0] sm:$0xff]
    %v1341 = vld [vmem:[#allocation2 + $0xf8] sm:$0xff]
    %v1342 = vld [vmem:[#allocation2 + $0x100] sm:$0xff]
    %v1343 = vld [vmem:[#allocation2 + $0x108] sm:$0xff]
    %v1344 = vld [vmem:[#allocation2 + $0x110] sm:$0xff]
    %v1345 = vld [vmem:[#allocation2 + $0x118] sm:$0xff]
    %v1346 = vld [vmem:[#allocation2 + $0x120] sm:$0xff]
    %v1347 = vld [vmem:[#allocation2 + $0x128] sm:$0xff]
    %v1348 = vld [vmem:[#allocation2 + $0x130] sm:$0xff]
    %v1349 = vld [vmem:[#allocation2 + $0x138] sm:$0xff]
    %v1350 = vld [vmem:[#allocation2 + $0x140] sm:$0xff]
    %v1351 = vld [vmem:[#allocation2 + $0x148] sm:$0xff]
    %v1352 = vld [vmem:[#allocation2 + $0x150] sm:$0xff]
    %v1353 = vld [vmem:[#allocation2 + $0x158] sm:$0xff]
    %v1354 = vld [vmem:[#allocation2 + $0x160] sm:$0xff]
    %v1355 = vld [vmem:[#allocation2 + $0x168] sm:$0xff]
    %v1356 = vld [vmem:[#allocation2 + $0x170] sm:$0xff]
    %v1357 = vld [vmem:[#allocation2 + $0x178] sm:$0xff]
    %v1358 = vld [vmem:[#allocation2 + $0x180] sm:$0xff]
    %v1359 = vld [vmem:[#allocation2 + $0x188] sm:$0xff]
    %v1360 = vld [vmem:[#allocation2 + $0x190] sm:$0xff]
    %v1361 = vld [vmem:[#allocation2 + $0x198] sm:$0xff]
    %v1362 = vld [vmem:[#allocation2 + $0x1a0] sm:$0xff]
    %v1363 = vld [vmem:[#allocation2 + $0x1a8] sm:$0xff]
    %v1364 = vld [vmem:[#allocation2 + $0x1b0] sm:$0xff]
    %v1365 = vld [vmem:[#allocation2 + $0x1b8] sm:$0xff]
    %v1366 = vld [vmem:[#allocation2 + $0x1c0] sm:$0xff]
    %v1367 = vld [vmem:[#allocation2 + $0x1c8] sm:$0xff]
    %v1368 = vld [vmem:[#allocation2 + $0x1d0] sm:$0xff]
    %v1369 = vld [vmem:[#allocation2 + $0x1d8] sm:$0xff]
    %v1370 = vld [vmem:[#allocation2 + $0x1e0] sm:$0xff]
    %v1371 = vld [vmem:[#allocation2 + $0x1e8] sm:$0xff]
    %v1372 = vld [vmem:[#allocation2 + $0x1f0] sm:$0xff]
    %v1373 = vld [vmem:[#allocation2 + $0x1f8] sm:$0xff]
    %v1374 = vld [vmem:[%s1] sm:$0xff]
    %v1375 = vld [vmem:[%s1 + $0x8] sm:$0xff]
    %v1376 = vld [vmem:[%s1 + $0x10] sm:$0xff]
    %v1377 = vld [vmem:[%s1 + $0x18] sm:$0xff]
    %v1378 = vld [vmem:[%s1 + $0x20] sm:$0xff]
    %v1379 = vld [vmem:[%s1 + $0x28] sm:$0xff]
    %v1380 = vld [vmem:[%s1 + $0x30] sm:$0xff]
    %v1381 = vld [vmem:[%s1 + $0x38] sm:$0xff]
    %v1382 = vld [vmem:[%s1 + $0x40] sm:$0xff]
    %v1383 = vld [vmem:[%s1 + $0x48] sm:$0xff]
    %v1384 = vld [vmem:[%s1 + $0x50] sm:$0xff]
    %v1385 = vld [vmem:[%s1 + $0x58] sm:$0xff]
    %v1386 = vld [vmem:[%s1 + $0x60] sm:$0xff]
    %v1387 = vld [vmem:[%s1 + $0x68] sm:$0xff]
    %v1388 = vld [vmem:[%s1 + $0x70] sm:$0xff]
    %v1389 = vld [vmem:[%s1 + $0x78] sm:$0xff]
    %v1390 = vld [vmem:[%s1 + $0x80] sm:$0xff]
    %v1391 = vld [vmem:[%s1 + $0x88] sm:$0xff]
    %v1392 = vld [vmem:[%s1 + $0x90] sm:$0xff]
    %v1393 = vld [vmem:[%s1 + $0x98] sm:$0xff]
    %v1394 = vld [vmem:[%s1 + $0xa0] sm:$0xff]
    %v1395 = vld [vmem:[%s1 + $0xa8] sm:$0xff]
    %v1396 = vld [vmem:[%s1 + $0xb0] sm:$0xff]
    %v1397 = vld [vmem:[%s1 + $0xb8] sm:$0xff]
    %v1398 = vld [vmem:[%s1 + $0xc0] sm:$0xff]
    %v1399 = vld [vmem:[%s1 + $0xc8] sm:$0xff]
    %v1400 = vld [vmem:[%s1 + $0xd0] sm:$0xff]
    %v1401 = vld [vmem:[%s1 + $0xd8] sm:$0xff]
    %v1402 = vld [vmem:[%s1 + $0xe0] sm:$0xff]
    %v1403 = vld [vmem:[%s1 + $0xe8] sm:$0xff]
    %v1404 = vld [vmem:[%s1 + $0xf0] sm:$0xff]
    %v1405 = vld [vmem:[%s1 + $0xf8] sm:$0xff]
    %v1406 = vld [vmem:[%s1 + $0x100] sm:$0xff]
    %v1407 = vld [vmem:[%s1 + $0x108] sm:$0xff]
    %v1408 = vld [vmem:[%s1 + $0x110] sm:$0xff]
    %v1409 = vld [vmem:[%s1 + $0x118] sm:$0xff]
    %v1410 = vld [vmem:[%s1 + $0x120] sm:$0xff]
    %v1411 = vld [vmem:[%s1 + $0x128] sm:$0xff]
    %v1412 = vld [vmem:[%s1 + $0x130] sm:$0xff]
    %v1413 = vld [vmem:[%s1 + $0x138] sm:$0xff]
    %v1414 = vld [vmem:[%s1 + $0x140] sm:$0xff]
    %v1415 = vld [vmem:[%s1 + $0x148] sm:$0xff]
    %v1416 = vld [vmem:[%s1 + $0x150] sm:$0xff]
    %v1417 = vld [vmem:[%s1 + $0x158] sm:$0xff]
    %v1418 = vld [vmem:[%s1 + $0x160] sm:$0xff]
    %v1419 = vld [vmem:[%s1 + $0x168] sm:$0xff]
    %v1420 = vld [vmem:[%s1 + $0x170] sm:$0xff]
    %v1421 = vld [vmem:[%s1 + $0x178] sm:$0xff]
    %v1422 = vld [vmem:[%s1 + $0x180] sm:$0xff]
    %v1423 = vld [vmem:[%s1 + $0x188] sm:$0xff]
    %v1424 = vld [vmem:[%s1 + $0x190] sm:$0xff]
    %v1425 = vld [vmem:[%s1 + $0x198] sm:$0xff]
    %v1426 = vld [vmem:[%s1 + $0x1a0] sm:$0xff]
    %v1427 = vld [vmem:[%s1 + $0x1a8] sm:$0xff]
    %v1428 = vld [vmem:[%s1 + $0x1b0] sm:$0xff]
    %v1429 = vld [vmem:[%s1 + $0x1b8] sm:$0xff]
    %v1430 = vld [vmem:[%s1 + $0x1c0] sm:$0xff]
    %v1431 = vld [vmem:[%s1 + $0x1c8] sm:$0xff]
    %v1432 = vld [vmem:[%s1 + $0x1d0] sm:$0xff]
    %v1433 = vld [vmem:[%s1 + $0x1d8] sm:$0xff]
    %v1434 = vld [vmem:[%s1 + $0x1e0] sm:$0xff]
    %v1435 = vld [vmem:[%s1 + $0x1e8] sm:$0xff]
    %v1436 = vld [vmem:[%s1 + $0x1f0] sm:$0xff]
    %v1437 = vld [vmem:[%s1 + $0x1f8] sm:$0xff]
    %1439 = vset.pattern.permute.xlu0 0
    %1440 = vperm.xlu0 %1439, %v1374
    %v1441 = vpop.permute.xlu0 %1440
    %1444 = vset.pattern.permute.xlu0 0
    %1445 = vperm.xlu0 %1444, %v1375
    %v1446 = vpop.permute.xlu0 %1445
    %1449 = vset.pattern.permute.xlu0 0
    %1450 = vperm.xlu0 %1449, %v1376
    %v1451 = vpop.permute.xlu0 %1450
    %1454 = vset.pattern.permute.xlu0 0
    %1455 = vperm.xlu0 %1454, %v1377
    %v1456 = vpop.permute.xlu0 %1455
    %1459 = vset.pattern.permute.xlu0 0
    %1460 = vperm.xlu0 %1459, %v1378
    %v1461 = vpop.permute.xlu0 %1460
    %1464 = vset.pattern.permute.xlu0 0
    %1465 = vperm.xlu0 %1464, %v1379
    %v1466 = vpop.permute.xlu0 %1465
    %1469 = vset.pattern.permute.xlu0 0
    %1470 = vperm.xlu0 %1469, %v1380
    %v1471 = vpop.permute.xlu0 %1470
    %1474 = vset.pattern.permute.xlu0 0
    %1475 = vperm.xlu0 %1474, %v1381
    %v1476 = vpop.permute.xlu0 %1475
    %1479 = vset.pattern.permute.xlu0 0
    %1480 = vperm.xlu0 %1479, %v1382
    %v1481 = vpop.permute.xlu0 %1480
    %1484 = vset.pattern.permute.xlu0 0
    %1485 = vperm.xlu0 %1484, %v1383
    %v1486 = vpop.permute.xlu0 %1485
    %1489 = vset.pattern.permute.xlu0 0
    %1490 = vperm.xlu0 %1489, %v1384
    %v1491 = vpop.permute.xlu0 %1490
    %1494 = vset.pattern.permute.xlu0 0
    %1495 = vperm.xlu0 %1494, %v1385
    %v1496 = vpop.permute.xlu0 %1495
    %1499 = vset.pattern.permute.xlu0 0
    %1500 = vperm.xlu0 %1499, %v1386
    %v1501 = vpop.permute.xlu0 %1500
    %1504 = vset.pattern.permute.xlu0 0
    %1505 = vperm.xlu0 %1504, %v1387
    %v1506 = vpop.permute.xlu0 %1505
    %1509 = vset.pattern.permute.xlu0 0
    %1510 = vperm.xlu0 %1509, %v1388
    %v1511 = vpop.permute.xlu0 %1510
    %1514 = vset.pattern.permute.xlu0 0
    %1515 = vperm.xlu0 %1514, %v1389
    %v1516 = vpop.permute.xlu0 %1515
    %1519 = vset.pattern.permute.xlu0 0
    %1520 = vperm.xlu0 %1519, %v1390
    %v1521 = vpop.permute.xlu0 %1520
    %1524 = vset.pattern.permute.xlu0 0
    %1525 = vperm.xlu0 %1524, %v1391
    %v1526 = vpop.permute.xlu0 %1525
    %1529 = vset.pattern.permute.xlu0 0
    %1530 = vperm.xlu0 %1529, %v1392
    %v1531 = vpop.permute.xlu0 %1530
    %1534 = vset.pattern.permute.xlu0 0
    %1535 = vperm.xlu0 %1534, %v1393
    %v1536 = vpop.permute.xlu0 %1535
    %1539 = vset.pattern.permute.xlu0 0
    %1540 = vperm.xlu0 %1539, %v1394
    %v1541 = vpop.permute.xlu0 %1540
    %1544 = vset.pattern.permute.xlu0 0
    %1545 = vperm.xlu0 %1544, %v1395
    %v1546 = vpop.permute.xlu0 %1545
    %1549 = vset.pattern.permute.xlu0 0
    %1550 = vperm.xlu0 %1549, %v1396
    %v1551 = vpop.permute.xlu0 %1550
    %1554 = vset.pattern.permute.xlu0 0
    %1555 = vperm.xlu0 %1554, %v1397
    %v1556 = vpop.permute.xlu0 %1555
    %1559 = vset.pattern.permute.xlu0 0
    %1560 = vperm.xlu0 %1559, %v1398
    %v1561 = vpop.permute.xlu0 %1560
    %1564 = vset.pattern.permute.xlu0 0
    %1565 = vperm.xlu0 %1564, %v1399
    %v1566 = vpop.permute.xlu0 %1565
    %1569 = vset.pattern.permute.xlu0 0
    %1570 = vperm.xlu0 %1569, %v1400
    %v1571 = vpop.permute.xlu0 %1570
    %1574 = vset.pattern.permute.xlu0 0
    %1575 = vperm.xlu0 %1574, %v1401
    %v1576 = vpop.permute.xlu0 %1575
    %1579 = vset.pattern.permute.xlu0 0
    %1580 = vperm.xlu0 %1579, %v1402
    %v1581 = vpop.permute.xlu0 %1580
    %1584 = vset.pattern.permute.xlu0 0
    %1585 = vperm.xlu0 %1584, %v1403
    %v1586 = vpop.permute.xlu0 %1585
    %1589 = vset.pattern.permute.xlu0 0
    %1590 = vperm.xlu0 %1589, %v1404
    %v1591 = vpop.permute.xlu0 %1590
    %1594 = vset.pattern.permute.xlu0 0
    %1595 = vperm.xlu0 %1594, %v1405
    %v1596 = vpop.permute.xlu0 %1595
    %1599 = vset.pattern.permute.xlu0 0
    %1600 = vperm.xlu0 %1599, %v1406
    %v1601 = vpop.permute.xlu0 %1600
    %1604 = vset.pattern.permute.xlu0 0
    %1605 = vperm.xlu0 %1604, %v1407
    %v1606 = vpop.permute.xlu0 %1605
    %1609 = vset.pattern.permute.xlu0 0
    %1610 = vperm.xlu0 %1609, %v1408
    %v1611 = vpop.permute.xlu0 %1610
    %1614 = vset.pattern.permute.xlu0 0
    %1615 = vperm.xlu0 %1614, %v1409
    %v1616 = vpop.permute.xlu0 %1615
    %1619 = vset.pattern.permute.xlu0 0
    %1620 = vperm.xlu0 %1619, %v1410
    %v1621 = vpop.permute.xlu0 %1620
    %1624 = vset.pattern.permute.xlu0 0
    %1625 = vperm.xlu0 %1624, %v1411
    %v1626 = vpop.permute.xlu0 %1625
    %1629 = vset.pattern.permute.xlu0 0
    %1630 = vperm.xlu0 %1629, %v1412
    %v1631 = vpop.permute.xlu0 %1630
    %1634 = vset.pattern.permute.xlu0 0
    %1635 = vperm.xlu0 %1634, %v1413
    %v1636 = vpop.permute.xlu0 %1635
    %1639 = vset.pattern.permute.xlu0 0
    %1640 = vperm.xlu0 %1639, %v1414
    %v1641 = vpop.permute.xlu0 %1640
    %1644 = vset.pattern.permute.xlu0 0
    %1645 = vperm.xlu0 %1644, %v1415
    %v1646 = vpop.permute.xlu0 %1645
    %1649 = vset.pattern.permute.xlu0 0
    %1650 = vperm.xlu0 %1649, %v1416
    %v1651 = vpop.permute.xlu0 %1650
    %1654 = vset.pattern.permute.xlu0 0
    %1655 = vperm.xlu0 %1654, %v1417
    %v1656 = vpop.permute.xlu0 %1655
    %1659 = vset.pattern.permute.xlu0 0
    %1660 = vperm.xlu0 %1659, %v1418
    %v1661 = vpop.permute.xlu0 %1660
    %1664 = vset.pattern.permute.xlu0 0
    %1665 = vperm.xlu0 %1664, %v1419
    %v1666 = vpop.permute.xlu0 %1665
    %1669 = vset.pattern.permute.xlu0 0
    %1670 = vperm.xlu0 %1669, %v1420
    %v1671 = vpop.permute.xlu0 %1670
    %1674 = vset.pattern.permute.xlu0 0
    %1675 = vperm.xlu0 %1674, %v1421
    %v1676 = vpop.permute.xlu0 %1675
    %1679 = vset.pattern.permute.xlu0 0
    %1680 = vperm.xlu0 %1679, %v1422
    %v1681 = vpop.permute.xlu0 %1680
    %1684 = vset.pattern.permute.xlu0 0
    %1685 = vperm.xlu0 %1684, %v1423
    %v1686 = vpop.permute.xlu0 %1685
    %1689 = vset.pattern.permute.xlu0 0
    %1690 = vperm.xlu0 %1689, %v1424
    %v1691 = vpop.permute.xlu0 %1690
    %1694 = vset.pattern.permute.xlu0 0
    %1695 = vperm.xlu0 %1694, %v1425
    %v1696 = vpop.permute.xlu0 %1695
    %1699 = vset.pattern.permute.xlu0 0
    %1700 = vperm.xlu0 %1699, %v1426
    %v1701 = vpop.permute.xlu0 %1700
    %1704 = vset.pattern.permute.xlu0 0
    %1705 = vperm.xlu0 %1704, %v1427
    %v1706 = vpop.permute.xlu0 %1705
    %1709 = vset.pattern.permute.xlu0 0
    %1710 = vperm.xlu0 %1709, %v1428
    %v1711 = vpop.permute.xlu0 %1710
    %1714 = vset.pattern.permute.xlu0 0
    %1715 = vperm.xlu0 %1714, %v1429
    %v1716 = vpop.permute.xlu0 %1715
    %1719 = vset.pattern.permute.xlu0 0
    %1720 = vperm.xlu0 %1719, %v1430
    %v1721 = vpop.permute.xlu0 %1720
    %1724 = vset.pattern.permute.xlu0 0
    %1725 = vperm.xlu0 %1724, %v1431
    %v1726 = vpop.permute.xlu0 %1725
    %1729 = vset.pattern.permute.xlu0 0
    %1730 = vperm.xlu0 %1729, %v1432
    %v1731 = vpop.permute.xlu0 %1730
    %1734 = vset.pattern.permute.xlu0 0
    %1735 = vperm.xlu0 %1734, %v1433
    %v1736 = vpop.permute.xlu0 %1735
    %1739 = vset.pattern.permute.xlu0 0
    %1740 = vperm.xlu0 %1739, %v1434
    %v1741 = vpop.permute.xlu0 %1740
    %1744 = vset.pattern.permute.xlu0 0
    %1745 = vperm.xlu0 %1744, %v1435
    %v1746 = vpop.permute.xlu0 %1745
    %1749 = vset.pattern.permute.xlu0 0
    %1750 = vperm.xlu0 %1749, %v1436
    %v1751 = vpop.permute.xlu0 %1750
    %1754 = vset.pattern.permute.xlu0 0
    %1755 = vperm.xlu0 %1754, %v1437
    %v1756 = vpop.permute.xlu0 %1755
    %v1758 = vmul.f32 %v1310, %v1441
    %v1759 = vmul.f32 %v1311, %v1446
    %v1760 = vmul.f32 %v1312, %v1451
    %v1761 = vmul.f32 %v1313, %v1456
    %v1762 = vmul.f32 %v1314, %v1461
    %v1763 = vmul.f32 %v1315, %v1466
    %v1764 = vmul.f32 %v1316, %v1471
    %v1765 = vmul.f32 %v1317, %v1476
    %v1766 = vmul.f32 %v1318, %v1481
    %v1767 = vmul.f32 %v1319, %v1486
    %v1768 = vmul.f32 %v1320, %v1491
    %v1769 = vmul.f32 %v1321, %v1496
    %v1770 = vmul.f32 %v1322, %v1501
    %v1771 = vmul.f32 %v1323, %v1506
    %v1772 = vmul.f32 %v1324, %v1511
    %v1773 = vmul.f32 %v1325, %v1516
    %v1774 = vmul.f32 %v1326, %v1521
    %v1775 = vmul.f32 %v1327, %v1526
    %v1776 = vmul.f32 %v1328, %v1531
    %v1777 = vmul.f32 %v1329, %v1536
    %v1778 = vmul.f32 %v1330, %v1541
    %v1779 = vmul.f32 %v1331, %v1546
    %v1780 = vmul.f32 %v1332, %v1551
    %v1781 = vmul.f32 %v1333, %v1556
    %v1782 = vmul.f32 %v1334, %v1561
    %v1783 = vmul.f32 %v1335, %v1566
    %v1784 = vmul.f32 %v1336, %v1571
    %v1785 = vmul.f32 %v1337, %v1576
    %v1786 = vmul.f32 %v1338, %v1581
    %v1787 = vmul.f32 %v1339, %v1586
    %v1788 = vmul.f32 %v1340, %v1591
    %v1789 = vmul.f32 %v1341, %v1596
    %v1790 = vmul.f32 %v1342, %v1601
    %v1791 = vmul.f32 %v1343, %v1606
    %v1792 = vmul.f32 %v1344, %v1611
    %v1793 = vmul.f32 %v1345, %v1616
    %v1794 = vmul.f32 %v1346, %v1621
    %v1795 = vmul.f32 %v1347, %v1626
    %v1796 = vmul.f32 %v1348, %v1631
    %v1797 = vmul.f32 %v1349, %v1636
    %v1798 = vmul.f32 %v1350, %v1641
    %v1799 = vmul.f32 %v1351, %v1646
    %v1800 = vmul.f32 %v1352, %v1651
    %v1801 = vmul.f32 %v1353, %v1656
    %v1802 = vmul.f32 %v1354, %v1661
    %v1803 = vmul.f32 %v1355, %v1666
    %v1804 = vmul.f32 %v1356, %v1671
    %v1805 = vmul.f32 %v1357, %v1676
    %v1806 = vmul.f32 %v1358, %v1681
    %v1807 = vmul.f32 %v1359, %v1686
    %v1808 = vmul.f32 %v1360, %v1691
    %v1809 = vmul.f32 %v1361, %v1696
    %v1810 = vmul.f32 %v1362, %v1701
    %v1811 = vmul.f32 %v1363, %v1706
    %v1812 = vmul.f32 %v1364, %v1711
    %v1813 = vmul.f32 %v1365, %v1716
    %v1814 = vmul.f32 %v1366, %v1721
    %v1815 = vmul.f32 %v1367, %v1726
    %v1816 = vmul.f32 %v1368, %v1731
    %v1817 = vmul.f32 %v1369, %v1736
    %v1818 = vmul.f32 %v1370, %v1741
    %v1819 = vmul.f32 %v1371, %v1746
    %v1820 = vmul.f32 %v1372, %v1751
    %v1821 = vmul.f32 %v1373, %v1756
    %v1822 = vld [vmem:[%s3] sm:$0x1]
    %v1824 = vlaneseq
    %v1825 = vshrl.u32 %v1824, 7
    %v1826 = vsub.s32 0, %v1825
    %v1827 = vrot.slane %v1822, %v1826
    %v1829 = vadd.f32 %v1758, %v1827
    %v1830 = vadd.f32 %v1759, %v1827
    %v1831 = vadd.f32 %v1760, %v1827
    %v1832 = vadd.f32 %v1761, %v1827
    %v1833 = vadd.f32 %v1762, %v1827
    %v1834 = vadd.f32 %v1763, %v1827
    %v1835 = vadd.f32 %v1764, %v1827
    %v1836 = vadd.f32 %v1765, %v1827
    %v1837 = vadd.f32 %v1766, %v1827
    %v1838 = vadd.f32 %v1767, %v1827
    %v1839 = vadd.f32 %v1768, %v1827
    %v1840 = vadd.f32 %v1769, %v1827
    %v1841 = vadd.f32 %v1770, %v1827
    %v1842 = vadd.f32 %v1771, %v1827
    %v1843 = vadd.f32 %v1772, %v1827
    %v1844 = vadd.f32 %v1773, %v1827
    %v1845 = vadd.f32 %v1774, %v1827
    %v1846 = vadd.f32 %v1775, %v1827
    %v1847 = vadd.f32 %v1776, %v1827
    %v1848 = vadd.f32 %v1777, %v1827
    %v1849 = vadd.f32 %v1778, %v1827
    %v1850 = vadd.f32 %v1779, %v1827
    %v1851 = vadd.f32 %v1780, %v1827
    %v1852 = vadd.f32 %v1781, %v1827
    %v1853 = vadd.f32 %v1782, %v1827
    %v1854 = vadd.f32 %v1783, %v1827
    %v1855 = vadd.f32 %v1784, %v1827
    %v1856 = vadd.f32 %v1785, %v1827
    %v1857 = vadd.f32 %v1786, %v1827
    %v1858 = vadd.f32 %v1787, %v1827
    %v1859 = vadd.f32 %v1788, %v1827
    %v1860 = vadd.f32 %v1789, %v1827
    %v1861 = vadd.f32 %v1790, %v1827
    %v1862 = vadd.f32 %v1791, %v1827
    %v1863 = vadd.f32 %v1792, %v1827
    %v1864 = vadd.f32 %v1793, %v1827
    %v1865 = vadd.f32 %v1794, %v1827
    %v1866 = vadd.f32 %v1795, %v1827
    %v1867 = vadd.f32 %v1796, %v1827
    %v1868 = vadd.f32 %v1797, %v1827
    %v1869 = vadd.f32 %v1798, %v1827
    %v1870 = vadd.f32 %v1799, %v1827
    %v1871 = vadd.f32 %v1800, %v1827
    %v1872 = vadd.f32 %v1801, %v1827
    %v1873 = vadd.f32 %v1802, %v1827
    %v1874 = vadd.f32 %v1803, %v1827
    %v1875 = vadd.f32 %v1804, %v1827
    %v1876 = vadd.f32 %v1805, %v1827
    %v1877 = vadd.f32 %v1806, %v1827
    %v1878 = vadd.f32 %v1807, %v1827
    %v1879 = vadd.f32 %v1808, %v1827
    %v1880 = vadd.f32 %v1809, %v1827
    %v1881 = vadd.f32 %v1810, %v1827
    %v1882 = vadd.f32 %v1811, %v1827
    %v1883 = vadd.f32 %v1812, %v1827
    %v1884 = vadd.f32 %v1813, %v1827
    %v1885 = vadd.f32 %v1814, %v1827
    %v1886 = vadd.f32 %v1815, %v1827
    %v1887 = vadd.f32 %v1816, %v1827
    %v1888 = vadd.f32 %v1817, %v1827
    %v1889 = vadd.f32 %v1818, %v1827
    %v1890 = vadd.f32 %v1819, %v1827
    %v1891 = vadd.f32 %v1820, %v1827
    %v1892 = vadd.f32 %v1821, %v1827
    %v1893 = vmax.f32 %v1829, 0.0
    %v1894 = vmax.f32 %v1830, 0.0
    %v1895 = vmax.f32 %v1831, 0.0
    %v1896 = vmax.f32 %v1832, 0.0
    %v1897 = vmax.f32 %v1833, 0.0
    %v1898 = vmax.f32 %v1834, 0.0
    %v1899 = vmax.f32 %v1835, 0.0
    %v1900 = vmax.f32 %v1836, 0.0
    %v1901 = vmax.f32 %v1837, 0.0
    %v1902 = vmax.f32 %v1838, 0.0
    %v1903 = vmax.f32 %v1839, 0.0
    %v1904 = vmax.f32 %v1840, 0.0
    %v1905 = vmax.f32 %v1841, 0.0
    %v1906 = vmax.f32 %v1842, 0.0
    %v1907 = vmax.f32 %v1843, 0.0
    %v1908 = vmax.f32 %v1844, 0.0
    %v1909 = vmax.f32 %v1845, 0.0
    %v1910 = vmax.f32 %v1846, 0.0
    %v1911 = vmax.f32 %v1847, 0.0
    %v1912 = vmax.f32 %v1848, 0.0
    %v1913 = vmax.f32 %v1849, 0.0
    %v1914 = vmax.f32 %v1850, 0.0
    %v1915 = vmax.f32 %v1851, 0.0
    %v1916 = vmax.f32 %v1852, 0.0
    %v1917 = vmax.f32 %v1853, 0.0
    %v1918 = vmax.f32 %v1854, 0.0
    %v1919 = vmax.f32 %v1855, 0.0
    %v1920 = vmax.f32 %v1856, 0.0
    %v1921 = vmax.f32 %v1857, 0.0
    %v1922 = vmax.f32 %v1858, 0.0
    %v1923 = vmax.f32 %v1859, 0.0
    %v1924 = vmax.f32 %v1860, 0.0
    %v1925 = vmax.f32 %v1861, 0.0
    %v1926 = vmax.f32 %v1862, 0.0
    %v1927 = vmax.f32 %v1863, 0.0
    %v1928 = vmax.f32 %v1864, 0.0
    %v1929 = vmax.f32 %v1865, 0.0
    %v1930 = vmax.f32 %v1866, 0.0
    %v1931 = vmax.f32 %v1867, 0.0
    %v1932 = vmax.f32 %v1868, 0.0
    %v1933 = vmax.f32 %v1869, 0.0
    %v1934 = vmax.f32 %v1870, 0.0
    %v1935 = vmax.f32 %v1871, 0.0
    %v1936 = vmax.f32 %v1872, 0.0
    %v1937 = vmax.f32 %v1873, 0.0
    %v1938 = vmax.f32 %v1874, 0.0
    %v1939 = vmax.f32 %v1875, 0.0
    %v1940 = vmax.f32 %v1876, 0.0
    %v1941 = vmax.f32 %v1877, 0.0
    %v1942 = vmax.f32 %v1878, 0.0
    %v1943 = vmax.f32 %v1879, 0.0
    %v1944 = vmax.f32 %v1880, 0.0
    %v1945 = vmax.f32 %v1881, 0.0
    %v1946 = vmax.f32 %v1882, 0.0
    %v1947 = vmax.f32 %v1883, 0.0
    %v1948 = vmax.f32 %v1884, 0.0
    %v1949 = vmax.f32 %v1885, 0.0
    %v1950 = vmax.f32 %v1886, 0.0
    %v1951 = vmax.f32 %v1887, 0.0
    %v1952 = vmax.f32 %v1888, 0.0
    %v1953 = vmax.f32 %v1889, 0.0
    %v1954 = vmax.f32 %v1890, 0.0
    %v1955 = vmax.f32 %v1891, 0.0
    %v1956 = vmax.f32 %v1892, 0.0
    %v1957 = vld [vmem:[%s4] sm:$0xf]
    %v1958 = vpack.c.bf16 %v1894, %v1893
    %v1959 = vpack.c.bf16 %v1896, %v1895
    %v1960 = vpack.c.bf16 %v1898, %v1897
    %v1961 = vpack.c.bf16 %v1900, %v1899
    %v1962 = vpack.c.bf16 %v1902, %v1901
    %v1963 = vpack.c.bf16 %v1904, %v1903
    %v1964 = vpack.c.bf16 %v1906, %v1905
    %v1965 = vpack.c.bf16 %v1908, %v1907
    %v1966 = vpack.c.bf16 %v1910, %v1909
    %v1967 = vpack.c.bf16 %v1912, %v1911
    %v1968 = vpack.c.bf16 %v1914, %v1913
    %v1969 = vpack.c.bf16 %v1916, %v1915
    %v1970 = vpack.c.bf16 %v1918, %v1917
    %v1971 = vpack.c.bf16 %v1920, %v1919
    %v1972 = vpack.c.bf16 %v1922, %v1921
    %v1973 = vpack.c.bf16 %v1924, %v1923
    %v1974 = vpack.c.bf16 %v1926, %v1925
    %v1975 = vpack.c.bf16 %v1928, %v1927
    %v1976 = vpack.c.bf16 %v1930, %v1929
    %v1977 = vpack.c.bf16 %v1932, %v1931
    %v1978 = vpack.c.bf16 %v1934, %v1933
    %v1979 = vpack.c.bf16 %v1936, %v1935
    %v1980 = vpack.c.bf16 %v1938, %v1937
    %v1981 = vpack.c.bf16 %v1940, %v1939
    %v1982 = vpack.c.bf16 %v1942, %v1941
    %v1983 = vpack.c.bf16 %v1944, %v1943
    %v1984 = vpack.c.bf16 %v1946, %v1945
    %v1985 = vpack.c.bf16 %v1948, %v1947
    %v1986 = vpack.c.bf16 %v1950, %v1949
    %v1987 = vpack.c.bf16 %v1952, %v1951
    %v1988 = vpack.c.bf16 %v1954, %v1953
    %v1989 = vpack.c.bf16 %v1956, %v1955
    %v1992 = vunpack.c.l.s4 1966171168
    %v1993 = vunpack.c.0.s8 %v1992
    %v1994 = vlaneseq
    %v1995 = vshrl.u32 %v1994, 7
    %v1996 = vsub.s32 %v1993, %v1995
    %v1997 = vrot.slane %v1957, %v1996
    %v1998 = vcombine.high %v1997, %v1997
    %v2000 = vunpack.c.l.s4 1966171168
    %v2001 = vunpack.c.0.s8 %v2000
    %v2002 = vlaneseq
    %v2003 = vshrl.u32 %v2002, 7
    %v2004 = vsub.s32 %v2001, %v2003
    %v2005 = vrot.slane %v1997, %v2004
    %v2007 = vunpack.c.l.s4 1966171168
    %v2008 = vunpack.c.0.s8 %v2007
    %v2009 = vlaneseq
    %v2010 = vshrl.u32 %v2009, 7
    %v2011 = vsub.s32 %v2008, %v2010
    %v2012 = vrot.slane %v1998, %v2011
    %v2013 = vcombine.high %v2005, %v2005
    %v2014 = vcombine.high %v2012, %v2012
    %2019 = vmatprep.subr.bf16.mxu0 0
    %2020 = vmatpush1.bf16.msra.mxu0 %v1958
    %2021 = vmatprep.subr.bf16.mxu0 0
    %2022 = vmatpush1.bf16.msra.mxu0 %v1959
    %2023 = vmatprep.subr.bf16.mxu0 0
    %2024 = vmatpush1.bf16.msra.mxu0 %v1960
    %2025 = vmatprep.subr.bf16.mxu0 0
    %2026 = vmatpush1.bf16.msra.mxu0 %v1961
    %2027 = vmatprep.subr.bf16.mxu0 0
    %2028 = vmatpush1.bf16.msra.mxu0 %v1962
    %2029 = vmatprep.subr.bf16.mxu0 0
    %2030 = vmatpush1.bf16.msra.mxu0 %v1963
    %2031 = vmatprep.subr.bf16.mxu0 0
    %2032 = vmatpush1.bf16.msra.mxu0 %v1964
    %2033 = vmatprep.subr.bf16.mxu0 0
    %2034 = vmatpush1.bf16.msra.mxu0 %v1965
    %2035 = vmatprep.subr.bf16.mxu0 0
    %2036 = vmatpush1.bf16.msra.mxu0 %v1966
    %2037 = vmatprep.subr.bf16.mxu0 0
    %2038 = vmatpush1.bf16.msra.mxu0 %v1967
    %2039 = vmatprep.subr.bf16.mxu0 0
    %2040 = vmatpush1.bf16.msra.mxu0 %v1968
    %2041 = vmatprep.subr.bf16.mxu0 0
    %2042 = vmatpush1.bf16.msra.mxu0 %v1969
    %2043 = vmatprep.subr.bf16.mxu0 0
    %2044 = vmatpush1.bf16.msra.mxu0 %v1970
    %2045 = vmatprep.subr.bf16.mxu0 0
    %2046 = vmatpush1.bf16.msra.mxu0 %v1971
    %2047 = vmatprep.subr.bf16.mxu0 0
    %2048 = vmatpush1.bf16.msra.mxu0 %v1972
    %2049 = vmatprep.subr.bf16.mxu0 0
    %2050 = vmatpush1.bf16.msra.mxu0 %v1973
    %2051 = vmatprep.mubr.bf16.mxu0 %v2012
    %2052 = vmatmul.mubr.bf16.gmra.mrb[0].mxu0 %v2005
    %v2053 = vpop.f32.mrb[0].mxu0
    %v2054 = vadd.f32 0.0, %v2053
    %v2055 = vpop.f32.mrb[0].mxu0
    %v2056 = vpop.f32.mrb[0].mxu0
    %v2057 = vpop.f32.mrb[0].mxu0
    %2058 = vdwg.mxu0
    %2059 = vmatprep.subr.bf16.mxu0 0
    %2060 = vmatpush1.bf16.msra.mxu0 %v1974
    %2061 = vmatprep.subr.bf16.mxu0 0
    %2062 = vmatpush1.bf16.msra.mxu0 %v1975
    %2063 = vmatprep.subr.bf16.mxu0 0
    %2064 = vmatpush1.bf16.msra.mxu0 %v1976
    %2065 = vmatprep.subr.bf16.mxu0 0
    %2066 = vmatpush1.bf16.msra.mxu0 %v1977
    %2067 = vmatprep.subr.bf16.mxu0 0
    %2068 = vmatpush1.bf16.msra.mxu0 %v1978
    %2069 = vmatprep.subr.bf16.mxu0 0
    %2070 = vmatpush1.bf16.msra.mxu0 %v1979
    %2071 = vmatprep.subr.bf16.mxu0 0
    %2072 = vmatpush1.bf16.msra.mxu0 %v1980
    %2073 = vmatprep.subr.bf16.mxu0 0
    %2074 = vmatpush1.bf16.msra.mxu0 %v1981
    %2075 = vmatprep.subr.bf16.mxu0 0
    %2076 = vmatpush1.bf16.msra.mxu0 %v1982
    %2077 = vmatprep.subr.bf16.mxu0 0
    %2078 = vmatpush1.bf16.msra.mxu0 %v1983
    %2079 = vmatprep.subr.bf16.mxu0 0
    %2080 = vmatpush1.bf16.msra.mxu0 %v1984
    %2081 = vmatprep.subr.bf16.mxu0 0
    %2082 = vmatpush1.bf16.msra.mxu0 %v1985
    %2083 = vmatprep.subr.bf16.mxu0 0
    %2084 = vmatpush1.bf16.msra.mxu0 %v1986
    %2085 = vmatprep.subr.bf16.mxu0 0
    %2086 = vmatpush1.bf16.msra.mxu0 %v1987
    %2087 = vmatprep.subr.bf16.mxu0 0
    %2088 = vmatpush1.bf16.msra.mxu0 %v1988
    %2089 = vmatprep.subr.bf16.mxu0 0
    %2090 = vmatpush1.bf16.msra.mxu0 %v1989
    %2091 = vmatprep.mubr.bf16.mxu0 %v2014
    %2092 = vmatmul.mubr.bf16.gmra.mrb[0].mxu0 %v2013
    %v2093 = vpop.f32.mrb[0].mxu0
    %v2094 = vadd.f32 %v2054, %v2093
    %v2095 = vpop.f32.mrb[0].mxu0
    %v2096 = vpop.f32.mrb[0].mxu0
    %v2097 = vpop.f32.mrb[0].mxu0
    %2098 = vdwg.mxu0
    %2099 = vst [vmem:[%s5] sm:$0x3] %v2094
  $region29: #{td_rumor_gcn_forward.5} parent=0 // pred_fallthru
    _
  // Predicated region
  $region30: #{td_rumor_gcn_forward.5} parent=0 // pred_check
    _
  $region31: #{td_rumor_gcn_forward.5} parent=0 // pred_check_branch
    %2101 = sbr.rel (0) target = $region33
  $region32: #{td_rumor_gcn_forward.5} parent=0 // pred_region
    _
  $region33: #{td_rumor_gcn_forward.5} parent=0 // pred_fallthru
    _
  // Predicated region
  $region34: #{td_rumor_gcn_forward.5} parent=0 // pred_check
    _
  $region35: #{td_rumor_gcn_forward.5} parent=0 // pred_check_branch
    %2103 = sbr.rel (0) target = $region37
  $region36: #{td_rumor_gcn_forward.5} parent=0 // pred_region
    _
  $region37: #{td_rumor_gcn_forward.5} parent=0 // pred_fallthru
    _

// kernel: td_rumor_gcn_forward.4
$region0: #{td_rumor_gcn_forward.4}
  #allocation0 [shape = 'u32[]', space=smem, size = 0x4, offset = 0x4, fixed_abs, tag = 'smem constant byte address 0x4 - core index']
  #allocation1 [shape = 'u32[144,128]{1,0:T(1,128)}', space=vmem, size = 0x12000, scoped, tag = 'internal scratch']
  #allocation2 [shape = 'f32[512,128]{1,0:T(8,128)}', space=vmem, size = 0x40000, scoped, tag = 'scratch operand']
  %s0 = inlined_call_operand.vmem [shape: s8[512,512], index: 0, kind: input, shape index: {}]
  %s1 = inlined_call_operand.vmem [shape: bf16[512,128], index: 1, kind: input, shape index: {}]
  %s2 = inlined_call_operand.vmem [shape: f32[512,1], index: 2, kind: input, shape index: {}]
  %s3 = inlined_call_operand.vmem [shape: bf16[512,128], index: 3, kind: input, shape index: {}]
  %s4 = inlined_call_operand.vmem [shape: f32[1,128], index: 4, kind: input, shape index: {}]
  %s5 = inlined_call_operand.vmem [shape: bf16[256,128], index: 5, kind: input, shape index: {}]
  %s6 = inlined_call_operand.vmem [shape: bf16[512,128], index: 6, kind: output, shape index: {}]
  %s7 = sld [smem:[#allocation0]]
  $region42: #{td_rumor_gcn_forward.4} parent=0
    _
  %s9 = ssub.s32 1, %s7
  %s10 = scalar_select 0, %s9, %s7
  // Predicated region
  $region2: #{td_rumor_gcn_forward.4} parent=0 // pred_check
    _
  $region3: #{td_rumor_gcn_forward.4} parent=0 // pred_check_branch
    %12 = sbr.rel (0) target = $region5
  $region4: #{td_rumor_gcn_forward.4} parent=0 // pred_region
    _
  $region5: #{td_rumor_gcn_forward.4} parent=0 // pred_fallthru
    _
  // Predicated region
  $region6: #{td_rumor_gcn_forward.4} parent=0 // pred_check
    _
  $region7: #{td_rumor_gcn_forward.4} parent=0 // pred_check_branch
    %14 = sbr.rel (0) target = $region9
  $region8: #{td_rumor_gcn_forward.4} parent=0 // pred_region
    _
  $region9: #{td_rumor_gcn_forward.4} parent=0 // pred_fallthru
    _
  // Predicated region
  $region10: #{td_rumor_gcn_forward.4} parent=0 // pred_check
    _
  $region11: #{td_rumor_gcn_forward.4} parent=0 // pred_check_branch
    %16 = sbr.rel (0) target = $region13
  $region12: #{td_rumor_gcn_forward.4} parent=0 // pred_region
    _
  $region13: #{td_rumor_gcn_forward.4} parent=0 // pred_fallthru
    _
  // Predicated region
  $region14: #{td_rumor_gcn_forward.4} parent=0 // pred_check
    _
  $region15: #{td_rumor_gcn_forward.4} parent=0 // pred_check_branch
    %18 = sbr.rel (0) target = $region17
  $region16: #{td_rumor_gcn_forward.4} parent=0 // pred_region
    _
  $region17: #{td_rumor_gcn_forward.4} parent=0 // pred_fallthru
    _
  // Predicated region
  $region18: #{td_rumor_gcn_forward.4} parent=0 // pred_check
    _
  $region19: #{td_rumor_gcn_forward.4} parent=0 // pred_check_branch
    %20 = sbr.rel (0) target = $region21
  $region20: #{td_rumor_gcn_forward.4} parent=0 // pred_region
    _
  $region21: #{td_rumor_gcn_forward.4} parent=0 // pred_fallthru
    _
  // Predicated region
  $region22: #{td_rumor_gcn_forward.4} parent=0 // pred_check
    _
  $region23: #{td_rumor_gcn_forward.4} parent=0 // pred_check_branch
    %22 = sbr.rel (0) target = $region25
  $region24: #{td_rumor_gcn_forward.4} parent=0 // pred_region
    _
  $region25: #{td_rumor_gcn_forward.4} parent=0 // pred_fallthru
    _
  %p24 = scmp.eq.s32.totalorder 0, 0
  // Predicated region
  $region26: #{td_rumor_gcn_forward.4} parent=0 // pred_check
    %p25 = pneg %p24
  $region27: #{td_rumor_gcn_forward.4} parent=0 // pred_check_branch
    %27 = sbr.rel (%p25) target = $region29
  $region28: #{td_rumor_gcn_forward.4} parent=0 // pred_region
    %28 = vst [vmem:[#allocation2] sm:$0xff] 0.0
    %29 = vst [vmem:[#allocation2 + $0x8] sm:$0xff] 0.0
    %30 = vst [vmem:[#allocation2 + $0x10] sm:$0xff] 0.0
    %31 = vst [vmem:[#allocation2 + $0x18] sm:$0xff] 0.0
    %32 = vst [vmem:[#allocation2 + $0x20] sm:$0xff] 0.0
    %33 = vst [vmem:[#allocation2 + $0x28] sm:$0xff] 0.0
    %34 = vst [vmem:[#allocation2 + $0x30] sm:$0xff] 0.0
    %35 = vst [vmem:[#allocation2 + $0x38] sm:$0xff] 0.0
    %36 = vst [vmem:[#allocation2 + $0x40] sm:$0xff] 0.0
    %37 = vst [vmem:[#allocation2 + $0x48] sm:$0xff] 0.0
    %38 = vst [vmem:[#allocation2 + $0x50] sm:$0xff] 0.0
    %39 = vst [vmem:[#allocation2 + $0x58] sm:$0xff] 0.0
    %40 = vst [vmem:[#allocation2 + $0x60] sm:$0xff] 0.0
    %41 = vst [vmem:[#allocation2 + $0x68] sm:$0xff] 0.0
    %42 = vst [vmem:[#allocation2 + $0x70] sm:$0xff] 0.0
    %43 = vst [vmem:[#allocation2 + $0x78] sm:$0xff] 0.0
    %44 = vst [vmem:[#allocation2 + $0x80] sm:$0xff] 0.0
    %45 = vst [vmem:[#allocation2 + $0x88] sm:$0xff] 0.0
    %46 = vst [vmem:[#allocation2 + $0x90] sm:$0xff] 0.0
    %47 = vst [vmem:[#allocation2 + $0x98] sm:$0xff] 0.0
    %48 = vst [vmem:[#allocation2 + $0xa0] sm:$0xff] 0.0
    %49 = vst [vmem:[#allocation2 + $0xa8] sm:$0xff] 0.0
    %50 = vst [vmem:[#allocation2 + $0xb0] sm:$0xff] 0.0
    %51 = vst [vmem:[#allocation2 + $0xb8] sm:$0xff] 0.0
    %52 = vst [vmem:[#allocation2 + $0xc0] sm:$0xff] 0.0
    %53 = vst [vmem:[#allocation2 + $0xc8] sm:$0xff] 0.0
    %54 = vst [vmem:[#allocation2 + $0xd0] sm:$0xff] 0.0
    %55 = vst [vmem:[#allocation2 + $0xd8] sm:$0xff] 0.0
    %56 = vst [vmem:[#allocation2 + $0xe0] sm:$0xff] 0.0
    %57 = vst [vmem:[#allocation2 + $0xe8] sm:$0xff] 0.0
    %58 = vst [vmem:[#allocation2 + $0xf0] sm:$0xff] 0.0
    %59 = vst [vmem:[#allocation2 + $0xf8] sm:$0xff] 0.0
    %60 = vst [vmem:[#allocation2 + $0x100] sm:$0xff] 0.0
    %61 = vst [vmem:[#allocation2 + $0x108] sm:$0xff] 0.0
    %62 = vst [vmem:[#allocation2 + $0x110] sm:$0xff] 0.0
    %63 = vst [vmem:[#allocation2 + $0x118] sm:$0xff] 0.0
    %64 = vst [vmem:[#allocation2 + $0x120] sm:$0xff] 0.0
    %65 = vst [vmem:[#allocation2 + $0x128] sm:$0xff] 0.0
    %66 = vst [vmem:[#allocation2 + $0x130] sm:$0xff] 0.0
    %67 = vst [vmem:[#allocation2 + $0x138] sm:$0xff] 0.0
    %68 = vst [vmem:[#allocation2 + $0x140] sm:$0xff] 0.0
    %69 = vst [vmem:[#allocation2 + $0x148] sm:$0xff] 0.0
    %70 = vst [vmem:[#allocation2 + $0x150] sm:$0xff] 0.0
    %71 = vst [vmem:[#allocation2 + $0x158] sm:$0xff] 0.0
    %72 = vst [vmem:[#allocation2 + $0x160] sm:$0xff] 0.0
    %73 = vst [vmem:[#allocation2 + $0x168] sm:$0xff] 0.0
    %74 = vst [vmem:[#allocation2 + $0x170] sm:$0xff] 0.0
    %75 = vst [vmem:[#allocation2 + $0x178] sm:$0xff] 0.0
    %76 = vst [vmem:[#allocation2 + $0x180] sm:$0xff] 0.0
    %77 = vst [vmem:[#allocation2 + $0x188] sm:$0xff] 0.0
    %78 = vst [vmem:[#allocation2 + $0x190] sm:$0xff] 0.0
    %79 = vst [vmem:[#allocation2 + $0x198] sm:$0xff] 0.0
    %80 = vst [vmem:[#allocation2 + $0x1a0] sm:$0xff] 0.0
    %81 = vst [vmem:[#allocation2 + $0x1a8] sm:$0xff] 0.0
    %82 = vst [vmem:[#allocation2 + $0x1b0] sm:$0xff] 0.0
    %83 = vst [vmem:[#allocation2 + $0x1b8] sm:$0xff] 0.0
    %84 = vst [vmem:[#allocation2 + $0x1c0] sm:$0xff] 0.0
    %85 = vst [vmem:[#allocation2 + $0x1c8] sm:$0xff] 0.0
    %86 = vst [vmem:[#allocation2 + $0x1d0] sm:$0xff] 0.0
    %87 = vst [vmem:[#allocation2 + $0x1d8] sm:$0xff] 0.0
    %88 = vst [vmem:[#allocation2 + $0x1e0] sm:$0xff] 0.0
    %89 = vst [vmem:[#allocation2 + $0x1e8] sm:$0xff] 0.0
    %90 = vst [vmem:[#allocation2 + $0x1f0] sm:$0xff] 0.0
    %91 = vst [vmem:[#allocation2 + $0x1f8] sm:$0xff] 0.0
  $region29: #{td_rumor_gcn_forward.4} parent=0 // pred_fallthru
    _
  %v92 = vld [vmem:[%s0] sm:$0xff]
  %v93 = vld [vmem:[%s0 + $0x8] sm:$0xff]
  %v94 = vld [vmem:[%s0 + $0x10] sm:$0xff]
  %v95 = vld [vmem:[%s0 + $0x18] sm:$0xff]
  %v96 = vld [vmem:[%s0 + $0x20] sm:$0xff]
  %v97 = vld [vmem:[%s0 + $0x28] sm:$0xff]
  %v98 = vld [vmem:[%s0 + $0x30] sm:$0xff]
  %v99 = vld [vmem:[%s0 + $0x38] sm:$0xff]
  %v100 = vld [vmem:[%s0 + $0x40] sm:$0xff]
  %v101 = vld [vmem:[%s0 + $0x48] sm:$0xff]
  %v102 = vld [vmem:[%s0 + $0x50] sm:$0xff]
  %v103 = vld [vmem:[%s0 + $0x58] sm:$0xff]
  %v104 = vld [vmem:[%s0 + $0x60] sm:$0xff]
  %v105 = vld [vmem:[%s0 + $0x68] sm:$0xff]
  %v106 = vld [vmem:[%s0 + $0x70] sm:$0xff]
  %v107 = vld [vmem:[%s0 + $0x78] sm:$0xff]
  %v108 = vld [vmem:[%s0 + $0x80] sm:$0xff]
  %v109 = vld [vmem:[%s0 + $0x88] sm:$0xff]
  %v110 = vld [vmem:[%s0 + $0x90] sm:$0xff]
  %v111 = vld [vmem:[%s0 + $0x98] sm:$0xff]
  %v112 = vld [vmem:[%s0 + $0xa0] sm:$0xff]
  %v113 = vld [vmem:[%s0 + $0xa8] sm:$0xff]
  %v114 = vld [vmem:[%s0 + $0xb0] sm:$0xff]
  %v115 = vld [vmem:[%s0 + $0xb8] sm:$0xff]
  %v116 = vld [vmem:[%s0 + $0xc0] sm:$0xff]
  %v117 = vld [vmem:[%s0 + $0xc8] sm:$0xff]
  %v118 = vld [vmem:[%s0 + $0xd0] sm:$0xff]
  %v119 = vld [vmem:[%s0 + $0xd8] sm:$0xff]
  %v120 = vld [vmem:[%s0 + $0xe0] sm:$0xff]
  %v121 = vld [vmem:[%s0 + $0xe8] sm:$0xff]
  %v122 = vld [vmem:[%s0 + $0xf0] sm:$0xff]
  %v123 = vld [vmem:[%s0 + $0xf8] sm:$0xff]
  %v124 = vld [vmem:[%s0 + $0x100] sm:$0xff]
  %v125 = vld [vmem:[%s0 + $0x108] sm:$0xff]
  %v126 = vld [vmem:[%s0 + $0x110] sm:$0xff]
  %v127 = vld [vmem:[%s0 + $0x118] sm:$0xff]
  %v128 = vld [vmem:[%s0 + $0x120] sm:$0xff]
  %v129 = vld [vmem:[%s0 + $0x128] sm:$0xff]
  %v130 = vld [vmem:[%s0 + $0x130] sm:$0xff]
  %v131 = vld [vmem:[%s0 + $0x138] sm:$0xff]
  %v132 = vld [vmem:[%s0 + $0x140] sm:$0xff]
  %v133 = vld [vmem:[%s0 + $0x148] sm:$0xff]
  %v134 = vld [vmem:[%s0 + $0x150] sm:$0xff]
  %v135 = vld [vmem:[%s0 + $0x158] sm:$0xff]
  %v136 = vld [vmem:[%s0 + $0x160] sm:$0xff]
  %v137 = vld [vmem:[%s0 + $0x168] sm:$0xff]
  %v138 = vld [vmem:[%s0 + $0x170] sm:$0xff]
  %v139 = vld [vmem:[%s0 + $0x178] sm:$0xff]
  %v140 = vld [vmem:[%s0 + $0x180] sm:$0xff]
  %v141 = vld [vmem:[%s0 + $0x188] sm:$0xff]
  %v142 = vld [vmem:[%s0 + $0x190] sm:$0xff]
  %v143 = vld [vmem:[%s0 + $0x198] sm:$0xff]
  %v144 = vld [vmem:[%s0 + $0x1a0] sm:$0xff]
  %v145 = vld [vmem:[%s0 + $0x1a8] sm:$0xff]
  %v146 = vld [vmem:[%s0 + $0x1b0] sm:$0xff]
  %v147 = vld [vmem:[%s0 + $0x1b8] sm:$0xff]
  %v148 = vld [vmem:[%s0 + $0x1c0] sm:$0xff]
  %v149 = vld [vmem:[%s0 + $0x1c8] sm:$0xff]
  %v150 = vld [vmem:[%s0 + $0x1d0] sm:$0xff]
  %v151 = vld [vmem:[%s0 + $0x1d8] sm:$0xff]
  %v152 = vld [vmem:[%s0 + $0x1e0] sm:$0xff]
  %v153 = vld [vmem:[%s0 + $0x1e8] sm:$0xff]
  %v154 = vld [vmem:[%s0 + $0x1f0] sm:$0xff]
  %v155 = vld [vmem:[%s0 + $0x1f8] sm:$0xff]
  %v156 = vunpack.c.l.s8.bf16 %v92
  %v157 = vunpack.c.l.s8.bf16 %v93
  %v158 = vunpack.c.l.s8.bf16 %v94
  %v159 = vunpack.c.l.s8.bf16 %v95
  %v160 = vunpack.c.h.s8.bf16 %v92
  %v161 = vunpack.c.h.s8.bf16 %v93
  %v162 = vunpack.c.h.s8.bf16 %v94
  %v163 = vunpack.c.h.s8.bf16 %v95
  %v164 = vunpack.c.l.s8.bf16 %v96
  %v165 = vunpack.c.l.s8.bf16 %v97
  %v166 = vunpack.c.l.s8.bf16 %v98
  %v167 = vunpack.c.l.s8.bf16 %v99
  %v168 = vunpack.c.h.s8.bf16 %v96
  %v169 = vunpack.c.h.s8.bf16 %v97
  %v170 = vunpack.c.h.s8.bf16 %v98
  %v171 = vunpack.c.h.s8.bf16 %v99
  %v172 = vunpack.c.l.s8.bf16 %v100
  %v173 = vunpack.c.l.s8.bf16 %v101
  %v174 = vunpack.c.l.s8.bf16 %v102
  %v175 = vunpack.c.l.s8.bf16 %v103
  %v176 = vunpack.c.h.s8.bf16 %v100
  %v177 = vunpack.c.h.s8.bf16 %v101
  %v178 = vunpack.c.h.s8.bf16 %v102
  %v179 = vunpack.c.h.s8.bf16 %v103
  %v180 = vunpack.c.l.s8.bf16 %v104
  %v181 = vunpack.c.l.s8.bf16 %v105
  %v182 = vunpack.c.l.s8.bf16 %v106
  %v183 = vunpack.c.l.s8.bf16 %v107
  %v184 = vunpack.c.h.s8.bf16 %v104
  %v185 = vunpack.c.h.s8.bf16 %v105
  %v186 = vunpack.c.h.s8.bf16 %v106
  %v187 = vunpack.c.h.s8.bf16 %v107
  %v188 = vunpack.c.l.s8.bf16 %v108
  %v189 = vunpack.c.l.s8.bf16 %v109
  %v190 = vunpack.c.l.s8.bf16 %v110
  %v191 = vunpack.c.l.s8.bf16 %v111
  %v192 = vunpack.c.h.s8.bf16 %v108
  %v193 = vunpack.c.h.s8.bf16 %v109
  %v194 = vunpack.c.h.s8.bf16 %v110
  %v195 = vunpack.c.h.s8.bf16 %v111
  %v196 = vunpack.c.l.s8.bf16 %v112
  %v197 = vunpack.c.l.s8.bf16 %v113
  %v198 = vunpack.c.l.s8.bf16 %v114
  %v199 = vunpack.c.l.s8.bf16 %v115
  %v200 = vunpack.c.h.s8.bf16 %v112
  %v201 = vunpack.c.h.s8.bf16 %v113
  %v202 = vunpack.c.h.s8.bf16 %v114
  %v203 = vunpack.c.h.s8.bf16 %v115
  %v204 = vunpack.c.l.s8.bf16 %v116
  %v205 = vunpack.c.l.s8.bf16 %v117
  %v206 = vunpack.c.l.s8.bf16 %v118
  %v207 = vunpack.c.l.s8.bf16 %v119
  %v208 = vunpack.c.h.s8.bf16 %v116
  %v209 = vunpack.c.h.s8.bf16 %v117
  %v210 = vunpack.c.h.s8.bf16 %v118
  %v211 = vunpack.c.h.s8.bf16 %v119
  %v212 = vunpack.c.l.s8.bf16 %v120
  %v213 = vunpack.c.l.s8.bf16 %v121
  %v214 = vunpack.c.l.s8.bf16 %v122
  %v215 = vunpack.c.l.s8.bf16 %v123
  %v216 = vunpack.c.h.s8.bf16 %v120
  %v217 = vunpack.c.h.s8.bf16 %v121
  %v218 = vunpack.c.h.s8.bf16 %v122
  %v219 = vunpack.c.h.s8.bf16 %v123
  %v220 = vunpack.c.l.s8.bf16 %v124
  %v221 = vunpack.c.l.s8.bf16 %v125
  %v222 = vunpack.c.l.s8.bf16 %v126
  %v223 = vunpack.c.l.s8.bf16 %v127
  %v224 = vunpack.c.h.s8.bf16 %v124
  %v225 = vunpack.c.h.s8.bf16 %v125
  %v226 = vunpack.c.h.s8.bf16 %v126
  %v227 = vunpack.c.h.s8.bf16 %v127
  %v228 = vunpack.c.l.s8.bf16 %v128
  %v229 = vunpack.c.l.s8.bf16 %v129
  %v230 = vunpack.c.l.s8.bf16 %v130
  %v231 = vunpack.c.l.s8.bf16 %v131
  %v232 = vunpack.c.h.s8.bf16 %v128
  %v233 = vunpack.c.h.s8.bf16 %v129
  %v234 = vunpack.c.h.s8.bf16 %v130
  %v235 = vunpack.c.h.s8.bf16 %v131
  %v236 = vunpack.c.l.s8.bf16 %v132
  %v237 = vunpack.c.l.s8.bf16 %v133
  %v238 = vunpack.c.l.s8.bf16 %v134
  %v239 = vunpack.c.l.s8.bf16 %v135
  %v240 = vunpack.c.h.s8.bf16 %v132
  %v241 = vunpack.c.h.s8.bf16 %v133
  %v242 = vunpack.c.h.s8.bf16 %v134
  %v243 = vunpack.c.h.s8.bf16 %v135
  %v244 = vunpack.c.l.s8.bf16 %v136
  %v245 = vunpack.c.l.s8.bf16 %v137
  %v246 = vunpack.c.l.s8.bf16 %v138
  %v247 = vunpack.c.l.s8.bf16 %v139
  %v248 = vunpack.c.h.s8.bf16 %v136
  %v249 = vunpack.c.h.s8.bf16 %v137
  %v250 = vunpack.c.h.s8.bf16 %v138
  %v251 = vunpack.c.h.s8.bf16 %v139
  %v252 = vunpack.c.l.s8.bf16 %v140
  %v253 = vunpack.c.l.s8.bf16 %v141
  %v254 = vunpack.c.l.s8.bf16 %v142
  %v255 = vunpack.c.l.s8.bf16 %v143
  %v256 = vunpack.c.h.s8.bf16 %v140
  %v257 = vunpack.c.h.s8.bf16 %v141
  %v258 = vunpack.c.h.s8.bf16 %v142
  %v259 = vunpack.c.h.s8.bf16 %v143
  %v260 = vunpack.c.l.s8.bf16 %v144
  %v261 = vunpack.c.l.s8.bf16 %v145
  %v262 = vunpack.c.l.s8.bf16 %v146
  %v263 = vunpack.c.l.s8.bf16 %v147
  %v264 = vunpack.c.h.s8.bf16 %v144
  %v265 = vunpack.c.h.s8.bf16 %v145
  %v266 = vunpack.c.h.s8.bf16 %v146
  %v267 = vunpack.c.h.s8.bf16 %v147
  %v268 = vunpack.c.l.s8.bf16 %v148
  %v269 = vunpack.c.l.s8.bf16 %v149
  %v270 = vunpack.c.l.s8.bf16 %v150
  %v271 = vunpack.c.l.s8.bf16 %v151
  %v272 = vunpack.c.h.s8.bf16 %v148
  %v273 = vunpack.c.h.s8.bf16 %v149
  %v274 = vunpack.c.h.s8.bf16 %v150
  %v275 = vunpack.c.h.s8.bf16 %v151
  %v276 = vunpack.c.l.s8.bf16 %v152
  %v277 = vunpack.c.l.s8.bf16 %v153
  %v278 = vunpack.c.l.s8.bf16 %v154
  %v279 = vunpack.c.l.s8.bf16 %v155
  %v280 = vunpack.c.h.s8.bf16 %v152
  %v281 = vunpack.c.h.s8.bf16 %v153
  %v282 = vunpack.c.h.s8.bf16 %v154
  %v283 = vunpack.c.h.s8.bf16 %v155
  %v284 = vld [vmem:[#allocation2] sm:$0xff]
  %v285 = vld [vmem:[#allocation2 + $0x8] sm:$0xff]
  %v286 = vld [vmem:[#allocation2 + $0x10] sm:$0xff]
  %v287 = vld [vmem:[#allocation2 + $0x18] sm:$0xff]
  %v288 = vld [vmem:[#allocation2 + $0x20] sm:$0xff]
  %v289 = vld [vmem:[#allocation2 + $0x28] sm:$0xff]
  %v290 = vld [vmem:[#allocation2 + $0x30] sm:$0xff]
  %v291 = vld [vmem:[#allocation2 + $0x38] sm:$0xff]
  %v292 = vld [vmem:[#allocation2 + $0x40] sm:$0xff]
  %v293 = vld [vmem:[#allocation2 + $0x48] sm:$0xff]
  %v294 = vld [vmem:[#allocation2 + $0x50] sm:$0xff]
  %v295 = vld [vmem:[#allocation2 + $0x58] sm:$0xff]
  %v296 = vld [vmem:[#allocation2 + $0x60] sm:$0xff]
  %v297 = vld [vmem:[#allocation2 + $0x68] sm:$0xff]
  %v298 = vld [vmem:[#allocation2 + $0x70] sm:$0xff]
  %v299 = vld [vmem:[#allocation2 + $0x78] sm:$0xff]
  %v300 = vld [vmem:[#allocation2 + $0x80] sm:$0xff]
  %v301 = vld [vmem:[#allocation2 + $0x88] sm:$0xff]
  %v302 = vld [vmem:[#allocation2 + $0x90] sm:$0xff]
  %v303 = vld [vmem:[#allocation2 + $0x98] sm:$0xff]
  %v304 = vld [vmem:[#allocation2 + $0xa0] sm:$0xff]
  %v305 = vld [vmem:[#allocation2 + $0xa8] sm:$0xff]
  %v306 = vld [vmem:[#allocation2 + $0xb0] sm:$0xff]
  %v307 = vld [vmem:[#allocation2 + $0xb8] sm:$0xff]
  %v308 = vld [vmem:[#allocation2 + $0xc0] sm:$0xff]
  %v309 = vld [vmem:[#allocation2 + $0xc8] sm:$0xff]
  %v310 = vld [vmem:[#allocation2 + $0xd0] sm:$0xff]
  %v311 = vld [vmem:[#allocation2 + $0xd8] sm:$0xff]
  %v312 = vld [vmem:[#allocation2 + $0xe0] sm:$0xff]
  %v313 = vld [vmem:[#allocation2 + $0xe8] sm:$0xff]
  %v314 = vld [vmem:[#allocation2 + $0xf0] sm:$0xff]
  %v315 = vld [vmem:[#allocation2 + $0xf8] sm:$0xff]
  %v316 = vld [vmem:[#allocation2 + $0x100] sm:$0xff]
  %v317 = vld [vmem:[#allocation2 + $0x108] sm:$0xff]
  %v318 = vld [vmem:[#allocation2 + $0x110] sm:$0xff]
  %v319 = vld [vmem:[#allocation2 + $0x118] sm:$0xff]
  %v320 = vld [vmem:[#allocation2 + $0x120] sm:$0xff]
  %v321 = vld [vmem:[#allocation2 + $0x128] sm:$0xff]
  %v322 = vld [vmem:[#allocation2 + $0x130] sm:$0xff]
  %v323 = vld [vmem:[#allocation2 + $0x138] sm:$0xff]
  %v324 = vld [vmem:[#allocation2 + $0x140] sm:$0xff]
  %v325 = vld [vmem:[#allocation2 + $0x148] sm:$0xff]
  %v326 = vld [vmem:[#allocation2 + $0x150] sm:$0xff]
  %v327 = vld [vmem:[#allocation2 + $0x158] sm:$0xff]
  %v328 = vld [vmem:[#allocation2 + $0x160] sm:$0xff]
  %v329 = vld [vmem:[#allocation2 + $0x168] sm:$0xff]
  %v330 = vld [vmem:[#allocation2 + $0x170] sm:$0xff]
  %v331 = vld [vmem:[#allocation2 + $0x178] sm:$0xff]
  %v332 = vld [vmem:[#allocation2 + $0x180] sm:$0xff]
  %v333 = vld [vmem:[#allocation2 + $0x188] sm:$0xff]
  %v334 = vld [vmem:[#allocation2 + $0x190] sm:$0xff]
  %v335 = vld [vmem:[#allocation2 + $0x198] sm:$0xff]
  %v336 = vld [vmem:[#allocation2 + $0x1a0] sm:$0xff]
  %v337 = vld [vmem:[#allocation2 + $0x1a8] sm:$0xff]
  %v338 = vld [vmem:[#allocation2 + $0x1b0] sm:$0xff]
  %v339 = vld [vmem:[#allocation2 + $0x1b8] sm:$0xff]
  %v340 = vld [vmem:[#allocation2 + $0x1c0] sm:$0xff]
  %v341 = vld [vmem:[#allocation2 + $0x1c8] sm:$0xff]
  %v342 = vld [vmem:[#allocation2 + $0x1d0] sm:$0xff]
  %v343 = vld [vmem:[#allocation2 + $0x1d8] sm:$0xff]
  %v344 = vld [vmem:[#allocation2 + $0x1e0] sm:$0xff]
  %v345 = vld [vmem:[#allocation2 + $0x1e8] sm:$0xff]
  %v346 = vld [vmem:[#allocation2 + $0x1f0] sm:$0xff]
  %v347 = vld [vmem:[#allocation2 + $0x1f8] sm:$0xff]
  %v348 = vld [vmem:[%s1] sm:$0xf]
  %v349 = vld [vmem:[%s1 + $0x4] sm:$0xf]
  %v350 = vld [vmem:[%s1 + $0x8] sm:$0xf]
  %v351 = vld [vmem:[%s1 + $0xc] sm:$0xf]
  %v352 = vld [vmem:[%s1 + $0x10] sm:$0xf]
  %v353 = vld [vmem:[%s1 + $0x14] sm:$0xf]
  %v354 = vld [vmem:[%s1 + $0x18] sm:$0xf]
  %v355 = vld [vmem:[%s1 + $0x1c] sm:$0xf]
  %v356 = vld [vmem:[%s1 + $0x20] sm:$0xf]
  %v357 = vld [vmem:[%s1 + $0x24] sm:$0xf]
  %v358 = vld [vmem:[%s1 + $0x28] sm:$0xf]
  %v359 = vld [vmem:[%s1 + $0x2c] sm:$0xf]
  %v360 = vld [vmem:[%s1 + $0x30] sm:$0xf]
  %v361 = vld [vmem:[%s1 + $0x34] sm:$0xf]
  %v362 = vld [vmem:[%s1 + $0x38] sm:$0xf]
  %v363 = vld [vmem:[%s1 + $0x3c] sm:$0xf]
  %v364 = vld [vmem:[%s1 + $0x40] sm:$0xf]
  %v365 = vld [vmem:[%s1 + $0x44] sm:$0xf]
  %v366 = vld [vmem:[%s1 + $0x48] sm:$0xf]
  %v367 = vld [vmem:[%s1 + $0x4c] sm:$0xf]
  %v368 = vld [vmem:[%s1 + $0x50] sm:$0xf]
  %v369 = vld [vmem:[%s1 + $0x54] sm:$0xf]
  %v370 = vld [vmem:[%s1 + $0x58] sm:$0xf]
  %v371 = vld [vmem:[%s1 + $0x5c] sm:$0xf]
  %v372 = vld [vmem:[%s1 + $0x60] sm:$0xf]
  %v373 = vld [vmem:[%s1 + $0x64] sm:$0xf]
  %v374 = vld [vmem:[%s1 + $0x68] sm:$0xf]
  %v375 = vld [vmem:[%s1 + $0x6c] sm:$0xf]
  %v376 = vld [vmem:[%s1 + $0x70] sm:$0xf]
  %v377 = vld [vmem:[%s1 + $0x74] sm:$0xf]
  %v378 = vld [vmem:[%s1 + $0x78] sm:$0xf]
  %v379 = vld [vmem:[%s1 + $0x7c] sm:$0xf]
  %v380 = vld [vmem:[%s1 + $0x80] sm:$0xf]
  %v381 = vld [vmem:[%s1 + $0x84] sm:$0xf]
  %v382 = vld [vmem:[%s1 + $0x88] sm:$0xf]
  %v383 = vld [vmem:[%s1 + $0x8c] sm:$0xf]
  %v384 = vld [vmem:[%s1 + $0x90] sm:$0xf]
  %v385 = vld [vmem:[%s1 + $0x94] sm:$0xf]
  %v386 = vld [vmem:[%s1 + $0x98] sm:$0xf]
  %v387 = vld [vmem:[%s1 + $0x9c] sm:$0xf]
  %v388 = vld [vmem:[%s1 + $0xa0] sm:$0xf]
  %v389 = vld [vmem:[%s1 + $0xa4] sm:$0xf]
  %v390 = vld [vmem:[%s1 + $0xa8] sm:$0xf]
  %v391 = vld [vmem:[%s1 + $0xac] sm:$0xf]
  %v392 = vld [vmem:[%s1 + $0xb0] sm:$0xf]
  %v393 = vld [vmem:[%s1 + $0xb4] sm:$0xf]
  %v394 = vld [vmem:[%s1 + $0xb8] sm:$0xf]
  %v395 = vld [vmem:[%s1 + $0xbc] sm:$0xf]
  %v396 = vld [vmem:[%s1 + $0xc0] sm:$0xf]
  %v397 = vld [vmem:[%s1 + $0xc4] sm:$0xf]
  %v398 = vld [vmem:[%s1 + $0xc8] sm:$0xf]
  %v399 = vld [vmem:[%s1 + $0xcc] sm:$0xf]
  %v400 = vld [vmem:[%s1 + $0xd0] sm:$0xf]
  %v401 = vld [vmem:[%s1 + $0xd4] sm:$0xf]
  %v402 = vld [vmem:[%s1 + $0xd8] sm:$0xf]
  %v403 = vld [vmem:[%s1 + $0xdc] sm:$0xf]
  %v404 = vld [vmem:[%s1 + $0xe0] sm:$0xf]
  %v405 = vld [vmem:[%s1 + $0xe4] sm:$0xf]
  %v406 = vld [vmem:[%s1 + $0xe8] sm:$0xf]
  %v407 = vld [vmem:[%s1 + $0xec] sm:$0xf]
  %v408 = vld [vmem:[%s1 + $0xf0] sm:$0xf]
  %v409 = vld [vmem:[%s1 + $0xf4] sm:$0xf]
  %v410 = vld [vmem:[%s1 + $0xf8] sm:$0xf]
  %v411 = vld [vmem:[%s1 + $0xfc] sm:$0xf]
  %v476 = vunpack.c.l.b16 %v348
  %v477 = vunpack.c.l.b16 %v349
  %v478 = vunpack.c.l.b16 %v350
  %v479 = vunpack.c.l.b16 %v351
  %v480 = vunpack.c.l.b16 %v352
  %v481 = vunpack.c.l.b16 %v353
  %v482 = vunpack.c.l.b16 %v354
  %v483 = vunpack.c.l.b16 %v355
  %v484 = vunpack.c.l.b16 %v356
  %v485 = vunpack.c.l.b16 %v357
  %v486 = vunpack.c.l.b16 %v358
  %v487 = vunpack.c.l.b16 %v359
  %v488 = vunpack.c.l.b16 %v360
  %v489 = vunpack.c.l.b16 %v361
  %v490 = vunpack.c.l.b16 %v362
  %v491 = vunpack.c.l.b16 %v363
  %v492 = vunpack.c.l.b16 %v364
  %v493 = vunpack.c.l.b16 %v365
  %v494 = vunpack.c.l.b16 %v366
  %v495 = vunpack.c.l.b16 %v367
  %v496 = vunpack.c.l.b16 %v368
  %v497 = vunpack.c.l.b16 %v369
  %v498 = vunpack.c.l.b16 %v370
  %v499 = vunpack.c.l.b16 %v371
  %v500 = vunpack.c.l.b16 %v372
  %v501 = vunpack.c.l.b16 %v373
  %v502 = vunpack.c.l.b16 %v374
  %v503 = vunpack.c.l.b16 %v375
  %v504 = vunpack.c.l.b16 %v376
  %v505 = vunpack.c.l.b16 %v377
  %v506 = vunpack.c.l.b16 %v378
  %v507 = vunpack.c.l.b16 %v379
  %v508 = vunpack.c.l.b16 %v380
  %v509 = vunpack.c.l.b16 %v381
  %v510 = vunpack.c.l.b16 %v382
  %v511 = vunpack.c.l.b16 %v383
  %v512 = vunpack.c.l.b16 %v384
  %v513 = vunpack.c.l.b16 %v385
  %v514 = vunpack.c.l.b16 %v386
  %v515 = vunpack.c.l.b16 %v387
  %v516 = vunpack.c.l.b16 %v388
  %v517 = vunpack.c.l.b16 %v389
  %v518 = vunpack.c.l.b16 %v390
  %v519 = vunpack.c.l.b16 %v391
  %v520 = vunpack.c.l.b16 %v392
  %v521 = vunpack.c.l.b16 %v393
  %v522 = vunpack.c.l.b16 %v394
  %v523 = vunpack.c.l.b16 %v395
  %v524 = vunpack.c.l.b16 %v396
  %v525 = vunpack.c.l.b16 %v397
  %v526 = vunpack.c.l.b16 %v398
  %v527 = vunpack.c.l.b16 %v399
  %v528 = vunpack.c.l.b16 %v400
  %v529 = vunpack.c.l.b16 %v401
  %v530 = vunpack.c.l.b16 %v402
  %v531 = vunpack.c.l.b16 %v403
  %v532 = vunpack.c.l.b16 %v404
  %v533 = vunpack.c.l.b16 %v405
  %v534 = vunpack.c.l.b16 %v406
  %v535 = vunpack.c.l.b16 %v407
  %v536 = vunpack.c.l.b16 %v408
  %v537 = vunpack.c.l.b16 %v409
  %v538 = vunpack.c.l.b16 %v410
  %v539 = vunpack.c.l.b16 %v411
  %v540 = vpack.c.b16 %v477, %v476
  %v541 = vpack.c.b16 %v479, %v478
  %v542 = vpack.c.b16 %v481, %v480
  %v543 = vpack.c.b16 %v483, %v482
  %v544 = vpack.c.b16 %v485, %v484
  %v545 = vpack.c.b16 %v487, %v486
  %v546 = vpack.c.b16 %v489, %v488
  %v547 = vpack.c.b16 %v491, %v490
  %v548 = vpack.c.b16 %v493, %v492
  %v549 = vpack.c.b16 %v495, %v494
  %v550 = vpack.c.b16 %v497, %v496
  %v551 = vpack.c.b16 %v499, %v498
  %v552 = vpack.c.b16 %v501, %v500
  %v553 = vpack.c.b16 %v503, %v502
  %v554 = vpack.c.b16 %v505, %v504
  %v555 = vpack.c.b16 %v507, %v506
  %v556 = vpack.c.b16 %v509, %v508
  %v557 = vpack.c.b16 %v511, %v510
  %v558 = vpack.c.b16 %v513, %v512
  %v559 = vpack.c.b16 %v515, %v514
  %v560 = vpack.c.b16 %v517, %v516
  %v561 = vpack.c.b16 %v519, %v518
  %v562 = vpack.c.b16 %v521, %v520
  %v563 = vpack.c.b16 %v523, %v522
  %v564 = vpack.c.b16 %v525, %v524
  %v565 = vpack.c.b16 %v527, %v526
  %v566 = vpack.c.b16 %v529, %v528
  %v567 = vpack.c.b16 %v531, %v530
  %v568 = vpack.c.b16 %v533, %v532
  %v569 = vpack.c.b16 %v535, %v534
  %v570 = vpack.c.b16 %v537, %v536
  %v571 = vpack.c.b16 %v539, %v538
  %604 = vmatprep.subr.bf16.mxu0 0
  %605 = vmatpush1.bf16.msra.mxu0 %v540
  %606 = vmatprep.subr.bf16.mxu0 0
  %607 = vmatpush1.bf16.msra.mxu0 %v541
  %608 = vmatprep.subr.bf16.mxu0 0
  %609 = vmatpush1.bf16.msra.mxu0 %v542
  %610 = vmatprep.subr.bf16.mxu0 0
  %611 = vmatpush1.bf16.msra.mxu0 %v543
  %612 = vmatprep.subr.bf16.mxu0 0
  %613 = vmatpush1.bf16.msra.mxu0 %v544
  %614 = vmatprep.subr.bf16.mxu0 0
  %615 = vmatpush1.bf16.msra.mxu0 %v545
  %616 = vmatprep.subr.bf16.mxu0 0
  %617 = vmatpush1.bf16.msra.mxu0 %v546
  %618 = vmatprep.subr.bf16.mxu0 0
  %619 = vmatpush1.bf16.msra.mxu0 %v547
  %620 = vmatprep.subr.bf16.mxu0 0
  %621 = vmatpush1.bf16.msra.mxu0 %v548
  %622 = vmatprep.subr.bf16.mxu0 0
  %623 = vmatpush1.bf16.msra.mxu0 %v549
  %624 = vmatprep.subr.bf16.mxu0 0
  %625 = vmatpush1.bf16.msra.mxu0 %v550
  %626 = vmatprep.subr.bf16.mxu0 0
  %627 = vmatpush1.bf16.msra.mxu0 %v551
  %628 = vmatprep.subr.bf16.mxu0 0
  %629 = vmatpush1.bf16.msra.mxu0 %v552
  %630 = vmatprep.subr.bf16.mxu0 0
  %631 = vmatpush1.bf16.msra.mxu0 %v553
  %632 = vmatprep.subr.bf16.mxu0 0
  %633 = vmatpush1.bf16.msra.mxu0 %v554
  %634 = vmatprep.subr.bf16.mxu0 0
  %635 = vmatpush1.bf16.msra.mxu0 %v555
  %636 = vmatprep.mubr.bf16.mxu0 %v157
  %637 = vmatmul.mubr.bf16.gmra.mrb[0].mxu0 %v156
  %v638 = vpop.f32.mrb[0].mxu0
  %v639 = vadd.f32 0.0, %v638
  %v640 = vpop.f32.mrb[0].mxu0
  %v641 = vpop.f32.mrb[0].mxu0
  %v642 = vadd.f32 0.0, %v641
  %v643 = vpop.f32.mrb[0].mxu0
  %644 = vmatprep.mubr.bf16.mxu0 %v161
  %645 = vmatmul.mubr.bf16.gmra.mrb[0].mxu0 %v160
  %v646 = vpop.f32.mrb[0].mxu0
  %v647 = vadd.f32 0.0, %v646
  %v648 = vpop.f32.mrb[0].mxu0
  %v649 = vpop.f32.mrb[0].mxu0
  %v650 = vadd.f32 0.0, %v649
  %v651 = vpop.f32.mrb[0].mxu0
  %652 = vmatprep.mubr.bf16.mxu0 %v165
  %653 = vmatmul.mubr.bf16.gmra.mrb[0].mxu0 %v164
  %v654 = vpop.f32.mrb[0].mxu0
  %v655 = vadd.f32 0.0, %v654
  %v656 = vpop.f32.mrb[0].mxu0
  %v657 = vpop.f32.mrb[0].mxu0
  %v658 = vadd.f32 0.0, %v657
  %v659 = vpop.f32.mrb[0].mxu0
  %660 = vmatprep.mubr.bf16.mxu0 %v169
  %661 = vmatmul.mubr.bf16.gmra.mrb[0].mxu0 %v168
  %v662 = vpop.f32.mrb[0].mxu0
  %v663 = vadd.f32 0.0, %v662
  %v664 = vpop.f32.mrb[0].mxu0
  %v665 = vpop.f32.mrb[0].mxu0
  %v666 = vadd.f32 0.0, %v665
  %v667 = vpop.f32.mrb[0].mxu0
  %668 = vmatprep.mubr.bf16.mxu0 %v173
  %669 = vmatmul.mubr.bf16.gmra.mrb[0].mxu0 %v172
  %v670 = vpop.f32.mrb[0].mxu0
  %v671 = vadd.f32 0.0, %v670
  %v672 = vpop.f32.mrb[0].mxu0
  %v673 = vpop.f32.mrb[0].mxu0
  %v674 = vadd.f32 0.0, %v673
  %v675 = vpop.f32.mrb[0].mxu0
  %676 = vmatprep.mubr.bf16.mxu0 %v177
  %677 = vmatmul.mubr.bf16.gmra.mrb[0].mxu0 %v176
  %v678 = vpop.f32.mrb[0].mxu0
  %v679 = vadd.f32 0.0, %v678
  %v680 = vpop.f32.mrb[0].mxu0
  %v681 = vpop.f32.mrb[0].mxu0
  %v682 = vadd.f32 0.0, %v681
  %v683 = vpop.f32.mrb[0].mxu0
  %684 = vmatprep.mubr.bf16.mxu0 %v181
  %685 = vmatmul.mubr.bf16.gmra.mrb[0].mxu0 %v180
  %v686 = vpop.f32.mrb[0].mxu0
  %v687 = vadd.f32 0.0, %v686
  %v688 = vpop.f32.mrb[0].mxu0
  %v689 = vpop.f32.mrb[0].mxu0
  %v690 = vadd.f32 0.0, %v689
  %v691 = vpop.f32.mrb[0].mxu0
  %692 = vmatprep.mubr.bf16.mxu0 %v185
  %693 = vmatmul.mubr.bf16.gmra.mrb[0].mxu0 %v184
  %v694 = vpop.f32.mrb[0].mxu0
  %v695 = vadd.f32 0.0, %v694
  %v696 = vpop.f32.mrb[0].mxu0
  %v697 = vpop.f32.mrb[0].mxu0
  %v698 = vadd.f32 0.0, %v697
  %v699 = vpop.f32.mrb[0].mxu0
  %700 = vmatprep.mubr.bf16.mxu0 %v189
  %701 = vmatmul.mubr.bf16.gmra.mrb[0].mxu0 %v188
  %v702 = vpop.f32.mrb[0].mxu0
  %v703 = vadd.f32 0.0, %v702
  %v704 = vpop.f32.mrb[0].mxu0
  %v705 = vpop.f32.mrb[0].mxu0
  %v706 = vadd.f32 0.0, %v705
  %v707 = vpop.f32.mrb[0].mxu0
  %708 = vmatprep.mubr.bf16.mxu0 %v193
  %709 = vmatmul.mubr.bf16.gmra.mrb[0].mxu0 %v192
  %v710 = vpop.f32.mrb[0].mxu0
  %v711 = vadd.f32 0.0, %v710
  %v712 = vpop.f32.mrb[0].mxu0
  %v713 = vpop.f32.mrb[0].mxu0
  %v714 = vadd.f32 0.0, %v713
  %v715 = vpop.f32.mrb[0].mxu0
  %716 = vmatprep.mubr.bf16.mxu0 %v197
  %717 = vmatmul.mubr.bf16.gmra.mrb[0].mxu0 %v196
  %v718 = vpop.f32.mrb[0].mxu0
  %v719 = vadd.f32 0.0, %v718
  %v720 = vpop.f32.mrb[0].mxu0
  %v721 = vpop.f32.mrb[0].mxu0
  %v722 = vadd.f32 0.0, %v721
  %v723 = vpop.f32.mrb[0].mxu0
  %724 = vmatprep.mubr.bf16.mxu0 %v201
  %725 = vmatmul.mubr.bf16.gmra.mrb[0].mxu0 %v200
  %v726 = vpop.f32.mrb[0].mxu0
  %v727 = vadd.f32 0.0, %v726
  %v728 = vpop.f32.mrb[0].mxu0
  %v729 = vpop.f32.mrb[0].mxu0
  %v730 = vadd.f32 0.0, %v729
  %v731 = vpop.f32.mrb[0].mxu0
  %732 = vmatprep.mubr.bf16.mxu0 %v205
  %733 = vmatmul.mubr.bf16.gmra.mrb[0].mxu0 %v204
  %v734 = vpop.f32.mrb[0].mxu0
  %v735 = vadd.f32 0.0, %v734
  %v736 = vpop.f32.mrb[0].mxu0
  %v737 = vpop.f32.mrb[0].mxu0
  %v738 = vadd.f32 0.0, %v737
  %v739 = vpop.f32.mrb[0].mxu0
  %740 = vmatprep.mubr.bf16.mxu0 %v209
  %741 = vmatmul.mubr.bf16.gmra.mrb[0].mxu0 %v208
  %v742 = vpop.f32.mrb[0].mxu0
  %v743 = vadd.f32 0.0, %v742
  %v744 = vpop.f32.mrb[0].mxu0
  %v745 = vpop.f32.mrb[0].mxu0
  %v746 = vadd.f32 0.0, %v745
  %v747 = vpop.f32.mrb[0].mxu0
  %748 = vmatprep.mubr.bf16.mxu0 %v213
  %749 = vmatmul.mubr.bf16.gmra.mrb[0].mxu0 %v212
  %v750 = vpop.f32.mrb[0].mxu0
  %v751 = vadd.f32 0.0, %v750
  %v752 = vpop.f32.mrb[0].mxu0
  %v753 = vpop.f32.mrb[0].mxu0
  %v754 = vadd.f32 0.0, %v753
  %v755 = vpop.f32.mrb[0].mxu0
  %756 = vmatprep.mubr.bf16.mxu0 %v217
  %757 = vmatmul.mubr.bf16.gmra.mrb[0].mxu0 %v216
  %v758 = vpop.f32.mrb[0].mxu0
  %v759 = vadd.f32 0.0, %v758
  %v760 = vpop.f32.mrb[0].mxu0
  %v761 = vpop.f32.mrb[0].mxu0
  %v762 = vadd.f32 0.0, %v761
  %v763 = vpop.f32.mrb[0].mxu0
  %764 = vmatprep.mubr.bf16.mxu0 %v221
  %765 = vmatmul.mubr.bf16.gmra.mrb[0].mxu0 %v220
  %v766 = vpop.f32.mrb[0].mxu0
  %v767 = vadd.f32 0.0, %v766
  %v768 = vpop.f32.mrb[0].mxu0
  %v769 = vpop.f32.mrb[0].mxu0
  %v770 = vadd.f32 0.0, %v769
  %v771 = vpop.f32.mrb[0].mxu0
  %772 = vmatprep.mubr.bf16.mxu0 %v225
  %773 = vmatmul.mubr.bf16.gmra.mrb[0].mxu0 %v224
  %v774 = vpop.f32.mrb[0].mxu0
  %v775 = vadd.f32 0.0, %v774
  %v776 = vpop.f32.mrb[0].mxu0
  %v777 = vpop.f32.mrb[0].mxu0
  %v778 = vadd.f32 0.0, %v777
  %v779 = vpop.f32.mrb[0].mxu0
  %780 = vmatprep.mubr.bf16.mxu0 %v229
  %781 = vmatmul.mubr.bf16.gmra.mrb[0].mxu0 %v228
  %v782 = vpop.f32.mrb[0].mxu0
  %v783 = vadd.f32 0.0, %v782
  %v784 = vpop.f32.mrb[0].mxu0
  %v785 = vpop.f32.mrb[0].mxu0
  %v786 = vadd.f32 0.0, %v785
  %v787 = vpop.f32.mrb[0].mxu0
  %788 = vmatprep.mubr.bf16.mxu0 %v233
  %789 = vmatmul.mubr.bf16.gmra.mrb[0].mxu0 %v232
  %v790 = vpop.f32.mrb[0].mxu0
  %v791 = vadd.f32 0.0, %v790
  %v792 = vpop.f32.mrb[0].mxu0
  %v793 = vpop.f32.mrb[0].mxu0
  %v794 = vadd.f32 0.0, %v793
  %v795 = vpop.f32.mrb[0].mxu0
  %796 = vmatprep.mubr.bf16.mxu0 %v237
  %797 = vmatmul.mubr.bf16.gmra.mrb[0].mxu0 %v236
  %v798 = vpop.f32.mrb[0].mxu0
  %v799 = vadd.f32 0.0, %v798
  %v800 = vpop.f32.mrb[0].mxu0
  %v801 = vpop.f32.mrb[0].mxu0
  %v802 = vadd.f32 0.0, %v801
  %v803 = vpop.f32.mrb[0].mxu0
  %804 = vmatprep.mubr.bf16.mxu0 %v241
  %805 = vmatmul.mubr.bf16.gmra.mrb[0].mxu0 %v240
  %v806 = vpop.f32.mrb[0].mxu0
  %v807 = vadd.f32 0.0, %v806
  %v808 = vpop.f32.mrb[0].mxu0
  %v809 = vpop.f32.mrb[0].mxu0
  %v810 = vadd.f32 0.0, %v809
  %v811 = vpop.f32.mrb[0].mxu0
  %812 = vmatprep.mubr.bf16.mxu0 %v245
  %813 = vmatmul.mubr.bf16.gmra.mrb[0].mxu0 %v244
  %v814 = vpop.f32.mrb[0].mxu0
  %v815 = vadd.f32 0.0, %v814
  %v816 = vpop.f32.mrb[0].mxu0
  %v817 = vpop.f32.mrb[0].mxu0
  %v818 = vadd.f32 0.0, %v817
  %v819 = vpop.f32.mrb[0].mxu0
  %820 = vmatprep.mubr.bf16.mxu0 %v249
  %821 = vmatmul.mubr.bf16.gmra.mrb[0].mxu0 %v248
  %v822 = vpop.f32.mrb[0].mxu0
  %v823 = vadd.f32 0.0, %v822
  %v824 = vpop.f32.mrb[0].mxu0
  %v825 = vpop.f32.mrb[0].mxu0
  %v826 = vadd.f32 0.0, %v825
  %v827 = vpop.f32.mrb[0].mxu0
  %828 = vmatprep.mubr.bf16.mxu0 %v253
  %829 = vmatmul.mubr.bf16.gmra.mrb[0].mxu0 %v252
  %v830 = vpop.f32.mrb[0].mxu0
  %v831 = vadd.f32 0.0, %v830
  %v832 = vpop.f32.mrb[0].mxu0
  %v833 = vpop.f32.mrb[0].mxu0
  %v834 = vadd.f32 0.0, %v833
  %v835 = vpop.f32.mrb[0].mxu0
  %836 = vmatprep.mubr.bf16.mxu0 %v257
  %837 = vmatmul.mubr.bf16.gmra.mrb[0].mxu0 %v256
  %v838 = vpop.f32.mrb[0].mxu0
  %v839 = vadd.f32 0.0, %v838
  %v840 = vpop.f32.mrb[0].mxu0
  %v841 = vpop.f32.mrb[0].mxu0
  %v842 = vadd.f32 0.0, %v841
  %v843 = vpop.f32.mrb[0].mxu0
  %844 = vmatprep.mubr.bf16.mxu0 %v261
  %845 = vmatmul.mubr.bf16.gmra.mrb[0].mxu0 %v260
  %v846 = vpop.f32.mrb[0].mxu0
  %v847 = vadd.f32 0.0, %v846
  %v848 = vpop.f32.mrb[0].mxu0
  %v849 = vpop.f32.mrb[0].mxu0
  %v850 = vadd.f32 0.0, %v849
  %v851 = vpop.f32.mrb[0].mxu0
  %852 = vmatprep.mubr.bf16.mxu0 %v265
  %853 = vmatmul.mubr.bf16.gmra.mrb[0].mxu0 %v264
  %v854 = vpop.f32.mrb[0].mxu0
  %v855 = vadd.f32 0.0, %v854
  %v856 = vpop.f32.mrb[0].mxu0
  %v857 = vpop.f32.mrb[0].mxu0
  %v858 = vadd.f32 0.0, %v857
  %v859 = vpop.f32.mrb[0].mxu0
  %860 = vmatprep.mubr.bf16.mxu0 %v269
  %861 = vmatmul.mubr.bf16.gmra.mrb[0].mxu0 %v268
  %v862 = vpop.f32.mrb[0].mxu0
  %v863 = vadd.f32 0.0, %v862
  %v864 = vpop.f32.mrb[0].mxu0
  %v865 = vpop.f32.mrb[0].mxu0
  %v866 = vadd.f32 0.0, %v865
  %v867 = vpop.f32.mrb[0].mxu0
  %868 = vmatprep.mubr.bf16.mxu0 %v273
  %869 = vmatmul.mubr.bf16.gmra.mrb[0].mxu0 %v272
  %v870 = vpop.f32.mrb[0].mxu0
  %v871 = vadd.f32 0.0, %v870
  %v872 = vpop.f32.mrb[0].mxu0
  %v873 = vpop.f32.mrb[0].mxu0
  %v874 = vadd.f32 0.0, %v873
  %v875 = vpop.f32.mrb[0].mxu0
  %876 = vmatprep.mubr.bf16.mxu0 %v277
  %877 = vmatmul.mubr.bf16.gmra.mrb[0].mxu0 %v276
  %v878 = vpop.f32.mrb[0].mxu0
  %v879 = vadd.f32 0.0, %v878
  %v880 = vpop.f32.mrb[0].mxu0
  %v881 = vpop.f32.mrb[0].mxu0
  %v882 = vadd.f32 0.0, %v881
  %v883 = vpop.f32.mrb[0].mxu0
  %884 = vmatprep.mubr.bf16.mxu0 %v281
  %885 = vmatmul.mubr.bf16.gmra.mrb[0].mxu0 %v280
  %v886 = vpop.f32.mrb[0].mxu0
  %v887 = vadd.f32 0.0, %v886
  %v888 = vpop.f32.mrb[0].mxu0
  %v889 = vpop.f32.mrb[0].mxu0
  %v890 = vadd.f32 0.0, %v889
  %v891 = vpop.f32.mrb[0].mxu0
  %892 = vdwg.mxu0
  %893 = vmatprep.subr.bf16.mxu0 0
  %894 = vmatpush1.bf16.msra.mxu0 %v556
  %895 = vmatprep.subr.bf16.mxu0 0
  %896 = vmatpush1.bf16.msra.mxu0 %v557
  %897 = vmatprep.subr.bf16.mxu0 0
  %898 = vmatpush1.bf16.msra.mxu0 %v558
  %899 = vmatprep.subr.bf16.mxu0 0
  %900 = vmatpush1.bf16.msra.mxu0 %v559
  %901 = vmatprep.subr.bf16.mxu0 0
  %902 = vmatpush1.bf16.msra.mxu0 %v560
  %903 = vmatprep.subr.bf16.mxu0 0
  %904 = vmatpush1.bf16.msra.mxu0 %v561
  %905 = vmatprep.subr.bf16.mxu0 0
  %906 = vmatpush1.bf16.msra.mxu0 %v562
  %907 = vmatprep.subr.bf16.mxu0 0
  %908 = vmatpush1.bf16.msra.mxu0 %v563
  %909 = vmatprep.subr.bf16.mxu0 0
  %910 = vmatpush1.bf16.msra.mxu0 %v564
  %911 = vmatprep.subr.bf16.mxu0 0
  %912 = vmatpush1.bf16.msra.mxu0 %v565
  %913 = vmatprep.subr.bf16.mxu0 0
  %914 = vmatpush1.bf16.msra.mxu0 %v566
  %915 = vmatprep.subr.bf16.mxu0 0
  %916 = vmatpush1.bf16.msra.mxu0 %v567
  %917 = vmatprep.subr.bf16.mxu0 0
  %918 = vmatpush1.bf16.msra.mxu0 %v568
  %919 = vmatprep.subr.bf16.mxu0 0
  %920 = vmatpush1.bf16.msra.mxu0 %v569
  %921 = vmatprep.subr.bf16.mxu0 0
  %922 = vmatpush1.bf16.msra.mxu0 %v570
  %923 = vmatprep.subr.bf16.mxu0 0
  %924 = vmatpush1.bf16.msra.mxu0 %v571
  %925 = vmatprep.mubr.bf16.mxu0 %v159
  %926 = vmatmul.mubr.bf16.gmra.mrb[0].mxu0 %v158
  %v927 = vpop.f32.mrb[0].mxu0
  %v928 = vadd.f32 %v639, %v927
  %v929 = vpop.f32.mrb[0].mxu0
  %v930 = vpop.f32.mrb[0].mxu0
  %v931 = vadd.f32 %v642, %v930
  %v932 = vpop.f32.mrb[0].mxu0
  %933 = vmatprep.mubr.bf16.mxu0 %v163
  %934 = vmatmul.mubr.bf16.gmra.mrb[0].mxu0 %v162
  %v935 = vpop.f32.mrb[0].mxu0
  %v936 = vadd.f32 %v647, %v935
  %v937 = vpop.f32.mrb[0].mxu0
  %v938 = vpop.f32.mrb[0].mxu0
  %v939 = vadd.f32 %v650, %v938
  %v940 = vpop.f32.mrb[0].mxu0
  %941 = vmatprep.mubr.bf16.mxu0 %v167
  %942 = vmatmul.mubr.bf16.gmra.mrb[0].mxu0 %v166
  %v943 = vpop.f32.mrb[0].mxu0
  %v944 = vadd.f32 %v655, %v943
  %v945 = vpop.f32.mrb[0].mxu0
  %v946 = vpop.f32.mrb[0].mxu0
  %v947 = vadd.f32 %v658, %v946
  %v948 = vpop.f32.mrb[0].mxu0
  %949 = vmatprep.mubr.bf16.mxu0 %v171
  %950 = vmatmul.mubr.bf16.gmra.mrb[0].mxu0 %v170
  %v951 = vpop.f32.mrb[0].mxu0
  %v952 = vadd.f32 %v663, %v951
  %v953 = vpop.f32.mrb[0].mxu0
  %v954 = vpop.f32.mrb[0].mxu0
  %v955 = vadd.f32 %v666, %v954
  %v956 = vpop.f32.mrb[0].mxu0
  %957 = vmatprep.mubr.bf16.mxu0 %v175
  %958 = vmatmul.mubr.bf16.gmra.mrb[0].mxu0 %v174
  %v959 = vpop.f32.mrb[0].mxu0
  %v960 = vadd.f32 %v671, %v959
  %v961 = vpop.f32.mrb[0].mxu0
  %v962 = vpop.f32.mrb[0].mxu0
  %v963 = vadd.f32 %v674, %v962
  %v964 = vpop.f32.mrb[0].mxu0
  %965 = vmatprep.mubr.bf16.mxu0 %v179
  %966 = vmatmul.mubr.bf16.gmra.mrb[0].mxu0 %v178
  %v967 = vpop.f32.mrb[0].mxu0
  %v968 = vadd.f32 %v679, %v967
  %v969 = vpop.f32.mrb[0].mxu0
  %v970 = vpop.f32.mrb[0].mxu0
  %v971 = vadd.f32 %v682, %v970
  %v972 = vpop.f32.mrb[0].mxu0
  %973 = vmatprep.mubr.bf16.mxu0 %v183
  %974 = vmatmul.mubr.bf16.gmra.mrb[0].mxu0 %v182
  %v975 = vpop.f32.mrb[0].mxu0
  %v976 = vadd.f32 %v687, %v975
  %v977 = vpop.f32.mrb[0].mxu0
  %v978 = vpop.f32.mrb[0].mxu0
  %v979 = vadd.f32 %v690, %v978
  %v980 = vpop.f32.mrb[0].mxu0
  %981 = vmatprep.mubr.bf16.mxu0 %v187
  %982 = vmatmul.mubr.bf16.gmra.mrb[0].mxu0 %v186
  %v983 = vpop.f32.mrb[0].mxu0
  %v984 = vadd.f32 %v695, %v983
  %v985 = vpop.f32.mrb[0].mxu0
  %v986 = vpop.f32.mrb[0].mxu0
  %v987 = vadd.f32 %v698, %v986
  %v988 = vpop.f32.mrb[0].mxu0
  %989 = vmatprep.mubr.bf16.mxu0 %v191
  %990 = vmatmul.mubr.bf16.gmra.mrb[0].mxu0 %v190
  %v991 = vpop.f32.mrb[0].mxu0
  %v992 = vadd.f32 %v703, %v991
  %v993 = vpop.f32.mrb[0].mxu0
  %v994 = vpop.f32.mrb[0].mxu0
  %v995 = vadd.f32 %v706, %v994
  %v996 = vpop.f32.mrb[0].mxu0
  %997 = vmatprep.mubr.bf16.mxu0 %v195
  %998 = vmatmul.mubr.bf16.gmra.mrb[0].mxu0 %v194
  %v999 = vpop.f32.mrb[0].mxu0
  %v1000 = vadd.f32 %v711, %v999
  %v1001 = vpop.f32.mrb[0].mxu0
  %v1002 = vpop.f32.mrb[0].mxu0
  %v1003 = vadd.f32 %v714, %v1002
  %v1004 = vpop.f32.mrb[0].mxu0
  %1005 = vmatprep.mubr.bf16.mxu0 %v199
  %1006 = vmatmul.mubr.bf16.gmra.mrb[0].mxu0 %v198
  %v1007 = vpop.f32.mrb[0].mxu0
  %v1008 = vadd.f32 %v719, %v1007
  %v1009 = vpop.f32.mrb[0].mxu0
  %v1010 = vpop.f32.mrb[0].mxu0
  %v1011 = vadd.f32 %v722, %v1010
  %v1012 = vpop.f32.mrb[0].mxu0
  %1013 = vmatprep.mubr.bf16.mxu0 %v203
  %1014 = vmatmul.mubr.bf16.gmra.mrb[0].mxu0 %v202
  %v1015 = vpop.f32.mrb[0].mxu0
  %v1016 = vadd.f32 %v727, %v1015
  %v1017 = vpop.f32.mrb[0].mxu0
  %v1018 = vpop.f32.mrb[0].mxu0
  %v1019 = vadd.f32 %v730, %v1018
  %v1020 = vpop.f32.mrb[0].mxu0
  %1021 = vmatprep.mubr.bf16.mxu0 %v207
  %1022 = vmatmul.mubr.bf16.gmra.mrb[0].mxu0 %v206
  %v1023 = vpop.f32.mrb[0].mxu0
  %v1024 = vadd.f32 %v735, %v1023
  %v1025 = vpop.f32.mrb[0].mxu0
  %v1026 = vpop.f32.mrb[0].mxu0
  %v1027 = vadd.f32 %v738, %v1026
  %v1028 = vpop.f32.mrb[0].mxu0
  %1029 = vmatprep.mubr.bf16.mxu0 %v211
  %1030 = vmatmul.mubr.bf16.gmra.mrb[0].mxu0 %v210
  %v1031 = vpop.f32.mrb[0].mxu0
  %v1032 = vadd.f32 %v743, %v1031
  %v1033 = vpop.f32.mrb[0].mxu0
  %v1034 = vpop.f32.mrb[0].mxu0
  %v1035 = vadd.f32 %v746, %v1034
  %v1036 = vpop.f32.mrb[0].mxu0
  %1037 = vmatprep.mubr.bf16.mxu0 %v215
  %1038 = vmatmul.mubr.bf16.gmra.mrb[0].mxu0 %v214
  %v1039 = vpop.f32.mrb[0].mxu0
  %v1040 = vadd.f32 %v751, %v1039
  %v1041 = vpop.f32.mrb[0].mxu0
  %v1042 = vpop.f32.mrb[0].mxu0
  %v1043 = vadd.f32 %v754, %v1042
  %v1044 = vpop.f32.mrb[0].mxu0
  %1045 = vmatprep.mubr.bf16.mxu0 %v219
  %1046 = vmatmul.mubr.bf16.gmra.mrb[0].mxu0 %v218
  %v1047 = vpop.f32.mrb[0].mxu0
  %v1048 = vadd.f32 %v759, %v1047
  %v1049 = vpop.f32.mrb[0].mxu0
  %v1050 = vpop.f32.mrb[0].mxu0
  %v1051 = vadd.f32 %v762, %v1050
  %v1052 = vpop.f32.mrb[0].mxu0
  %1053 = vmatprep.mubr.bf16.mxu0 %v223
  %1054 = vmatmul.mubr.bf16.gmra.mrb[0].mxu0 %v222
  %v1055 = vpop.f32.mrb[0].mxu0
  %v1056 = vadd.f32 %v767, %v1055
  %v1057 = vpop.f32.mrb[0].mxu0
  %v1058 = vpop.f32.mrb[0].mxu0
  %v1059 = vadd.f32 %v770, %v1058
  %v1060 = vpop.f32.mrb[0].mxu0
  %1061 = vmatprep.mubr.bf16.mxu0 %v227
  %1062 = vmatmul.mubr.bf16.gmra.mrb[0].mxu0 %v226
  %v1063 = vpop.f32.mrb[0].mxu0
  %v1064 = vadd.f32 %v775, %v1063
  %v1065 = vpop.f32.mrb[0].mxu0
  %v1066 = vpop.f32.mrb[0].mxu0
  %v1067 = vadd.f32 %v778, %v1066
  %v1068 = vpop.f32.mrb[0].mxu0
  %1069 = vmatprep.mubr.bf16.mxu0 %v231
  %1070 = vmatmul.mubr.bf16.gmra.mrb[0].mxu0 %v230
  %v1071 = vpop.f32.mrb[0].mxu0
  %v1072 = vadd.f32 %v783, %v1071
  %v1073 = vpop.f32.mrb[0].mxu0
  %v1074 = vpop.f32.mrb[0].mxu0
  %v1075 = vadd.f32 %v786, %v1074
  %v1076 = vpop.f32.mrb[0].mxu0
  %1077 = vmatprep.mubr.bf16.mxu0 %v235
  %1078 = vmatmul.mubr.bf16.gmra.mrb[0].mxu0 %v234
  %v1079 = vpop.f32.mrb[0].mxu0
  %v1080 = vadd.f32 %v791, %v1079
  %v1081 = vpop.f32.mrb[0].mxu0
  %v1082 = vpop.f32.mrb[0].mxu0
  %v1083 = vadd.f32 %v794, %v1082
  %v1084 = vpop.f32.mrb[0].mxu0
  %1085 = vmatprep.mubr.bf16.mxu0 %v239
  %1086 = vmatmul.mubr.bf16.gmra.mrb[0].mxu0 %v238
  %v1087 = vpop.f32.mrb[0].mxu0
  %v1088 = vadd.f32 %v799, %v1087
  %v1089 = vpop.f32.mrb[0].mxu0
  %v1090 = vpop.f32.mrb[0].mxu0
  %v1091 = vadd.f32 %v802, %v1090
  %v1092 = vpop.f32.mrb[0].mxu0
  %1093 = vmatprep.mubr.bf16.mxu0 %v243
  %1094 = vmatmul.mubr.bf16.gmra.mrb[0].mxu0 %v242
  %v1095 = vpop.f32.mrb[0].mxu0
  %v1096 = vadd.f32 %v807, %v1095
  %v1097 = vpop.f32.mrb[0].mxu0
  %v1098 = vpop.f32.mrb[0].mxu0
  %v1099 = vadd.f32 %v810, %v1098
  %v1100 = vpop.f32.mrb[0].mxu0
  %1101 = vmatprep.mubr.bf16.mxu0 %v247
  %1102 = vmatmul.mubr.bf16.gmra.mrb[0].mxu0 %v246
  %v1103 = vpop.f32.mrb[0].mxu0
  %v1104 = vadd.f32 %v815, %v1103
  %v1105 = vpop.f32.mrb[0].mxu0
  %v1106 = vpop.f32.mrb[0].mxu0
  %v1107 = vadd.f32 %v818, %v1106
  %v1108 = vpop.f32.mrb[0].mxu0
  %1109 = vmatprep.mubr.bf16.mxu0 %v251
  %1110 = vmatmul.mubr.bf16.gmra.mrb[0].mxu0 %v250
  %v1111 = vpop.f32.mrb[0].mxu0
  %v1112 = vadd.f32 %v823, %v1111
  %v1113 = vpop.f32.mrb[0].mxu0
  %v1114 = vpop.f32.mrb[0].mxu0
  %v1115 = vadd.f32 %v826, %v1114
  %v1116 = vpop.f32.mrb[0].mxu0
  %1117 = vmatprep.mubr.bf16.mxu0 %v255
  %1118 = vmatmul.mubr.bf16.gmra.mrb[0].mxu0 %v254
  %v1119 = vpop.f32.mrb[0].mxu0
  %v1120 = vadd.f32 %v831, %v1119
  %v1121 = vpop.f32.mrb[0].mxu0
  %v1122 = vpop.f32.mrb[0].mxu0
  %v1123 = vadd.f32 %v834, %v1122
  %v1124 = vpop.f32.mrb[0].mxu0
  %1125 = vmatprep.mubr.bf16.mxu0 %v259
  %1126 = vmatmul.mubr.bf16.gmra.mrb[0].mxu0 %v258
  %v1127 = vpop.f32.mrb[0].mxu0
  %v1128 = vadd.f32 %v839, %v1127
  %v1129 = vpop.f32.mrb[0].mxu0
  %v1130 = vpop.f32.mrb[0].mxu0
  %v1131 = vadd.f32 %v842, %v1130
  %v1132 = vpop.f32.mrb[0].mxu0
  %1133 = vmatprep.mubr.bf16.mxu0 %v263
  %1134 = vmatmul.mubr.bf16.gmra.mrb[0].mxu0 %v262
  %v1135 = vpop.f32.mrb[0].mxu0
  %v1136 = vadd.f32 %v847, %v1135
  %v1137 = vpop.f32.mrb[0].mxu0
  %v1138 = vpop.f32.mrb[0].mxu0
  %v1139 = vadd.f32 %v850, %v1138
  %v1140 = vpop.f32.mrb[0].mxu0
  %1141 = vmatprep.mubr.bf16.mxu0 %v267
  %1142 = vmatmul.mubr.bf16.gmra.mrb[0].mxu0 %v266
  %v1143 = vpop.f32.mrb[0].mxu0
  %v1144 = vadd.f32 %v855, %v1143
  %v1145 = vpop.f32.mrb[0].mxu0
  %v1146 = vpop.f32.mrb[0].mxu0
  %v1147 = vadd.f32 %v858, %v1146
  %v1148 = vpop.f32.mrb[0].mxu0
  %1149 = vmatprep.mubr.bf16.mxu0 %v271
  %1150 = vmatmul.mubr.bf16.gmra.mrb[0].mxu0 %v270
  %v1151 = vpop.f32.mrb[0].mxu0
  %v1152 = vadd.f32 %v863, %v1151
  %v1153 = vpop.f32.mrb[0].mxu0
  %v1154 = vpop.f32.mrb[0].mxu0
  %v1155 = vadd.f32 %v866, %v1154
  %v1156 = vpop.f32.mrb[0].mxu0
  %1157 = vmatprep.mubr.bf16.mxu0 %v275
  %1158 = vmatmul.mubr.bf16.gmra.mrb[0].mxu0 %v274
  %v1159 = vpop.f32.mrb[0].mxu0
  %v1160 = vadd.f32 %v871, %v1159
  %v1161 = vpop.f32.mrb[0].mxu0
  %v1162 = vpop.f32.mrb[0].mxu0
  %v1163 = vadd.f32 %v874, %v1162
  %v1164 = vpop.f32.mrb[0].mxu0
  %1165 = vmatprep.mubr.bf16.mxu0 %v279
  %1166 = vmatmul.mubr.bf16.gmra.mrb[0].mxu0 %v278
  %v1167 = vpop.f32.mrb[0].mxu0
  %v1168 = vadd.f32 %v879, %v1167
  %v1169 = vpop.f32.mrb[0].mxu0
  %v1170 = vpop.f32.mrb[0].mxu0
  %v1171 = vadd.f32 %v882, %v1170
  %v1172 = vpop.f32.mrb[0].mxu0
  %1173 = vmatprep.mubr.bf16.mxu0 %v283
  %1174 = vmatmul.mubr.bf16.gmra.mrb[0].mxu0 %v282
  %v1175 = vpop.f32.mrb[0].mxu0
  %v1176 = vadd.f32 %v887, %v1175
  %v1177 = vpop.f32.mrb[0].mxu0
  %v1178 = vpop.f32.mrb[0].mxu0
  %v1179 = vadd.f32 %v890, %v1178
  %v1180 = vpop.f32.mrb[0].mxu0
  %1181 = vdwg.mxu0
  %v1182 = vadd.f32 %v284, %v928
  %v1183 = vadd.f32 %v285, %v931
  %v1184 = vadd.f32 %v286, %v936
  %v1185 = vadd.f32 %v287, %v939
  %v1186 = vadd.f32 %v288, %v944
  %v1187 = vadd.f32 %v289, %v947
  %v1188 = vadd.f32 %v290, %v952
  %v1189 = vadd.f32 %v291, %v955
  %v1190 = vadd.f32 %v292, %v960
  %v1191 = vadd.f32 %v293, %v963
  %v1192 = vadd.f32 %v294, %v968
  %v1193 = vadd.f32 %v295, %v971
  %v1194 = vadd.f32 %v296, %v976
  %v1195 = vadd.f32 %v297, %v979
  %v1196 = vadd.f32 %v298, %v984
  %v1197 = vadd.f32 %v299, %v987
  %v1198 = vadd.f32 %v300, %v992
  %v1199 = vadd.f32 %v301, %v995
  %v1200 = vadd.f32 %v302, %v1000
  %v1201 = vadd.f32 %v303, %v1003
  %v1202 = vadd.f32 %v304, %v1008
  %v1203 = vadd.f32 %v305, %v1011
  %v1204 = vadd.f32 %v306, %v1016
  %v1205 = vadd.f32 %v307, %v1019
  %v1206 = vadd.f32 %v308, %v1024
  %v1207 = vadd.f32 %v309, %v1027
  %v1208 = vadd.f32 %v310, %v1032
  %v1209 = vadd.f32 %v311, %v1035
  %v1210 = vadd.f32 %v312, %v1040
  %v1211 = vadd.f32 %v313, %v1043
  %v1212 = vadd.f32 %v314, %v1048
  %v1213 = vadd.f32 %v315, %v1051
  %v1214 = vadd.f32 %v316, %v1056
  %v1215 = vadd.f32 %v317, %v1059
  %v1216 = vadd.f32 %v318, %v1064
  %v1217 = vadd.f32 %v319, %v1067
  %v1218 = vadd.f32 %v320, %v1072
  %v1219 = vadd.f32 %v321, %v1075
  %v1220 = vadd.f32 %v322, %v1080
  %v1221 = vadd.f32 %v323, %v1083
  %v1222 = vadd.f32 %v324, %v1088
  %v1223 = vadd.f32 %v325, %v1091
  %v1224 = vadd.f32 %v326, %v1096
  %v1225 = vadd.f32 %v327, %v1099
  %v1226 = vadd.f32 %v328, %v1104
  %v1227 = vadd.f32 %v329, %v1107
  %v1228 = vadd.f32 %v330, %v1112
  %v1229 = vadd.f32 %v331, %v1115
  %v1230 = vadd.f32 %v332, %v1120
  %v1231 = vadd.f32 %v333, %v1123
  %v1232 = vadd.f32 %v334, %v1128
  %v1233 = vadd.f32 %v335, %v1131
  %v1234 = vadd.f32 %v336, %v1136
  %v1235 = vadd.f32 %v337, %v1139
  %v1236 = vadd.f32 %v338, %v1144
  %v1237 = vadd.f32 %v339, %v1147
  %v1238 = vadd.f32 %v340, %v1152
  %v1239 = vadd.f32 %v341, %v1155
  %v1240 = vadd.f32 %v342, %v1160
  %v1241 = vadd.f32 %v343, %v1163
  %v1242 = vadd.f32 %v344, %v1168
  %v1243 = vadd.f32 %v345, %v1171
  %v1244 = vadd.f32 %v346, %v1176
  %v1245 = vadd.f32 %v347, %v1179
  %1246 = vst [vmem:[#allocation2] sm:$0xff] %v1182
  %1247 = vst [vmem:[#allocation2 + $0x8] sm:$0xff] %v1183
  %1248 = vst [vmem:[#allocation2 + $0x10] sm:$0xff] %v1184
  %1249 = vst [vmem:[#allocation2 + $0x18] sm:$0xff] %v1185
  %1250 = vst [vmem:[#allocation2 + $0x20] sm:$0xff] %v1186
  %1251 = vst [vmem:[#allocation2 + $0x28] sm:$0xff] %v1187
  %1252 = vst [vmem:[#allocation2 + $0x30] sm:$0xff] %v1188
  %1253 = vst [vmem:[#allocation2 + $0x38] sm:$0xff] %v1189
  %1254 = vst [vmem:[#allocation2 + $0x40] sm:$0xff] %v1190
  %1255 = vst [vmem:[#allocation2 + $0x48] sm:$0xff] %v1191
  %1256 = vst [vmem:[#allocation2 + $0x50] sm:$0xff] %v1192
  %1257 = vst [vmem:[#allocation2 + $0x58] sm:$0xff] %v1193
  %1258 = vst [vmem:[#allocation2 + $0x60] sm:$0xff] %v1194
  %1259 = vst [vmem:[#allocation2 + $0x68] sm:$0xff] %v1195
  %1260 = vst [vmem:[#allocation2 + $0x70] sm:$0xff] %v1196
  %1261 = vst [vmem:[#allocation2 + $0x78] sm:$0xff] %v1197
  %1262 = vst [vmem:[#allocation2 + $0x80] sm:$0xff] %v1198
  %1263 = vst [vmem:[#allocation2 + $0x88] sm:$0xff] %v1199
  %1264 = vst [vmem:[#allocation2 + $0x90] sm:$0xff] %v1200
  %1265 = vst [vmem:[#allocation2 + $0x98] sm:$0xff] %v1201
  %1266 = vst [vmem:[#allocation2 + $0xa0] sm:$0xff] %v1202
  %1267 = vst [vmem:[#allocation2 + $0xa8] sm:$0xff] %v1203
  %1268 = vst [vmem:[#allocation2 + $0xb0] sm:$0xff] %v1204
  %1269 = vst [vmem:[#allocation2 + $0xb8] sm:$0xff] %v1205
  %1270 = vst [vmem:[#allocation2 + $0xc0] sm:$0xff] %v1206
  %1271 = vst [vmem:[#allocation2 + $0xc8] sm:$0xff] %v1207
  %1272 = vst [vmem:[#allocation2 + $0xd0] sm:$0xff] %v1208
  %1273 = vst [vmem:[#allocation2 + $0xd8] sm:$0xff] %v1209
  %1274 = vst [vmem:[#allocation2 + $0xe0] sm:$0xff] %v1210
  %1275 = vst [vmem:[#allocation2 + $0xe8] sm:$0xff] %v1211
  %1276 = vst [vmem:[#allocation2 + $0xf0] sm:$0xff] %v1212
  %1277 = vst [vmem:[#allocation2 + $0xf8] sm:$0xff] %v1213
  %1278 = vst [vmem:[#allocation2 + $0x100] sm:$0xff] %v1214
  %1279 = vst [vmem:[#allocation2 + $0x108] sm:$0xff] %v1215
  %1280 = vst [vmem:[#allocation2 + $0x110] sm:$0xff] %v1216
  %1281 = vst [vmem:[#allocation2 + $0x118] sm:$0xff] %v1217
  %1282 = vst [vmem:[#allocation2 + $0x120] sm:$0xff] %v1218
  %1283 = vst [vmem:[#allocation2 + $0x128] sm:$0xff] %v1219
  %1284 = vst [vmem:[#allocation2 + $0x130] sm:$0xff] %v1220
  %1285 = vst [vmem:[#allocation2 + $0x138] sm:$0xff] %v1221
  %1286 = vst [vmem:[#allocation2 + $0x140] sm:$0xff] %v1222
  %1287 = vst [vmem:[#allocation2 + $0x148] sm:$0xff] %v1223
  %1288 = vst [vmem:[#allocation2 + $0x150] sm:$0xff] %v1224
  %1289 = vst [vmem:[#allocation2 + $0x158] sm:$0xff] %v1225
  %1290 = vst [vmem:[#allocation2 + $0x160] sm:$0xff] %v1226
  %1291 = vst [vmem:[#allocation2 + $0x168] sm:$0xff] %v1227
  %1292 = vst [vmem:[#allocation2 + $0x170] sm:$0xff] %v1228
  %1293 = vst [vmem:[#allocation2 + $0x178] sm:$0xff] %v1229
  %1294 = vst [vmem:[#allocation2 + $0x180] sm:$0xff] %v1230
  %1295 = vst [vmem:[#allocation2 + $0x188] sm:$0xff] %v1231
  %1296 = vst [vmem:[#allocation2 + $0x190] sm:$0xff] %v1232
  %1297 = vst [vmem:[#allocation2 + $0x198] sm:$0xff] %v1233
  %1298 = vst [vmem:[#allocation2 + $0x1a0] sm:$0xff] %v1234
  %1299 = vst [vmem:[#allocation2 + $0x1a8] sm:$0xff] %v1235
  %1300 = vst [vmem:[#allocation2 + $0x1b0] sm:$0xff] %v1236
  %1301 = vst [vmem:[#allocation2 + $0x1b8] sm:$0xff] %v1237
  %1302 = vst [vmem:[#allocation2 + $0x1c0] sm:$0xff] %v1238
  %1303 = vst [vmem:[#allocation2 + $0x1c8] sm:$0xff] %v1239
  %1304 = vst [vmem:[#allocation2 + $0x1d0] sm:$0xff] %v1240
  %1305 = vst [vmem:[#allocation2 + $0x1d8] sm:$0xff] %v1241
  %1306 = vst [vmem:[#allocation2 + $0x1e0] sm:$0xff] %v1242
  %1307 = vst [vmem:[#allocation2 + $0x1e8] sm:$0xff] %v1243
  %1308 = vst [vmem:[#allocation2 + $0x1f0] sm:$0xff] %v1244
  %1309 = vst [vmem:[#allocation2 + $0x1f8] sm:$0xff] %v1245
  // Predicated region
  $region30: #{td_rumor_gcn_forward.4} parent=0 // pred_check
    %p1310 = pneg %p24
  $region31: #{td_rumor_gcn_forward.4} parent=0 // pred_check_branch
    %1312 = sbr.rel (%p1310) target = $region33
  $region32: #{td_rumor_gcn_forward.4} parent=0 // pred_region
    %v1313 = vld [vmem:[#allocation2] sm:$0xff]
    %v1314 = vld [vmem:[#allocation2 + $0x8] sm:$0xff]
    %v1315 = vld [vmem:[#allocation2 + $0x10] sm:$0xff]
    %v1316 = vld [vmem:[#allocation2 + $0x18] sm:$0xff]
    %v1317 = vld [vmem:[#allocation2 + $0x20] sm:$0xff]
    %v1318 = vld [vmem:[#allocation2 + $0x28] sm:$0xff]
    %v1319 = vld [vmem:[#allocation2 + $0x30] sm:$0xff]
    %v1320 = vld [vmem:[#allocation2 + $0x38] sm:$0xff]
    %v1321 = vld [vmem:[#allocation2 + $0x40] sm:$0xff]
    %v1322 = vld [vmem:[#allocation2 + $0x48] sm:$0xff]
    %v1323 = vld [vmem:[#allocation2 + $0x50] sm:$0xff]
    %v1324 = vld [vmem:[#allocation2 + $0x58] sm:$0xff]
    %v1325 = vld [vmem:[#allocation2 + $0x60] sm:$0xff]
    %v1326 = vld [vmem:[#allocation2 + $0x68] sm:$0xff]
    %v1327 = vld [vmem:[#allocation2 + $0x70] sm:$0xff]
    %v1328 = vld [vmem:[#allocation2 + $0x78] sm:$0xff]
    %v1329 = vld [vmem:[#allocation2 + $0x80] sm:$0xff]
    %v1330 = vld [vmem:[#allocation2 + $0x88] sm:$0xff]
    %v1331 = vld [vmem:[#allocation2 + $0x90] sm:$0xff]
    %v1332 = vld [vmem:[#allocation2 + $0x98] sm:$0xff]
    %v1333 = vld [vmem:[#allocation2 + $0xa0] sm:$0xff]
    %v1334 = vld [vmem:[#allocation2 + $0xa8] sm:$0xff]
    %v1335 = vld [vmem:[#allocation2 + $0xb0] sm:$0xff]
    %v1336 = vld [vmem:[#allocation2 + $0xb8] sm:$0xff]
    %v1337 = vld [vmem:[#allocation2 + $0xc0] sm:$0xff]
    %v1338 = vld [vmem:[#allocation2 + $0xc8] sm:$0xff]
    %v1339 = vld [vmem:[#allocation2 + $0xd0] sm:$0xff]
    %v1340 = vld [vmem:[#allocation2 + $0xd8] sm:$0xff]
    %v1341 = vld [vmem:[#allocation2 + $0xe0] sm:$0xff]
    %v1342 = vld [vmem:[#allocation2 + $0xe8] sm:$0xff]
    %v1343 = vld [vmem:[#allocation2 + $0xf0] sm:$0xff]
    %v1344 = vld [vmem:[#allocation2 + $0xf8] sm:$0xff]
    %v1345 = vld [vmem:[#allocation2 + $0x100] sm:$0xff]
    %v1346 = vld [vmem:[#allocation2 + $0x108] sm:$0xff]
    %v1347 = vld [vmem:[#allocation2 + $0x110] sm:$0xff]
    %v1348 = vld [vmem:[#allocation2 + $0x118] sm:$0xff]
    %v1349 = vld [vmem:[#allocation2 + $0x120] sm:$0xff]
    %v1350 = vld [vmem:[#allocation2 + $0x128] sm:$0xff]
    %v1351 = vld [vmem:[#allocation2 + $0x130] sm:$0xff]
    %v1352 = vld [vmem:[#allocation2 + $0x138] sm:$0xff]
    %v1353 = vld [vmem:[#allocation2 + $0x140] sm:$0xff]
    %v1354 = vld [vmem:[#allocation2 + $0x148] sm:$0xff]
    %v1355 = vld [vmem:[#allocation2 + $0x150] sm:$0xff]
    %v1356 = vld [vmem:[#allocation2 + $0x158] sm:$0xff]
    %v1357 = vld [vmem:[#allocation2 + $0x160] sm:$0xff]
    %v1358 = vld [vmem:[#allocation2 + $0x168] sm:$0xff]
    %v1359 = vld [vmem:[#allocation2 + $0x170] sm:$0xff]
    %v1360 = vld [vmem:[#allocation2 + $0x178] sm:$0xff]
    %v1361 = vld [vmem:[#allocation2 + $0x180] sm:$0xff]
    %v1362 = vld [vmem:[#allocation2 + $0x188] sm:$0xff]
    %v1363 = vld [vmem:[#allocation2 + $0x190] sm:$0xff]
    %v1364 = vld [vmem:[#allocation2 + $0x198] sm:$0xff]
    %v1365 = vld [vmem:[#allocation2 + $0x1a0] sm:$0xff]
    %v1366 = vld [vmem:[#allocation2 + $0x1a8] sm:$0xff]
    %v1367 = vld [vmem:[#allocation2 + $0x1b0] sm:$0xff]
    %v1368 = vld [vmem:[#allocation2 + $0x1b8] sm:$0xff]
    %v1369 = vld [vmem:[#allocation2 + $0x1c0] sm:$0xff]
    %v1370 = vld [vmem:[#allocation2 + $0x1c8] sm:$0xff]
    %v1371 = vld [vmem:[#allocation2 + $0x1d0] sm:$0xff]
    %v1372 = vld [vmem:[#allocation2 + $0x1d8] sm:$0xff]
    %v1373 = vld [vmem:[#allocation2 + $0x1e0] sm:$0xff]
    %v1374 = vld [vmem:[#allocation2 + $0x1e8] sm:$0xff]
    %v1375 = vld [vmem:[#allocation2 + $0x1f0] sm:$0xff]
    %v1376 = vld [vmem:[#allocation2 + $0x1f8] sm:$0xff]
    %v1377 = vld [vmem:[%s2] sm:$0xff]
    %v1378 = vld [vmem:[%s2 + $0x8] sm:$0xff]
    %v1379 = vld [vmem:[%s2 + $0x10] sm:$0xff]
    %v1380 = vld [vmem:[%s2 + $0x18] sm:$0xff]
    %v1381 = vld [vmem:[%s2 + $0x20] sm:$0xff]
    %v1382 = vld [vmem:[%s2 + $0x28] sm:$0xff]
    %v1383 = vld [vmem:[%s2 + $0x30] sm:$0xff]
    %v1384 = vld [vmem:[%s2 + $0x38] sm:$0xff]
    %v1385 = vld [vmem:[%s2 + $0x40] sm:$0xff]
    %v1386 = vld [vmem:[%s2 + $0x48] sm:$0xff]
    %v1387 = vld [vmem:[%s2 + $0x50] sm:$0xff]
    %v1388 = vld [vmem:[%s2 + $0x58] sm:$0xff]
    %v1389 = vld [vmem:[%s2 + $0x60] sm:$0xff]
    %v1390 = vld [vmem:[%s2 + $0x68] sm:$0xff]
    %v1391 = vld [vmem:[%s2 + $0x70] sm:$0xff]
    %v1392 = vld [vmem:[%s2 + $0x78] sm:$0xff]
    %v1393 = vld [vmem:[%s2 + $0x80] sm:$0xff]
    %v1394 = vld [vmem:[%s2 + $0x88] sm:$0xff]
    %v1395 = vld [vmem:[%s2 + $0x90] sm:$0xff]
    %v1396 = vld [vmem:[%s2 + $0x98] sm:$0xff]
    %v1397 = vld [vmem:[%s2 + $0xa0] sm:$0xff]
    %v1398 = vld [vmem:[%s2 + $0xa8] sm:$0xff]
    %v1399 = vld [vmem:[%s2 + $0xb0] sm:$0xff]
    %v1400 = vld [vmem:[%s2 + $0xb8] sm:$0xff]
    %v1401 = vld [vmem:[%s2 + $0xc0] sm:$0xff]
    %v1402 = vld [vmem:[%s2 + $0xc8] sm:$0xff]
    %v1403 = vld [vmem:[%s2 + $0xd0] sm:$0xff]
    %v1404 = vld [vmem:[%s2 + $0xd8] sm:$0xff]
    %v1405 = vld [vmem:[%s2 + $0xe0] sm:$0xff]
    %v1406 = vld [vmem:[%s2 + $0xe8] sm:$0xff]
    %v1407 = vld [vmem:[%s2 + $0xf0] sm:$0xff]
    %v1408 = vld [vmem:[%s2 + $0xf8] sm:$0xff]
    %v1409 = vld [vmem:[%s2 + $0x100] sm:$0xff]
    %v1410 = vld [vmem:[%s2 + $0x108] sm:$0xff]
    %v1411 = vld [vmem:[%s2 + $0x110] sm:$0xff]
    %v1412 = vld [vmem:[%s2 + $0x118] sm:$0xff]
    %v1413 = vld [vmem:[%s2 + $0x120] sm:$0xff]
    %v1414 = vld [vmem:[%s2 + $0x128] sm:$0xff]
    %v1415 = vld [vmem:[%s2 + $0x130] sm:$0xff]
    %v1416 = vld [vmem:[%s2 + $0x138] sm:$0xff]
    %v1417 = vld [vmem:[%s2 + $0x140] sm:$0xff]
    %v1418 = vld [vmem:[%s2 + $0x148] sm:$0xff]
    %v1419 = vld [vmem:[%s2 + $0x150] sm:$0xff]
    %v1420 = vld [vmem:[%s2 + $0x158] sm:$0xff]
    %v1421 = vld [vmem:[%s2 + $0x160] sm:$0xff]
    %v1422 = vld [vmem:[%s2 + $0x168] sm:$0xff]
    %v1423 = vld [vmem:[%s2 + $0x170] sm:$0xff]
    %v1424 = vld [vmem:[%s2 + $0x178] sm:$0xff]
    %v1425 = vld [vmem:[%s2 + $0x180] sm:$0xff]
    %v1426 = vld [vmem:[%s2 + $0x188] sm:$0xff]
    %v1427 = vld [vmem:[%s2 + $0x190] sm:$0xff]
    %v1428 = vld [vmem:[%s2 + $0x198] sm:$0xff]
    %v1429 = vld [vmem:[%s2 + $0x1a0] sm:$0xff]
    %v1430 = vld [vmem:[%s2 + $0x1a8] sm:$0xff]
    %v1431 = vld [vmem:[%s2 + $0x1b0] sm:$0xff]
    %v1432 = vld [vmem:[%s2 + $0x1b8] sm:$0xff]
    %v1433 = vld [vmem:[%s2 + $0x1c0] sm:$0xff]
    %v1434 = vld [vmem:[%s2 + $0x1c8] sm:$0xff]
    %v1435 = vld [vmem:[%s2 + $0x1d0] sm:$0xff]
    %v1436 = vld [vmem:[%s2 + $0x1d8] sm:$0xff]
    %v1437 = vld [vmem:[%s2 + $0x1e0] sm:$0xff]
    %v1438 = vld [vmem:[%s2 + $0x1e8] sm:$0xff]
    %v1439 = vld [vmem:[%s2 + $0x1f0] sm:$0xff]
    %v1440 = vld [vmem:[%s2 + $0x1f8] sm:$0xff]
    %1442 = vset.pattern.permute.xlu0 0
    %1443 = vperm.xlu0 %1442, %v1377
    %v1444 = vpop.permute.xlu0 %1443
    %1447 = vset.pattern.permute.xlu0 0
    %1448 = vperm.xlu0 %1447, %v1378
    %v1449 = vpop.permute.xlu0 %1448
    %1452 = vset.pattern.permute.xlu0 0
    %1453 = vperm.xlu0 %1452, %v1379
    %v1454 = vpop.permute.xlu0 %1453
    %1457 = vset.pattern.permute.xlu0 0
    %1458 = vperm.xlu0 %1457, %v1380
    %v1459 = vpop.permute.xlu0 %1458
    %1462 = vset.pattern.permute.xlu0 0
    %1463 = vperm.xlu0 %1462, %v1381
    %v1464 = vpop.permute.xlu0 %1463
    %1467 = vset.pattern.permute.xlu0 0
    %1468 = vperm.xlu0 %1467, %v1382
    %v1469 = vpop.permute.xlu0 %1468
    %1472 = vset.pattern.permute.xlu0 0
    %1473 = vperm.xlu0 %1472, %v1383
    %v1474 = vpop.permute.xlu0 %1473
    %1477 = vset.pattern.permute.xlu0 0
    %1478 = vperm.xlu0 %1477, %v1384
    %v1479 = vpop.permute.xlu0 %1478
    %1482 = vset.pattern.permute.xlu0 0
    %1483 = vperm.xlu0 %1482, %v1385
    %v1484 = vpop.permute.xlu0 %1483
    %1487 = vset.pattern.permute.xlu0 0
    %1488 = vperm.xlu0 %1487, %v1386
    %v1489 = vpop.permute.xlu0 %1488
    %1492 = vset.pattern.permute.xlu0 0
    %1493 = vperm.xlu0 %1492, %v1387
    %v1494 = vpop.permute.xlu0 %1493
    %1497 = vset.pattern.permute.xlu0 0
    %1498 = vperm.xlu0 %1497, %v1388
    %v1499 = vpop.permute.xlu0 %1498
    %1502 = vset.pattern.permute.xlu0 0
    %1503 = vperm.xlu0 %1502, %v1389
    %v1504 = vpop.permute.xlu0 %1503
    %1507 = vset.pattern.permute.xlu0 0
    %1508 = vperm.xlu0 %1507, %v1390
    %v1509 = vpop.permute.xlu0 %1508
    %1512 = vset.pattern.permute.xlu0 0
    %1513 = vperm.xlu0 %1512, %v1391
    %v1514 = vpop.permute.xlu0 %1513
    %1517 = vset.pattern.permute.xlu0 0
    %1518 = vperm.xlu0 %1517, %v1392
    %v1519 = vpop.permute.xlu0 %1518
    %1522 = vset.pattern.permute.xlu0 0
    %1523 = vperm.xlu0 %1522, %v1393
    %v1524 = vpop.permute.xlu0 %1523
    %1527 = vset.pattern.permute.xlu0 0
    %1528 = vperm.xlu0 %1527, %v1394
    %v1529 = vpop.permute.xlu0 %1528
    %1532 = vset.pattern.permute.xlu0 0
    %1533 = vperm.xlu0 %1532, %v1395
    %v1534 = vpop.permute.xlu0 %1533
    %1537 = vset.pattern.permute.xlu0 0
    %1538 = vperm.xlu0 %1537, %v1396
    %v1539 = vpop.permute.xlu0 %1538
    %1542 = vset.pattern.permute.xlu0 0
    %1543 = vperm.xlu0 %1542, %v1397
    %v1544 = vpop.permute.xlu0 %1543
    %1547 = vset.pattern.permute.xlu0 0
    %1548 = vperm.xlu0 %1547, %v1398
    %v1549 = vpop.permute.xlu0 %1548
    %1552 = vset.pattern.permute.xlu0 0
    %1553 = vperm.xlu0 %1552, %v1399
    %v1554 = vpop.permute.xlu0 %1553
    %1557 = vset.pattern.permute.xlu0 0
    %1558 = vperm.xlu0 %1557, %v1400
    %v1559 = vpop.permute.xlu0 %1558
    %1562 = vset.pattern.permute.xlu0 0
    %1563 = vperm.xlu0 %1562, %v1401
    %v1564 = vpop.permute.xlu0 %1563
    %1567 = vset.pattern.permute.xlu0 0
    %1568 = vperm.xlu0 %1567, %v1402
    %v1569 = vpop.permute.xlu0 %1568
    %1572 = vset.pattern.permute.xlu0 0
    %1573 = vperm.xlu0 %1572, %v1403
    %v1574 = vpop.permute.xlu0 %1573
    %1577 = vset.pattern.permute.xlu0 0
    %1578 = vperm.xlu0 %1577, %v1404
    %v1579 = vpop.permute.xlu0 %1578
    %1582 = vset.pattern.permute.xlu0 0
    %1583 = vperm.xlu0 %1582, %v1405
    %v1584 = vpop.permute.xlu0 %1583
    %1587 = vset.pattern.permute.xlu0 0
    %1588 = vperm.xlu0 %1587, %v1406
    %v1589 = vpop.permute.xlu0 %1588
    %1592 = vset.pattern.permute.xlu0 0
    %1593 = vperm.xlu0 %1592, %v1407
    %v1594 = vpop.permute.xlu0 %1593
    %1597 = vset.pattern.permute.xlu0 0
    %1598 = vperm.xlu0 %1597, %v1408
    %v1599 = vpop.permute.xlu0 %1598
    %1602 = vset.pattern.permute.xlu0 0
    %1603 = vperm.xlu0 %1602, %v1409
    %v1604 = vpop.permute.xlu0 %1603
    %1607 = vset.pattern.permute.xlu0 0
    %1608 = vperm.xlu0 %1607, %v1410
    %v1609 = vpop.permute.xlu0 %1608
    %1612 = vset.pattern.permute.xlu0 0
    %1613 = vperm.xlu0 %1612, %v1411
    %v1614 = vpop.permute.xlu0 %1613
    %1617 = vset.pattern.permute.xlu0 0
    %1618 = vperm.xlu0 %1617, %v1412
    %v1619 = vpop.permute.xlu0 %1618
    %1622 = vset.pattern.permute.xlu0 0
    %1623 = vperm.xlu0 %1622, %v1413
    %v1624 = vpop.permute.xlu0 %1623
    %1627 = vset.pattern.permute.xlu0 0
    %1628 = vperm.xlu0 %1627, %v1414
    %v1629 = vpop.permute.xlu0 %1628
    %1632 = vset.pattern.permute.xlu0 0
    %1633 = vperm.xlu0 %1632, %v1415
    %v1634 = vpop.permute.xlu0 %1633
    %1637 = vset.pattern.permute.xlu0 0
    %1638 = vperm.xlu0 %1637, %v1416
    %v1639 = vpop.permute.xlu0 %1638
    %1642 = vset.pattern.permute.xlu0 0
    %1643 = vperm.xlu0 %1642, %v1417
    %v1644 = vpop.permute.xlu0 %1643
    %1647 = vset.pattern.permute.xlu0 0
    %1648 = vperm.xlu0 %1647, %v1418
    %v1649 = vpop.permute.xlu0 %1648
    %1652 = vset.pattern.permute.xlu0 0
    %1653 = vperm.xlu0 %1652, %v1419
    %v1654 = vpop.permute.xlu0 %1653
    %1657 = vset.pattern.permute.xlu0 0
    %1658 = vperm.xlu0 %1657, %v1420
    %v1659 = vpop.permute.xlu0 %1658
    %1662 = vset.pattern.permute.xlu0 0
    %1663 = vperm.xlu0 %1662, %v1421
    %v1664 = vpop.permute.xlu0 %1663
    %1667 = vset.pattern.permute.xlu0 0
    %1668 = vperm.xlu0 %1667, %v1422
    %v1669 = vpop.permute.xlu0 %1668
    %1672 = vset.pattern.permute.xlu0 0
    %1673 = vperm.xlu0 %1672, %v1423
    %v1674 = vpop.permute.xlu0 %1673
    %1677 = vset.pattern.permute.xlu0 0
    %1678 = vperm.xlu0 %1677, %v1424
    %v1679 = vpop.permute.xlu0 %1678
    %1682 = vset.pattern.permute.xlu0 0
    %1683 = vperm.xlu0 %1682, %v1425
    %v1684 = vpop.permute.xlu0 %1683
    %1687 = vset.pattern.permute.xlu0 0
    %1688 = vperm.xlu0 %1687, %v1426
    %v1689 = vpop.permute.xlu0 %1688
    %1692 = vset.pattern.permute.xlu0 0
    %1693 = vperm.xlu0 %1692, %v1427
    %v1694 = vpop.permute.xlu0 %1693
    %1697 = vset.pattern.permute.xlu0 0
    %1698 = vperm.xlu0 %1697, %v1428
    %v1699 = vpop.permute.xlu0 %1698
    %1702 = vset.pattern.permute.xlu0 0
    %1703 = vperm.xlu0 %1702, %v1429
    %v1704 = vpop.permute.xlu0 %1703
    %1707 = vset.pattern.permute.xlu0 0
    %1708 = vperm.xlu0 %1707, %v1430
    %v1709 = vpop.permute.xlu0 %1708
    %1712 = vset.pattern.permute.xlu0 0
    %1713 = vperm.xlu0 %1712, %v1431
    %v1714 = vpop.permute.xlu0 %1713
    %1717 = vset.pattern.permute.xlu0 0
    %1718 = vperm.xlu0 %1717, %v1432
    %v1719 = vpop.permute.xlu0 %1718
    %1722 = vset.pattern.permute.xlu0 0
    %1723 = vperm.xlu0 %1722, %v1433
    %v1724 = vpop.permute.xlu0 %1723
    %1727 = vset.pattern.permute.xlu0 0
    %1728 = vperm.xlu0 %1727, %v1434
    %v1729 = vpop.permute.xlu0 %1728
    %1732 = vset.pattern.permute.xlu0 0
    %1733 = vperm.xlu0 %1732, %v1435
    %v1734 = vpop.permute.xlu0 %1733
    %1737 = vset.pattern.permute.xlu0 0
    %1738 = vperm.xlu0 %1737, %v1436
    %v1739 = vpop.permute.xlu0 %1738
    %1742 = vset.pattern.permute.xlu0 0
    %1743 = vperm.xlu0 %1742, %v1437
    %v1744 = vpop.permute.xlu0 %1743
    %1747 = vset.pattern.permute.xlu0 0
    %1748 = vperm.xlu0 %1747, %v1438
    %v1749 = vpop.permute.xlu0 %1748
    %1752 = vset.pattern.permute.xlu0 0
    %1753 = vperm.xlu0 %1752, %v1439
    %v1754 = vpop.permute.xlu0 %1753
    %1757 = vset.pattern.permute.xlu0 0
    %1758 = vperm.xlu0 %1757, %v1440
    %v1759 = vpop.permute.xlu0 %1758
    %v1761 = vmul.f32 %v1313, %v1444
    %v1762 = vmul.f32 %v1314, %v1449
    %v1763 = vmul.f32 %v1315, %v1454
    %v1764 = vmul.f32 %v1316, %v1459
    %v1765 = vmul.f32 %v1317, %v1464
    %v1766 = vmul.f32 %v1318, %v1469
    %v1767 = vmul.f32 %v1319, %v1474
    %v1768 = vmul.f32 %v1320, %v1479
    %v1769 = vmul.f32 %v1321, %v1484
    %v1770 = vmul.f32 %v1322, %v1489
    %v1771 = vmul.f32 %v1323, %v1494
    %v1772 = vmul.f32 %v1324, %v1499
    %v1773 = vmul.f32 %v1325, %v1504
    %v1774 = vmul.f32 %v1326, %v1509
    %v1775 = vmul.f32 %v1327, %v1514
    %v1776 = vmul.f32 %v1328, %v1519
    %v1777 = vmul.f32 %v1329, %v1524
    %v1778 = vmul.f32 %v1330, %v1529
    %v1779 = vmul.f32 %v1331, %v1534
    %v1780 = vmul.f32 %v1332, %v1539
    %v1781 = vmul.f32 %v1333, %v1544
    %v1782 = vmul.f32 %v1334, %v1549
    %v1783 = vmul.f32 %v1335, %v1554
    %v1784 = vmul.f32 %v1336, %v1559
    %v1785 = vmul.f32 %v1337, %v1564
    %v1786 = vmul.f32 %v1338, %v1569
    %v1787 = vmul.f32 %v1339, %v1574
    %v1788 = vmul.f32 %v1340, %v1579
    %v1789 = vmul.f32 %v1341, %v1584
    %v1790 = vmul.f32 %v1342, %v1589
    %v1791 = vmul.f32 %v1343, %v1594
    %v1792 = vmul.f32 %v1344, %v1599
    %v1793 = vmul.f32 %v1345, %v1604
    %v1794 = vmul.f32 %v1346, %v1609
    %v1795 = vmul.f32 %v1347, %v1614
    %v1796 = vmul.f32 %v1348, %v1619
    %v1797 = vmul.f32 %v1349, %v1624
    %v1798 = vmul.f32 %v1350, %v1629
    %v1799 = vmul.f32 %v1351, %v1634
    %v1800 = vmul.f32 %v1352, %v1639
    %v1801 = vmul.f32 %v1353, %v1644
    %v1802 = vmul.f32 %v1354, %v1649
    %v1803 = vmul.f32 %v1355, %v1654
    %v1804 = vmul.f32 %v1356, %v1659
    %v1805 = vmul.f32 %v1357, %v1664
    %v1806 = vmul.f32 %v1358, %v1669
    %v1807 = vmul.f32 %v1359, %v1674
    %v1808 = vmul.f32 %v1360, %v1679
    %v1809 = vmul.f32 %v1361, %v1684
    %v1810 = vmul.f32 %v1362, %v1689
    %v1811 = vmul.f32 %v1363, %v1694
    %v1812 = vmul.f32 %v1364, %v1699
    %v1813 = vmul.f32 %v1365, %v1704
    %v1814 = vmul.f32 %v1366, %v1709
    %v1815 = vmul.f32 %v1367, %v1714
    %v1816 = vmul.f32 %v1368, %v1719
    %v1817 = vmul.f32 %v1369, %v1724
    %v1818 = vmul.f32 %v1370, %v1729
    %v1819 = vmul.f32 %v1371, %v1734
    %v1820 = vmul.f32 %v1372, %v1739
    %v1821 = vmul.f32 %v1373, %v1744
    %v1822 = vmul.f32 %v1374, %v1749
    %v1823 = vmul.f32 %v1375, %v1754
    %v1824 = vmul.f32 %v1376, %v1759
    %v1825 = vld [vmem:[%s4] sm:$0x1]
    %v1827 = vlaneseq
    %v1828 = vshrl.u32 %v1827, 7
    %v1829 = vsub.s32 0, %v1828
    %v1830 = vrot.slane %v1825, %v1829
    %v1832 = vadd.f32 %v1761, %v1830
    %v1833 = vadd.f32 %v1762, %v1830
    %v1834 = vadd.f32 %v1763, %v1830
    %v1835 = vadd.f32 %v1764, %v1830
    %v1836 = vadd.f32 %v1765, %v1830
    %v1837 = vadd.f32 %v1766, %v1830
    %v1838 = vadd.f32 %v1767, %v1830
    %v1839 = vadd.f32 %v1768, %v1830
    %v1840 = vadd.f32 %v1769, %v1830
    %v1841 = vadd.f32 %v1770, %v1830
    %v1842 = vadd.f32 %v1771, %v1830
    %v1843 = vadd.f32 %v1772, %v1830
    %v1844 = vadd.f32 %v1773, %v1830
    %v1845 = vadd.f32 %v1774, %v1830
    %v1846 = vadd.f32 %v1775, %v1830
    %v1847 = vadd.f32 %v1776, %v1830
    %v1848 = vadd.f32 %v1777, %v1830
    %v1849 = vadd.f32 %v1778, %v1830
    %v1850 = vadd.f32 %v1779, %v1830
    %v1851 = vadd.f32 %v1780, %v1830
    %v1852 = vadd.f32 %v1781, %v1830
    %v1853 = vadd.f32 %v1782, %v1830
    %v1854 = vadd.f32 %v1783, %v1830
    %v1855 = vadd.f32 %v1784, %v1830
    %v1856 = vadd.f32 %v1785, %v1830
    %v1857 = vadd.f32 %v1786, %v1830
    %v1858 = vadd.f32 %v1787, %v1830
    %v1859 = vadd.f32 %v1788, %v1830
    %v1860 = vadd.f32 %v1789, %v1830
    %v1861 = vadd.f32 %v1790, %v1830
    %v1862 = vadd.f32 %v1791, %v1830
    %v1863 = vadd.f32 %v1792, %v1830
    %v1864 = vadd.f32 %v1793, %v1830
    %v1865 = vadd.f32 %v1794, %v1830
    %v1866 = vadd.f32 %v1795, %v1830
    %v1867 = vadd.f32 %v1796, %v1830
    %v1868 = vadd.f32 %v1797, %v1830
    %v1869 = vadd.f32 %v1798, %v1830
    %v1870 = vadd.f32 %v1799, %v1830
    %v1871 = vadd.f32 %v1800, %v1830
    %v1872 = vadd.f32 %v1801, %v1830
    %v1873 = vadd.f32 %v1802, %v1830
    %v1874 = vadd.f32 %v1803, %v1830
    %v1875 = vadd.f32 %v1804, %v1830
    %v1876 = vadd.f32 %v1805, %v1830
    %v1877 = vadd.f32 %v1806, %v1830
    %v1878 = vadd.f32 %v1807, %v1830
    %v1879 = vadd.f32 %v1808, %v1830
    %v1880 = vadd.f32 %v1809, %v1830
    %v1881 = vadd.f32 %v1810, %v1830
    %v1882 = vadd.f32 %v1811, %v1830
    %v1883 = vadd.f32 %v1812, %v1830
    %v1884 = vadd.f32 %v1813, %v1830
    %v1885 = vadd.f32 %v1814, %v1830
    %v1886 = vadd.f32 %v1815, %v1830
    %v1887 = vadd.f32 %v1816, %v1830
    %v1888 = vadd.f32 %v1817, %v1830
    %v1889 = vadd.f32 %v1818, %v1830
    %v1890 = vadd.f32 %v1819, %v1830
    %v1891 = vadd.f32 %v1820, %v1830
    %v1892 = vadd.f32 %v1821, %v1830
    %v1893 = vadd.f32 %v1822, %v1830
    %v1894 = vadd.f32 %v1823, %v1830
    %v1895 = vadd.f32 %v1824, %v1830
    %v1896 = vmax.f32 %v1832, 0.0
    %v1897 = vmax.f32 %v1833, 0.0
    %v1898 = vmax.f32 %v1834, 0.0
    %v1899 = vmax.f32 %v1835, 0.0
    %v1900 = vmax.f32 %v1836, 0.0
    %v1901 = vmax.f32 %v1837, 0.0
    %v1902 = vmax.f32 %v1838, 0.0
    %v1903 = vmax.f32 %v1839, 0.0
    %v1904 = vmax.f32 %v1840, 0.0
    %v1905 = vmax.f32 %v1841, 0.0
    %v1906 = vmax.f32 %v1842, 0.0
    %v1907 = vmax.f32 %v1843, 0.0
    %v1908 = vmax.f32 %v1844, 0.0
    %v1909 = vmax.f32 %v1845, 0.0
    %v1910 = vmax.f32 %v1846, 0.0
    %v1911 = vmax.f32 %v1847, 0.0
    %v1912 = vmax.f32 %v1848, 0.0
    %v1913 = vmax.f32 %v1849, 0.0
    %v1914 = vmax.f32 %v1850, 0.0
    %v1915 = vmax.f32 %v1851, 0.0
    %v1916 = vmax.f32 %v1852, 0.0
    %v1917 = vmax.f32 %v1853, 0.0
    %v1918 = vmax.f32 %v1854, 0.0
    %v1919 = vmax.f32 %v1855, 0.0
    %v1920 = vmax.f32 %v1856, 0.0
    %v1921 = vmax.f32 %v1857, 0.0
    %v1922 = vmax.f32 %v1858, 0.0
    %v1923 = vmax.f32 %v1859, 0.0
    %v1924 = vmax.f32 %v1860, 0.0
    %v1925 = vmax.f32 %v1861, 0.0
    %v1926 = vmax.f32 %v1862, 0.0
    %v1927 = vmax.f32 %v1863, 0.0
    %v1928 = vmax.f32 %v1864, 0.0
    %v1929 = vmax.f32 %v1865, 0.0
    %v1930 = vmax.f32 %v1866, 0.0
    %v1931 = vmax.f32 %v1867, 0.0
    %v1932 = vmax.f32 %v1868, 0.0
    %v1933 = vmax.f32 %v1869, 0.0
    %v1934 = vmax.f32 %v1870, 0.0
    %v1935 = vmax.f32 %v1871, 0.0
    %v1936 = vmax.f32 %v1872, 0.0
    %v1937 = vmax.f32 %v1873, 0.0
    %v1938 = vmax.f32 %v1874, 0.0
    %v1939 = vmax.f32 %v1875, 0.0
    %v1940 = vmax.f32 %v1876, 0.0
    %v1941 = vmax.f32 %v1877, 0.0
    %v1942 = vmax.f32 %v1878, 0.0
    %v1943 = vmax.f32 %v1879, 0.0
    %v1944 = vmax.f32 %v1880, 0.0
    %v1945 = vmax.f32 %v1881, 0.0
    %v1946 = vmax.f32 %v1882, 0.0
    %v1947 = vmax.f32 %v1883, 0.0
    %v1948 = vmax.f32 %v1884, 0.0
    %v1949 = vmax.f32 %v1885, 0.0
    %v1950 = vmax.f32 %v1886, 0.0
    %v1951 = vmax.f32 %v1887, 0.0
    %v1952 = vmax.f32 %v1888, 0.0
    %v1953 = vmax.f32 %v1889, 0.0
    %v1954 = vmax.f32 %v1890, 0.0
    %v1955 = vmax.f32 %v1891, 0.0
    %v1956 = vmax.f32 %v1892, 0.0
    %v1957 = vmax.f32 %v1893, 0.0
    %v1958 = vmax.f32 %v1894, 0.0
    %v1959 = vmax.f32 %v1895, 0.0
    %v1960 = vpack.c.bf16 %v1897, %v1896
    %v1961 = vpack.c.bf16 %v1899, %v1898
    %v1962 = vpack.c.bf16 %v1901, %v1900
    %v1963 = vpack.c.bf16 %v1903, %v1902
    %v1964 = vpack.c.bf16 %v1905, %v1904
    %v1965 = vpack.c.bf16 %v1907, %v1906
    %v1966 = vpack.c.bf16 %v1909, %v1908
    %v1967 = vpack.c.bf16 %v1911, %v1910
    %v1968 = vpack.c.bf16 %v1913, %v1912
    %v1969 = vpack.c.bf16 %v1915, %v1914
    %v1970 = vpack.c.bf16 %v1917, %v1916
    %v1971 = vpack.c.bf16 %v1919, %v1918
    %v1972 = vpack.c.bf16 %v1921, %v1920
    %v1973 = vpack.c.bf16 %v1923, %v1922
    %v1974 = vpack.c.bf16 %v1925, %v1924
    %v1975 = vpack.c.bf16 %v1927, %v1926
    %v1976 = vpack.c.bf16 %v1929, %v1928
    %v1977 = vpack.c.bf16 %v1931, %v1930
    %v1978 = vpack.c.bf16 %v1933, %v1932
    %v1979 = vpack.c.bf16 %v1935, %v1934
    %v1980 = vpack.c.bf16 %v1937, %v1936
    %v1981 = vpack.c.bf16 %v1939, %v1938
    %v1982 = vpack.c.bf16 %v1941, %v1940
    %v1983 = vpack.c.bf16 %v1943, %v1942
    %v1984 = vpack.c.bf16 %v1945, %v1944
    %v1985 = vpack.c.bf16 %v1947, %v1946
    %v1986 = vpack.c.bf16 %v1949, %v1948
    %v1987 = vpack.c.bf16 %v1951, %v1950
    %v1988 = vpack.c.bf16 %v1953, %v1952
    %v1989 = vpack.c.bf16 %v1955, %v1954
    %v1990 = vpack.c.bf16 %v1957, %v1956
    %v1991 = vpack.c.bf16 %v1959, %v1958
    %v1992 = vld [vmem:[%s3] sm:$0xf]
    %v1993 = vld [vmem:[%s3 + $0x4] sm:$0xf]
    %v1994 = vld [vmem:[%s3 + $0x8] sm:$0xf]
    %v1995 = vld [vmem:[%s3 + $0xc] sm:$0xf]
    %v1996 = vld [vmem:[%s3 + $0x10] sm:$0xf]
    %v1997 = vld [vmem:[%s3 + $0x14] sm:$0xf]
    %v1998 = vld [vmem:[%s3 + $0x18] sm:$0xf]
    %v1999 = vld [vmem:[%s3 + $0x1c] sm:$0xf]
    %v2000 = vld [vmem:[%s3 + $0x20] sm:$0xf]
    %v2001 = vld [vmem:[%s3 + $0x24] sm:$0xf]
    %v2002 = vld [vmem:[%s3 + $0x28] sm:$0xf]
    %v2003 = vld [vmem:[%s3 + $0x2c] sm:$0xf]
    %v2004 = vld [vmem:[%s3 + $0x30] sm:$0xf]
    %v2005 = vld [vmem:[%s3 + $0x34] sm:$0xf]
    %v2006 = vld [vmem:[%s3 + $0x38] sm:$0xf]
    %v2007 = vld [vmem:[%s3 + $0x3c] sm:$0xf]
    %v2008 = vld [vmem:[%s3 + $0x40] sm:$0xf]
    %v2009 = vld [vmem:[%s3 + $0x44] sm:$0xf]
    %v2010 = vld [vmem:[%s3 + $0x48] sm:$0xf]
    %v2011 = vld [vmem:[%s3 + $0x4c] sm:$0xf]
    %v2012 = vld [vmem:[%s3 + $0x50] sm:$0xf]
    %v2013 = vld [vmem:[%s3 + $0x54] sm:$0xf]
    %v2014 = vld [vmem:[%s3 + $0x58] sm:$0xf]
    %v2015 = vld [vmem:[%s3 + $0x5c] sm:$0xf]
    %v2016 = vld [vmem:[%s3 + $0x60] sm:$0xf]
    %v2017 = vld [vmem:[%s3 + $0x64] sm:$0xf]
    %v2018 = vld [vmem:[%s3 + $0x68] sm:$0xf]
    %v2019 = vld [vmem:[%s3 + $0x6c] sm:$0xf]
    %v2020 = vld [vmem:[%s3 + $0x70] sm:$0xf]
    %v2021 = vld [vmem:[%s3 + $0x74] sm:$0xf]
    %v2022 = vld [vmem:[%s3 + $0x78] sm:$0xf]
    %v2023 = vld [vmem:[%s3 + $0x7c] sm:$0xf]
    %v2024 = vld [vmem:[%s3 + $0x80] sm:$0xf]
    %v2025 = vld [vmem:[%s3 + $0x84] sm:$0xf]
    %v2026 = vld [vmem:[%s3 + $0x88] sm:$0xf]
    %v2027 = vld [vmem:[%s3 + $0x8c] sm:$0xf]
    %v2028 = vld [vmem:[%s3 + $0x90] sm:$0xf]
    %v2029 = vld [vmem:[%s3 + $0x94] sm:$0xf]
    %v2030 = vld [vmem:[%s3 + $0x98] sm:$0xf]
    %v2031 = vld [vmem:[%s3 + $0x9c] sm:$0xf]
    %v2032 = vld [vmem:[%s3 + $0xa0] sm:$0xf]
    %v2033 = vld [vmem:[%s3 + $0xa4] sm:$0xf]
    %v2034 = vld [vmem:[%s3 + $0xa8] sm:$0xf]
    %v2035 = vld [vmem:[%s3 + $0xac] sm:$0xf]
    %v2036 = vld [vmem:[%s3 + $0xb0] sm:$0xf]
    %v2037 = vld [vmem:[%s3 + $0xb4] sm:$0xf]
    %v2038 = vld [vmem:[%s3 + $0xb8] sm:$0xf]
    %v2039 = vld [vmem:[%s3 + $0xbc] sm:$0xf]
    %v2040 = vld [vmem:[%s3 + $0xc0] sm:$0xf]
    %v2041 = vld [vmem:[%s3 + $0xc4] sm:$0xf]
    %v2042 = vld [vmem:[%s3 + $0xc8] sm:$0xf]
    %v2043 = vld [vmem:[%s3 + $0xcc] sm:$0xf]
    %v2044 = vld [vmem:[%s3 + $0xd0] sm:$0xf]
    %v2045 = vld [vmem:[%s3 + $0xd4] sm:$0xf]
    %v2046 = vld [vmem:[%s3 + $0xd8] sm:$0xf]
    %v2047 = vld [vmem:[%s3 + $0xdc] sm:$0xf]
    %v2048 = vld [vmem:[%s3 + $0xe0] sm:$0xf]
    %v2049 = vld [vmem:[%s3 + $0xe4] sm:$0xf]
    %v2050 = vld [vmem:[%s3 + $0xe8] sm:$0xf]
    %v2051 = vld [vmem:[%s3 + $0xec] sm:$0xf]
    %v2052 = vld [vmem:[%s3 + $0xf0] sm:$0xf]
    %v2053 = vld [vmem:[%s3 + $0xf4] sm:$0xf]
    %v2054 = vld [vmem:[%s3 + $0xf8] sm:$0xf]
    %v2055 = vld [vmem:[%s3 + $0xfc] sm:$0xf]
    %v2056 = vmax.bf16 %v1992, 0
    %v2057 = vmax.bf16 %v1993, 0
    %v2058 = vmax.bf16 %v1994, 0
    %v2059 = vmax.bf16 %v1995, 0
    %v2060 = vmax.bf16 %v1996, 0
    %v2061 = vmax.bf16 %v1997, 0
    %v2062 = vmax.bf16 %v1998, 0
    %v2063 = vmax.bf16 %v1999, 0
    %v2064 = vmax.bf16 %v2000, 0
    %v2065 = vmax.bf16 %v2001, 0
    %v2066 = vmax.bf16 %v2002, 0
    %v2067 = vmax.bf16 %v2003, 0
    %v2068 = vmax.bf16 %v2004, 0
    %v2069 = vmax.bf16 %v2005, 0
    %v2070 = vmax.bf16 %v2006, 0
    %v2071 = vmax.bf16 %v2007, 0
    %v2072 = vmax.bf16 %v2008, 0
    %v2073 = vmax.bf16 %v2009, 0
    %v2074 = vmax.bf16 %v2010, 0
    %v2075 = vmax.bf16 %v2011, 0
    %v2076 = vmax.bf16 %v2012, 0
    %v2077 = vmax.bf16 %v2013, 0
    %v2078 = vmax.bf16 %v2014, 0
    %v2079 = vmax.bf16 %v2015, 0
    %v2080 = vmax.bf16 %v2016, 0
    %v2081 = vmax.bf16 %v2017, 0
    %v2082 = vmax.bf16 %v2018, 0
    %v2083 = vmax.bf16 %v2019, 0
    %v2084 = vmax.bf16 %v2020, 0
    %v2085 = vmax.bf16 %v2021, 0
    %v2086 = vmax.bf16 %v2022, 0
    %v2087 = vmax.bf16 %v2023, 0
    %v2088 = vmax.bf16 %v2024, 0
    %v2089 = vmax.bf16 %v2025, 0
    %v2090 = vmax.bf16 %v2026, 0
    %v2091 = vmax.bf16 %v2027, 0
    %v2092 = vmax.bf16 %v2028, 0
    %v2093 = vmax.bf16 %v2029, 0
    %v2094 = vmax.bf16 %v2030, 0
    %v2095 = vmax.bf16 %v2031, 0
    %v2096 = vmax.bf16 %v2032, 0
    %v2097 = vmax.bf16 %v2033, 0
    %v2098 = vmax.bf16 %v2034, 0
    %v2099 = vmax.bf16 %v2035, 0
    %v2100 = vmax.bf16 %v2036, 0
    %v2101 = vmax.bf16 %v2037, 0
    %v2102 = vmax.bf16 %v2038, 0
    %v2103 = vmax.bf16 %v2039, 0
    %v2104 = vmax.bf16 %v2040, 0
    %v2105 = vmax.bf16 %v2041, 0
    %v2106 = vmax.bf16 %v2042, 0
    %v2107 = vmax.bf16 %v2043, 0
    %v2108 = vmax.bf16 %v2044, 0
    %v2109 = vmax.bf16 %v2045, 0
    %v2110 = vmax.bf16 %v2046, 0
    %v2111 = vmax.bf16 %v2047, 0
    %v2112 = vmax.bf16 %v2048, 0
    %v2113 = vmax.bf16 %v2049, 0
    %v2114 = vmax.bf16 %v2050, 0
    %v2115 = vmax.bf16 %v2051, 0
    %v2116 = vmax.bf16 %v2052, 0
    %v2117 = vmax.bf16 %v2053, 0
    %v2118 = vmax.bf16 %v2054, 0
    %v2119 = vmax.bf16 %v2055, 0
    %v2184 = vunpack.c.l.b16 %v2056
    %v2185 = vunpack.c.l.b16 %v2057
    %v2186 = vunpack.c.l.b16 %v2058
    %v2187 = vunpack.c.l.b16 %v2059
    %v2188 = vunpack.c.l.b16 %v2060
    %v2189 = vunpack.c.l.b16 %v2061
    %v2190 = vunpack.c.l.b16 %v2062
    %v2191 = vunpack.c.l.b16 %v2063
    %v2192 = vunpack.c.l.b16 %v2064
    %v2193 = vunpack.c.l.b16 %v2065
    %v2194 = vunpack.c.l.b16 %v2066
    %v2195 = vunpack.c.l.b16 %v2067
    %v2196 = vunpack.c.l.b16 %v2068
    %v2197 = vunpack.c.l.b16 %v2069
    %v2198 = vunpack.c.l.b16 %v2070
    %v2199 = vunpack.c.l.b16 %v2071
    %v2200 = vunpack.c.l.b16 %v2072
    %v2201 = vunpack.c.l.b16 %v2073
    %v2202 = vunpack.c.l.b16 %v2074
    %v2203 = vunpack.c.l.b16 %v2075
    %v2204 = vunpack.c.l.b16 %v2076
    %v2205 = vunpack.c.l.b16 %v2077
    %v2206 = vunpack.c.l.b16 %v2078
    %v2207 = vunpack.c.l.b16 %v2079
    %v2208 = vunpack.c.l.b16 %v2080
    %v2209 = vunpack.c.l.b16 %v2081
    %v2210 = vunpack.c.l.b16 %v2082
    %v2211 = vunpack.c.l.b16 %v2083
    %v2212 = vunpack.c.l.b16 %v2084
    %v2213 = vunpack.c.l.b16 %v2085
    %v2214 = vunpack.c.l.b16 %v2086
    %v2215 = vunpack.c.l.b16 %v2087
    %v2216 = vunpack.c.l.b16 %v2088
    %v2217 = vunpack.c.l.b16 %v2089
    %v2218 = vunpack.c.l.b16 %v2090
    %v2219 = vunpack.c.l.b16 %v2091
    %v2220 = vunpack.c.l.b16 %v2092
    %v2221 = vunpack.c.l.b16 %v2093
    %v2222 = vunpack.c.l.b16 %v2094
    %v2223 = vunpack.c.l.b16 %v2095
    %v2224 = vunpack.c.l.b16 %v2096
    %v2225 = vunpack.c.l.b16 %v2097
    %v2226 = vunpack.c.l.b16 %v2098
    %v2227 = vunpack.c.l.b16 %v2099
    %v2228 = vunpack.c.l.b16 %v2100
    %v2229 = vunpack.c.l.b16 %v2101
    %v2230 = vunpack.c.l.b16 %v2102
    %v2231 = vunpack.c.l.b16 %v2103
    %v2232 = vunpack.c.l.b16 %v2104
    %v2233 = vunpack.c.l.b16 %v2105
    %v2234 = vunpack.c.l.b16 %v2106
    %v2235 = vunpack.c.l.b16 %v2107
    %v2236 = vunpack.c.l.b16 %v2108
    %v2237 = vunpack.c.l.b16 %v2109
    %v2238 = vunpack.c.l.b16 %v2110
    %v2239 = vunpack.c.l.b16 %v2111
    %v2240 = vunpack.c.l.b16 %v2112
    %v2241 = vunpack.c.l.b16 %v2113
    %v2242 = vunpack.c.l.b16 %v2114
    %v2243 = vunpack.c.l.b16 %v2115
    %v2244 = vunpack.c.l.b16 %v2116
    %v2245 = vunpack.c.l.b16 %v2117
    %v2246 = vunpack.c.l.b16 %v2118
    %v2247 = vunpack.c.l.b16 %v2119
    %v2248 = vpack.c.b16 %v2185, %v2184
    %v2249 = vpack.c.b16 %v2187, %v2186
    %v2250 = vpack.c.b16 %v2189, %v2188
    %v2251 = vpack.c.b16 %v2191, %v2190
    %v2252 = vpack.c.b16 %v2193, %v2192
    %v2253 = vpack.c.b16 %v2195, %v2194
    %v2254 = vpack.c.b16 %v2197, %v2196
    %v2255 = vpack.c.b16 %v2199, %v2198
    %v2256 = vpack.c.b16 %v2201, %v2200
    %v2257 = vpack.c.b16 %v2203, %v2202
    %v2258 = vpack.c.b16 %v2205, %v2204
    %v2259 = vpack.c.b16 %v2207, %v2206
    %v2260 = vpack.c.b16 %v2209, %v2208
    %v2261 = vpack.c.b16 %v2211, %v2210
    %v2262 = vpack.c.b16 %v2213, %v2212
    %v2263 = vpack.c.b16 %v2215, %v2214
    %v2264 = vpack.c.b16 %v2217, %v2216
    %v2265 = vpack.c.b16 %v2219, %v2218
    %v2266 = vpack.c.b16 %v2221, %v2220
    %v2267 = vpack.c.b16 %v2223, %v2222
    %v2268 = vpack.c.b16 %v2225, %v2224
    %v2269 = vpack.c.b16 %v2227, %v2226
    %v2270 = vpack.c.b16 %v2229, %v2228
    %v2271 = vpack.c.b16 %v2231, %v2230
    %v2272 = vpack.c.b16 %v2233, %v2232
    %v2273 = vpack.c.b16 %v2235, %v2234
    %v2274 = vpack.c.b16 %v2237, %v2236
    %v2275 = vpack.c.b16 %v2239, %v2238
    %v2276 = vpack.c.b16 %v2241, %v2240
    %v2277 = vpack.c.b16 %v2243, %v2242
    %v2278 = vpack.c.b16 %v2245, %v2244
    %v2279 = vpack.c.b16 %v2247, %v2246
    %v2312 = vld [vmem:[%s5] sm:$0xf]
    %v2313 = vld [vmem:[%s5 + $0x4] sm:$0xf]
    %v2314 = vld [vmem:[%s5 + $0x8] sm:$0xf]
    %v2315 = vld [vmem:[%s5 + $0xc] sm:$0xf]
    %v2316 = vld [vmem:[%s5 + $0x10] sm:$0xf]
    %v2317 = vld [vmem:[%s5 + $0x14] sm:$0xf]
    %v2318 = vld [vmem:[%s5 + $0x18] sm:$0xf]
    %v2319 = vld [vmem:[%s5 + $0x1c] sm:$0xf]
    %v2320 = vld [vmem:[%s5 + $0x20] sm:$0xf]
    %v2321 = vld [vmem:[%s5 + $0x24] sm:$0xf]
    %v2322 = vld [vmem:[%s5 + $0x28] sm:$0xf]
    %v2323 = vld [vmem:[%s5 + $0x2c] sm:$0xf]
    %v2324 = vld [vmem:[%s5 + $0x30] sm:$0xf]
    %v2325 = vld [vmem:[%s5 + $0x34] sm:$0xf]
    %v2326 = vld [vmem:[%s5 + $0x38] sm:$0xf]
    %v2327 = vld [vmem:[%s5 + $0x3c] sm:$0xf]
    %v2328 = vld [vmem:[%s5 + $0x40] sm:$0xf]
    %v2329 = vld [vmem:[%s5 + $0x44] sm:$0xf]
    %v2330 = vld [vmem:[%s5 + $0x48] sm:$0xf]
    %v2331 = vld [vmem:[%s5 + $0x4c] sm:$0xf]
    %v2332 = vld [vmem:[%s5 + $0x50] sm:$0xf]
    %v2333 = vld [vmem:[%s5 + $0x54] sm:$0xf]
    %v2334 = vld [vmem:[%s5 + $0x58] sm:$0xf]
    %v2335 = vld [vmem:[%s5 + $0x5c] sm:$0xf]
    %v2336 = vld [vmem:[%s5 + $0x60] sm:$0xf]
    %v2337 = vld [vmem:[%s5 + $0x64] sm:$0xf]
    %v2338 = vld [vmem:[%s5 + $0x68] sm:$0xf]
    %v2339 = vld [vmem:[%s5 + $0x6c] sm:$0xf]
    %v2340 = vld [vmem:[%s5 + $0x70] sm:$0xf]
    %v2341 = vld [vmem:[%s5 + $0x74] sm:$0xf]
    %v2342 = vld [vmem:[%s5 + $0x78] sm:$0xf]
    %v2343 = vld [vmem:[%s5 + $0x7c] sm:$0xf]
    %v2376 = vunpack.c.l.b16 %v2312
    %v2377 = vunpack.c.l.b16 %v2313
    %v2378 = vunpack.c.l.b16 %v2314
    %v2379 = vunpack.c.l.b16 %v2315
    %v2380 = vunpack.c.l.b16 %v2316
    %v2381 = vunpack.c.l.b16 %v2317
    %v2382 = vunpack.c.l.b16 %v2318
    %v2383 = vunpack.c.l.b16 %v2319
    %v2384 = vunpack.c.l.b16 %v2320
    %v2385 = vunpack.c.l.b16 %v2321
    %v2386 = vunpack.c.l.b16 %v2322
    %v2387 = vunpack.c.l.b16 %v2323
    %v2388 = vunpack.c.l.b16 %v2324
    %v2389 = vunpack.c.l.b16 %v2325
    %v2390 = vunpack.c.l.b16 %v2326
    %v2391 = vunpack.c.l.b16 %v2327
    %v2392 = vunpack.c.l.b16 %v2328
    %v2393 = vunpack.c.l.b16 %v2329
    %v2394 = vunpack.c.l.b16 %v2330
    %v2395 = vunpack.c.l.b16 %v2331
    %v2396 = vunpack.c.l.b16 %v2332
    %v2397 = vunpack.c.l.b16 %v2333
    %v2398 = vunpack.c.l.b16 %v2334
    %v2399 = vunpack.c.l.b16 %v2335
    %v2400 = vunpack.c.l.b16 %v2336
    %v2401 = vunpack.c.l.b16 %v2337
    %v2402 = vunpack.c.l.b16 %v2338
    %v2403 = vunpack.c.l.b16 %v2339
    %v2404 = vunpack.c.l.b16 %v2340
    %v2405 = vunpack.c.l.b16 %v2341
    %v2406 = vunpack.c.l.b16 %v2342
    %v2407 = vunpack.c.l.b16 %v2343
    %v2408 = vpack.c.b16 %v2377, %v2376
    %v2409 = vpack.c.b16 %v2379, %v2378
    %v2410 = vpack.c.b16 %v2381, %v2380
    %v2411 = vpack.c.b16 %v2383, %v2382
    %v2412 = vpack.c.b16 %v2385, %v2384
    %v2413 = vpack.c.b16 %v2387, %v2386
    %v2414 = vpack.c.b16 %v2389, %v2388
    %v2415 = vpack.c.b16 %v2391, %v2390
    %v2416 = vpack.c.b16 %v2393, %v2392
    %v2417 = vpack.c.b16 %v2395, %v2394
    %v2418 = vpack.c.b16 %v2397, %v2396
    %v2419 = vpack.c.b16 %v2399, %v2398
    %v2420 = vpack.c.b16 %v2401, %v2400
    %v2421 = vpack.c.b16 %v2403, %v2402
    %v2422 = vpack.c.b16 %v2405, %v2404
    %v2423 = vpack.c.b16 %v2407, %v2406
    %2440 = vmatprep.subr.bf16.mxu0 0
    %2441 = vmatpush1.bf16.msra.mxu0 %v2408
    %2442 = vmatprep.subr.bf16.mxu0 0
    %2443 = vmatpush1.bf16.msra.mxu0 %v2409
    %2444 = vmatprep.subr.bf16.mxu0 0
    %2445 = vmatpush1.bf16.msra.mxu0 %v2410
    %2446 = vmatprep.subr.bf16.mxu0 0
    %2447 = vmatpush1.bf16.msra.mxu0 %v2411
    %2448 = vmatprep.subr.bf16.mxu0 0
    %2449 = vmatpush1.bf16.msra.mxu0 %v2412
    %2450 = vmatprep.subr.bf16.mxu0 0
    %2451 = vmatpush1.bf16.msra.mxu0 %v2413
    %2452 = vmatprep.subr.bf16.mxu0 0
    %2453 = vmatpush1.bf16.msra.mxu0 %v2414
    %2454 = vmatprep.subr.bf16.mxu0 0
    %2455 = vmatpush1.bf16.msra.mxu0 %v2415
    %2456 = vmatprep.subr.bf16.mxu0 0
    %2457 = vmatpush1.bf16.msra.mxu0 %v2416
    %2458 = vmatprep.subr.bf16.mxu0 0
    %2459 = vmatpush1.bf16.msra.mxu0 %v2417
    %2460 = vmatprep.subr.bf16.mxu0 0
    %2461 = vmatpush1.bf16.msra.mxu0 %v2418
    %2462 = vmatprep.subr.bf16.mxu0 0
    %2463 = vmatpush1.bf16.msra.mxu0 %v2419
    %2464 = vmatprep.subr.bf16.mxu0 0
    %2465 = vmatpush1.bf16.msra.mxu0 %v2420
    %2466 = vmatprep.subr.bf16.mxu0 0
    %2467 = vmatpush1.bf16.msra.mxu0 %v2421
    %2468 = vmatprep.subr.bf16.mxu0 0
    %2469 = vmatpush1.bf16.msra.mxu0 %v2422
    %2470 = vmatprep.subr.bf16.mxu0 0
    %2471 = vmatpush1.bf16.msra.mxu0 %v2423
    %2472 = vmatprep.mubr.bf16.mxu0 %v2248
    %2473 = vmatmul.mubr.bf16.gmra.mrb[0].mxu0 %v1960
    %v2474 = vpop.f32.mrb[0].mxu0
    %v2475 = vadd.f32 0.0, %v2474
    %v2476 = vpop.f32.mrb[0].mxu0
    %v2477 = vpop.f32.mrb[0].mxu0
    %v2478 = vadd.f32 0.0, %v2477
    %v2479 = vpop.f32.mrb[0].mxu0
    %2480 = vmatprep.mubr.bf16.mxu0 %v2249
    %2481 = vmatmul.mubr.bf16.gmra.mrb[0].mxu0 %v1961
    %v2482 = vpop.f32.mrb[0].mxu0
    %v2483 = vadd.f32 0.0, %v2482
    %v2484 = vpop.f32.mrb[0].mxu0
    %v2485 = vpop.f32.mrb[0].mxu0
    %v2486 = vadd.f32 0.0, %v2485
    %v2487 = vpop.f32.mrb[0].mxu0
    %2488 = vmatprep.mubr.bf16.mxu0 %v2250
    %2489 = vmatmul.mubr.bf16.gmra.mrb[0].mxu0 %v1962
    %v2490 = vpop.f32.mrb[0].mxu0
    %v2491 = vadd.f32 0.0, %v2490
    %v2492 = vpop.f32.mrb[0].mxu0
    %v2493 = vpop.f32.mrb[0].mxu0
    %v2494 = vadd.f32 0.0, %v2493
    %v2495 = vpop.f32.mrb[0].mxu0
    %2496 = vmatprep.mubr.bf16.mxu0 %v2251
    %2497 = vmatmul.mubr.bf16.gmra.mrb[0].mxu0 %v1963
    %v2498 = vpop.f32.mrb[0].mxu0
    %v2499 = vadd.f32 0.0, %v2498
    %v2500 = vpop.f32.mrb[0].mxu0
    %v2501 = vpop.f32.mrb[0].mxu0
    %v2502 = vadd.f32 0.0, %v2501
    %v2503 = vpop.f32.mrb[0].mxu0
    %2504 = vmatprep.mubr.bf16.mxu0 %v2252
    %2505 = vmatmul.mubr.bf16.gmra.mrb[0].mxu0 %v1964
    %v2506 = vpop.f32.mrb[0].mxu0
    %v2507 = vadd.f32 0.0, %v2506
    %v2508 = vpop.f32.mrb[0].mxu0
    %v2509 = vpop.f32.mrb[0].mxu0
    %v2510 = vadd.f32 0.0, %v2509
    %v2511 = vpop.f32.mrb[0].mxu0
    %2512 = vmatprep.mubr.bf16.mxu0 %v2253
    %2513 = vmatmul.mubr.bf16.gmra.mrb[0].mxu0 %v1965
    %v2514 = vpop.f32.mrb[0].mxu0
    %v2515 = vadd.f32 0.0, %v2514
    %v2516 = vpop.f32.mrb[0].mxu0
    %v2517 = vpop.f32.mrb[0].mxu0
    %v2518 = vadd.f32 0.0, %v2517
    %v2519 = vpop.f32.mrb[0].mxu0
    %2520 = vmatprep.mubr.bf16.mxu0 %v2254
    %2521 = vmatmul.mubr.bf16.gmra.mrb[0].mxu0 %v1966
    %v2522 = vpop.f32.mrb[0].mxu0
    %v2523 = vadd.f32 0.0, %v2522
    %v2524 = vpop.f32.mrb[0].mxu0
    %v2525 = vpop.f32.mrb[0].mxu0
    %v2526 = vadd.f32 0.0, %v2525
    %v2527 = vpop.f32.mrb[0].mxu0
    %2528 = vmatprep.mubr.bf16.mxu0 %v2255
    %2529 = vmatmul.mubr.bf16.gmra.mrb[0].mxu0 %v1967
    %v2530 = vpop.f32.mrb[0].mxu0
    %v2531 = vadd.f32 0.0, %v2530
    %v2532 = vpop.f32.mrb[0].mxu0
    %v2533 = vpop.f32.mrb[0].mxu0
    %v2534 = vadd.f32 0.0, %v2533
    %v2535 = vpop.f32.mrb[0].mxu0
    %2536 = vmatprep.mubr.bf16.mxu0 %v2256
    %2537 = vmatmul.mubr.bf16.gmra.mrb[0].mxu0 %v1968
    %v2538 = vpop.f32.mrb[0].mxu0
    %v2539 = vadd.f32 0.0, %v2538
    %v2540 = vpop.f32.mrb[0].mxu0
    %v2541 = vpop.f32.mrb[0].mxu0
    %v2542 = vadd.f32 0.0, %v2541
    %v2543 = vpop.f32.mrb[0].mxu0
    %2544 = vmatprep.mubr.bf16.mxu0 %v2257
    %2545 = vmatmul.mubr.bf16.gmra.mrb[0].mxu0 %v1969
    %v2546 = vpop.f32.mrb[0].mxu0
    %v2547 = vadd.f32 0.0, %v2546
    %v2548 = vpop.f32.mrb[0].mxu0
    %v2549 = vpop.f32.mrb[0].mxu0
    %v2550 = vadd.f32 0.0, %v2549
    %v2551 = vpop.f32.mrb[0].mxu0
    %2552 = vmatprep.mubr.bf16.mxu0 %v2258
    %2553 = vmatmul.mubr.bf16.gmra.mrb[0].mxu0 %v1970
    %v2554 = vpop.f32.mrb[0].mxu0
    %v2555 = vadd.f32 0.0, %v2554
    %v2556 = vpop.f32.mrb[0].mxu0
    %v2557 = vpop.f32.mrb[0].mxu0
    %v2558 = vadd.f32 0.0, %v2557
    %v2559 = vpop.f32.mrb[0].mxu0
    %2560 = vmatprep.mubr.bf16.mxu0 %v2259
    %2561 = vmatmul.mubr.bf16.gmra.mrb[0].mxu0 %v1971
    %v2562 = vpop.f32.mrb[0].mxu0
    %v2563 = vadd.f32 0.0, %v2562
    %v2564 = vpop.f32.mrb[0].mxu0
    %v2565 = vpop.f32.mrb[0].mxu0
    %v2566 = vadd.f32 0.0, %v2565
    %v2567 = vpop.f32.mrb[0].mxu0
    %2568 = vmatprep.mubr.bf16.mxu0 %v2260
    %2569 = vmatmul.mubr.bf16.gmra.mrb[0].mxu0 %v1972
    %v2570 = vpop.f32.mrb[0].mxu0
    %v2571 = vadd.f32 0.0, %v2570
    %v2572 = vpop.f32.mrb[0].mxu0
    %v2573 = vpop.f32.mrb[0].mxu0
    %v2574 = vadd.f32 0.0, %v2573
    %v2575 = vpop.f32.mrb[0].mxu0
    %2576 = vmatprep.mubr.bf16.mxu0 %v2261
    %2577 = vmatmul.mubr.bf16.gmra.mrb[0].mxu0 %v1973
    %v2578 = vpop.f32.mrb[0].mxu0
    %v2579 = vadd.f32 0.0, %v2578
    %v2580 = vpop.f32.mrb[0].mxu0
    %v2581 = vpop.f32.mrb[0].mxu0
    %v2582 = vadd.f32 0.0, %v2581
    %v2583 = vpop.f32.mrb[0].mxu0
    %2584 = vmatprep.mubr.bf16.mxu0 %v2262
    %2585 = vmatmul.mubr.bf16.gmra.mrb[0].mxu0 %v1974
    %v2586 = vpop.f32.mrb[0].mxu0
    %v2587 = vadd.f32 0.0, %v2586
    %v2588 = vpop.f32.mrb[0].mxu0
    %v2589 = vpop.f32.mrb[0].mxu0
    %v2590 = vadd.f32 0.0, %v2589
    %v2591 = vpop.f32.mrb[0].mxu0
    %2592 = vmatprep.mubr.bf16.mxu0 %v2263
    %2593 = vmatmul.mubr.bf16.gmra.mrb[0].mxu0 %v1975
    %v2594 = vpop.f32.mrb[0].mxu0
    %v2595 = vadd.f32 0.0, %v2594
    %v2596 = vpop.f32.mrb[0].mxu0
    %v2597 = vpop.f32.mrb[0].mxu0
    %v2598 = vadd.f32 0.0, %v2597
    %v2599 = vpop.f32.mrb[0].mxu0
    %2600 = vmatprep.mubr.bf16.mxu0 %v2264
    %2601 = vmatmul.mubr.bf16.gmra.mrb[0].mxu0 %v1976
    %v2602 = vpop.f32.mrb[0].mxu0
    %v2603 = vadd.f32 0.0, %v2602
    %v2604 = vpop.f32.mrb[0].mxu0
    %v2605 = vpop.f32.mrb[0].mxu0
    %v2606 = vadd.f32 0.0, %v2605
    %v2607 = vpop.f32.mrb[0].mxu0
    %2608 = vmatprep.mubr.bf16.mxu0 %v2265
    %2609 = vmatmul.mubr.bf16.gmra.mrb[0].mxu0 %v1977
    %v2610 = vpop.f32.mrb[0].mxu0
    %v2611 = vadd.f32 0.0, %v2610
    %v2612 = vpop.f32.mrb[0].mxu0
    %v2613 = vpop.f32.mrb[0].mxu0
    %v2614 = vadd.f32 0.0, %v2613
    %v2615 = vpop.f32.mrb[0].mxu0
    %2616 = vmatprep.mubr.bf16.mxu0 %v2266
    %2617 = vmatmul.mubr.bf16.gmra.mrb[0].mxu0 %v1978
    %v2618 = vpop.f32.mrb[0].mxu0
    %v2619 = vadd.f32 0.0, %v2618
    %v2620 = vpop.f32.mrb[0].mxu0
    %v2621 = vpop.f32.mrb[0].mxu0
    %v2622 = vadd.f32 0.0, %v2621
    %v2623 = vpop.f32.mrb[0].mxu0
    %2624 = vmatprep.mubr.bf16.mxu0 %v2267
    %2625 = vmatmul.mubr.bf16.gmra.mrb[0].mxu0 %v1979
    %v2626 = vpop.f32.mrb[0].mxu0
    %v2627 = vadd.f32 0.0, %v2626
    %v2628 = vpop.f32.mrb[0].mxu0
    %v2629 = vpop.f32.mrb[0].mxu0
    %v2630 = vadd.f32 0.0, %v2629
    %v2631 = vpop.f32.mrb[0].mxu0
    %2632 = vmatprep.mubr.bf16.mxu0 %v2268
    %2633 = vmatmul.mubr.bf16.gmra.mrb[0].mxu0 %v1980
    %v2634 = vpop.f32.mrb[0].mxu0
    %v2635 = vadd.f32 0.0, %v2634
    %v2636 = vpop.f32.mrb[0].mxu0
    %v2637 = vpop.f32.mrb[0].mxu0
    %v2638 = vadd.f32 0.0, %v2637
    %v2639 = vpop.f32.mrb[0].mxu0
    %2640 = vmatprep.mubr.bf16.mxu0 %v2269
    %2641 = vmatmul.mubr.bf16.gmra.mrb[0].mxu0 %v1981
    %v2642 = vpop.f32.mrb[0].mxu0
    %v2643 = vadd.f32 0.0, %v2642
    %v2644 = vpop.f32.mrb[0].mxu0
    %v2645 = vpop.f32.mrb[0].mxu0
    %v2646 = vadd.f32 0.0, %v2645
    %v2647 = vpop.f32.mrb[0].mxu0
    %2648 = vmatprep.mubr.bf16.mxu0 %v2270
    %2649 = vmatmul.mubr.bf16.gmra.mrb[0].mxu0 %v1982
    %v2650 = vpop.f32.mrb[0].mxu0
    %v2651 = vadd.f32 0.0, %v2650
    %v2652 = vpop.f32.mrb[0].mxu0
    %v2653 = vpop.f32.mrb[0].mxu0
    %v2654 = vadd.f32 0.0, %v2653
    %v2655 = vpop.f32.mrb[0].mxu0
    %2656 = vmatprep.mubr.bf16.mxu0 %v2271
    %2657 = vmatmul.mubr.bf16.gmra.mrb[0].mxu0 %v1983
    %v2658 = vpop.f32.mrb[0].mxu0
    %v2659 = vadd.f32 0.0, %v2658
    %v2660 = vpop.f32.mrb[0].mxu0
    %v2661 = vpop.f32.mrb[0].mxu0
    %v2662 = vadd.f32 0.0, %v2661
    %v2663 = vpop.f32.mrb[0].mxu0
    %2664 = vmatprep.mubr.bf16.mxu0 %v2272
    %2665 = vmatmul.mubr.bf16.gmra.mrb[0].mxu0 %v1984
    %v2666 = vpop.f32.mrb[0].mxu0
    %v2667 = vadd.f32 0.0, %v2666
    %v2668 = vpop.f32.mrb[0].mxu0
    %v2669 = vpop.f32.mrb[0].mxu0
    %v2670 = vadd.f32 0.0, %v2669
    %v2671 = vpop.f32.mrb[0].mxu0
    %2672 = vmatprep.mubr.bf16.mxu0 %v2273
    %2673 = vmatmul.mubr.bf16.gmra.mrb[0].mxu0 %v1985
    %v2674 = vpop.f32.mrb[0].mxu0
    %v2675 = vadd.f32 0.0, %v2674
    %v2676 = vpop.f32.mrb[0].mxu0
    %v2677 = vpop.f32.mrb[0].mxu0
    %v2678 = vadd.f32 0.0, %v2677
    %v2679 = vpop.f32.mrb[0].mxu0
    %2680 = vmatprep.mubr.bf16.mxu0 %v2274
    %2681 = vmatmul.mubr.bf16.gmra.mrb[0].mxu0 %v1986
    %v2682 = vpop.f32.mrb[0].mxu0
    %v2683 = vadd.f32 0.0, %v2682
    %v2684 = vpop.f32.mrb[0].mxu0
    %v2685 = vpop.f32.mrb[0].mxu0
    %v2686 = vadd.f32 0.0, %v2685
    %v2687 = vpop.f32.mrb[0].mxu0
    %2688 = vmatprep.mubr.bf16.mxu0 %v2275
    %2689 = vmatmul.mubr.bf16.gmra.mrb[0].mxu0 %v1987
    %v2690 = vpop.f32.mrb[0].mxu0
    %v2691 = vadd.f32 0.0, %v2690
    %v2692 = vpop.f32.mrb[0].mxu0
    %v2693 = vpop.f32.mrb[0].mxu0
    %v2694 = vadd.f32 0.0, %v2693
    %v2695 = vpop.f32.mrb[0].mxu0
    %2696 = vmatprep.mubr.bf16.mxu0 %v2276
    %2697 = vmatmul.mubr.bf16.gmra.mrb[0].mxu0 %v1988
    %v2698 = vpop.f32.mrb[0].mxu0
    %v2699 = vadd.f32 0.0, %v2698
    %v2700 = vpop.f32.mrb[0].mxu0
    %v2701 = vpop.f32.mrb[0].mxu0
    %v2702 = vadd.f32 0.0, %v2701
    %v2703 = vpop.f32.mrb[0].mxu0
    %2704 = vmatprep.mubr.bf16.mxu0 %v2277
    %2705 = vmatmul.mubr.bf16.gmra.mrb[0].mxu0 %v1989
    %v2706 = vpop.f32.mrb[0].mxu0
    %v2707 = vadd.f32 0.0, %v2706
    %v2708 = vpop.f32.mrb[0].mxu0
    %v2709 = vpop.f32.mrb[0].mxu0
    %v2710 = vadd.f32 0.0, %v2709
    %v2711 = vpop.f32.mrb[0].mxu0
    %2712 = vmatprep.mubr.bf16.mxu0 %v2278
    %2713 = vmatmul.mubr.bf16.gmra.mrb[0].mxu0 %v1990
    %v2714 = vpop.f32.mrb[0].mxu0
    %v2715 = vadd.f32 0.0, %v2714
    %v2716 = vpop.f32.mrb[0].mxu0
    %v2717 = vpop.f32.mrb[0].mxu0
    %v2718 = vadd.f32 0.0, %v2717
    %v2719 = vpop.f32.mrb[0].mxu0
    %2720 = vmatprep.mubr.bf16.mxu0 %v2279
    %2721 = vmatmul.mubr.bf16.gmra.mrb[0].mxu0 %v1991
    %v2722 = vpop.f32.mrb[0].mxu0
    %v2723 = vadd.f32 0.0, %v2722
    %v2724 = vpop.f32.mrb[0].mxu0
    %v2725 = vpop.f32.mrb[0].mxu0
    %v2726 = vadd.f32 0.0, %v2725
    %v2727 = vpop.f32.mrb[0].mxu0
    %2728 = vdwg.mxu0
    %v2729 = vpack.c.bf16 %v2478, %v2475
    %v2730 = vpack.c.bf16 %v2486, %v2483
    %v2731 = vpack.c.bf16 %v2494, %v2491
    %v2732 = vpack.c.bf16 %v2502, %v2499
    %v2733 = vpack.c.bf16 %v2510, %v2507
    %v2734 = vpack.c.bf16 %v2518, %v2515
    %v2735 = vpack.c.bf16 %v2526, %v2523
    %v2736 = vpack.c.bf16 %v2534, %v2531
    %v2737 = vpack.c.bf16 %v2542, %v2539
    %v2738 = vpack.c.bf16 %v2550, %v2547
    %v2739 = vpack.c.bf16 %v2558, %v2555
    %v2740 = vpack.c.bf16 %v2566, %v2563
    %v2741 = vpack.c.bf16 %v2574, %v2571
    %v2742 = vpack.c.bf16 %v2582, %v2579
    %v2743 = vpack.c.bf16 %v2590, %v2587
    %v2744 = vpack.c.bf16 %v2598, %v2595
    %v2745 = vpack.c.bf16 %v2606, %v2603
    %v2746 = vpack.c.bf16 %v2614, %v2611
    %v2747 = vpack.c.bf16 %v2622, %v2619
    %v2748 = vpack.c.bf16 %v2630, %v2627
    %v2749 = vpack.c.bf16 %v2638, %v2635
    %v2750 = vpack.c.bf16 %v2646, %v2643
    %v2751 = vpack.c.bf16 %v2654, %v2651
    %v2752 = vpack.c.bf16 %v2662, %v2659
    %v2753 = vpack.c.bf16 %v2670, %v2667
    %v2754 = vpack.c.bf16 %v2678, %v2675
    %v2755 = vpack.c.bf16 %v2686, %v2683
    %v2756 = vpack.c.bf16 %v2694, %v2691
    %v2757 = vpack.c.bf16 %v2702, %v2699
    %v2758 = vpack.c.bf16 %v2710, %v2707
    %v2759 = vpack.c.bf16 %v2718, %v2715
    %v2760 = vpack.c.bf16 %v2726, %v2723
    %v2793 = vunpack.c.l.b16 %v2729
    %v2794 = vunpack.c.h.b16 %v2729
    %v2795 = vunpack.c.l.b16 %v2730
    %v2796 = vunpack.c.h.b16 %v2730
    %v2797 = vunpack.c.l.b16 %v2731
    %v2798 = vunpack.c.h.b16 %v2731
    %v2799 = vunpack.c.l.b16 %v2732
    %v2800 = vunpack.c.h.b16 %v2732
    %v2801 = vunpack.c.l.b16 %v2733
    %v2802 = vunpack.c.h.b16 %v2733
    %v2803 = vunpack.c.l.b16 %v2734
    %v2804 = vunpack.c.h.b16 %v2734
    %v2805 = vunpack.c.l.b16 %v2735
    %v2806 = vunpack.c.h.b16 %v2735
    %v2807 = vunpack.c.l.b16 %v2736
    %v2808 = vunpack.c.h.b16 %v2736
    %v2809 = vunpack.c.l.b16 %v2737
    %v2810 = vunpack.c.h.b16 %v2737
    %v2811 = vunpack.c.l.b16 %v2738
    %v2812 = vunpack.c.h.b16 %v2738
    %v2813 = vunpack.c.l.b16 %v2739
    %v2814 = vunpack.c.h.b16 %v2739
    %v2815 = vunpack.c.l.b16 %v2740
    %v2816 = vunpack.c.h.b16 %v2740
    %v2817 = vunpack.c.l.b16 %v2741
    %v2818 = vunpack.c.h.b16 %v2741
    %v2819 = vunpack.c.l.b16 %v2742
    %v2820 = vunpack.c.h.b16 %v2742
    %v2821 = vunpack.c.l.b16 %v2743
    %v2822 = vunpack.c.h.b16 %v2743
    %v2823 = vunpack.c.l.b16 %v2744
    %v2824 = vunpack.c.h.b16 %v2744
    %v2825 = vunpack.c.l.b16 %v2745
    %v2826 = vunpack.c.h.b16 %v2745
    %v2827 = vunpack.c.l.b16 %v2746
    %v2828 = vunpack.c.h.b16 %v2746
    %v2829 = vunpack.c.l.b16 %v2747
    %v2830 = vunpack.c.h.b16 %v2747
    %v2831 = vunpack.c.l.b16 %v2748
    %v2832 = vunpack.c.h.b16 %v2748
    %v2833 = vunpack.c.l.b16 %v2749
    %v2834 = vunpack.c.h.b16 %v2749
    %v2835 = vunpack.c.l.b16 %v2750
    %v2836 = vunpack.c.h.b16 %v2750
    %v2837 = vunpack.c.l.b16 %v2751
    %v2838 = vunpack.c.h.b16 %v2751
    %v2839 = vunpack.c.l.b16 %v2752
    %v2840 = vunpack.c.h.b16 %v2752
    %v2841 = vunpack.c.l.b16 %v2753
    %v2842 = vunpack.c.h.b16 %v2753
    %v2843 = vunpack.c.l.b16 %v2754
    %v2844 = vunpack.c.h.b16 %v2754
    %v2845 = vunpack.c.l.b16 %v2755
    %v2846 = vunpack.c.h.b16 %v2755
    %v2847 = vunpack.c.l.b16 %v2756
    %v2848 = vunpack.c.h.b16 %v2756
    %v2849 = vunpack.c.l.b16 %v2757
    %v2850 = vunpack.c.h.b16 %v2757
    %v2851 = vunpack.c.l.b16 %v2758
    %v2852 = vunpack.c.h.b16 %v2758
    %v2853 = vunpack.c.l.b16 %v2759
    %v2854 = vunpack.c.h.b16 %v2759
    %v2855 = vunpack.c.l.b16 %v2760
    %v2856 = vunpack.c.h.b16 %v2760
    %v2857 = vpack.c.b16 %v2793, %v2793
    %v2858 = vpack.c.b16 %v2794, %v2794
    %v2859 = vpack.c.b16 %v2795, %v2795
    %v2860 = vpack.c.b16 %v2796, %v2796
    %v2861 = vpack.c.b16 %v2797, %v2797
    %v2862 = vpack.c.b16 %v2798, %v2798
    %v2863 = vpack.c.b16 %v2799, %v2799
    %v2864 = vpack.c.b16 %v2800, %v2800
    %v2865 = vpack.c.b16 %v2801, %v2801
    %v2866 = vpack.c.b16 %v2802, %v2802
    %v2867 = vpack.c.b16 %v2803, %v2803
    %v2868 = vpack.c.b16 %v2804, %v2804
    %v2869 = vpack.c.b16 %v2805, %v2805
    %v2870 = vpack.c.b16 %v2806, %v2806
    %v2871 = vpack.c.b16 %v2807, %v2807
    %v2872 = vpack.c.b16 %v2808, %v2808
    %v2873 = vpack.c.b16 %v2809, %v2809
    %v2874 = vpack.c.b16 %v2810, %v2810
    %v2875 = vpack.c.b16 %v2811, %v2811
    %v2876 = vpack.c.b16 %v2812, %v2812
    %v2877 = vpack.c.b16 %v2813, %v2813
    %v2878 = vpack.c.b16 %v2814, %v2814
    %v2879 = vpack.c.b16 %v2815, %v2815
    %v2880 = vpack.c.b16 %v2816, %v2816
    %v2881 = vpack.c.b16 %v2817, %v2817
    %v2882 = vpack.c.b16 %v2818, %v2818
    %v2883 = vpack.c.b16 %v2819, %v2819
    %v2884 = vpack.c.b16 %v2820, %v2820
    %v2885 = vpack.c.b16 %v2821, %v2821
    %v2886 = vpack.c.b16 %v2822, %v2822
    %v2887 = vpack.c.b16 %v2823, %v2823
    %v2888 = vpack.c.b16 %v2824, %v2824
    %v2889 = vpack.c.b16 %v2825, %v2825
    %v2890 = vpack.c.b16 %v2826, %v2826
    %v2891 = vpack.c.b16 %v2827, %v2827
    %v2892 = vpack.c.b16 %v2828, %v2828
    %v2893 = vpack.c.b16 %v2829, %v2829
    %v2894 = vpack.c.b16 %v2830, %v2830
    %v2895 = vpack.c.b16 %v2831, %v2831
    %v2896 = vpack.c.b16 %v2832, %v2832
    %v2897 = vpack.c.b16 %v2833, %v2833
    %v2898 = vpack.c.b16 %v2834, %v2834
    %v2899 = vpack.c.b16 %v2835, %v2835
    %v2900 = vpack.c.b16 %v2836, %v2836
    %v2901 = vpack.c.b16 %v2837, %v2837
    %v2902 = vpack.c.b16 %v2838, %v2838
    %v2903 = vpack.c.b16 %v2839, %v2839
    %v2904 = vpack.c.b16 %v2840, %v2840
    %v2905 = vpack.c.b16 %v2841, %v2841
    %v2906 = vpack.c.b16 %v2842, %v2842
    %v2907 = vpack.c.b16 %v2843, %v2843
    %v2908 = vpack.c.b16 %v2844, %v2844
    %v2909 = vpack.c.b16 %v2845, %v2845
    %v2910 = vpack.c.b16 %v2846, %v2846
    %v2911 = vpack.c.b16 %v2847, %v2847
    %v2912 = vpack.c.b16 %v2848, %v2848
    %v2913 = vpack.c.b16 %v2849, %v2849
    %v2914 = vpack.c.b16 %v2850, %v2850
    %v2915 = vpack.c.b16 %v2851, %v2851
    %v2916 = vpack.c.b16 %v2852, %v2852
    %v2917 = vpack.c.b16 %v2853, %v2853
    %v2918 = vpack.c.b16 %v2854, %v2854
    %v2919 = vpack.c.b16 %v2855, %v2855
    %v2920 = vpack.c.b16 %v2856, %v2856
    %2985 = vst [vmem:[%s6] sm:$0xf] %v2857
    %2986 = vst [vmem:[%s6 + $0x4] sm:$0xf] %v2858
    %2987 = vst [vmem:[%s6 + $0x8] sm:$0xf] %v2859
    %2988 = vst [vmem:[%s6 + $0xc] sm:$0xf] %v2860
    %2989 = vst [vmem:[%s6 + $0x10] sm:$0xf] %v2861
    %2990 = vst [vmem:[%s6 + $0x14] sm:$0xf] %v2862
    %2991 = vst [vmem:[%s6 + $0x18] sm:$0xf] %v2863
    %2992 = vst [vmem:[%s6 + $0x1c] sm:$0xf] %v2864
    %2993 = vst [vmem:[%s6 + $0x20] sm:$0xf] %v2865
    %2994 = vst [vmem:[%s6 + $0x24] sm:$0xf] %v2866
    %2995 = vst [vmem:[%s6 + $0x28] sm:$0xf] %v2867
    %2996 = vst [vmem:[%s6 + $0x2c] sm:$0xf] %v2868
    %2997 = vst [vmem:[%s6 + $0x30] sm:$0xf] %v2869
    %2998 = vst [vmem:[%s6 + $0x34] sm:$0xf] %v2870
    %2999 = vst [vmem:[%s6 + $0x38] sm:$0xf] %v2871
    %3000 = vst [vmem:[%s6 + $0x3c] sm:$0xf] %v2872
    %3001 = vst [vmem:[%s6 + $0x40] sm:$0xf] %v2873
    %3002 = vst [vmem:[%s6 + $0x44] sm:$0xf] %v2874
    %3003 = vst [vmem:[%s6 + $0x48] sm:$0xf] %v2875
    %3004 = vst [vmem:[%s6 + $0x4c] sm:$0xf] %v2876
    %3005 = vst [vmem:[%s6 + $0x50] sm:$0xf] %v2877
    %3006 = vst [vmem:[%s6 + $0x54] sm:$0xf] %v2878
    %3007 = vst [vmem:[%s6 + $0x58] sm:$0xf] %v2879
    %3008 = vst [vmem:[%s6 + $0x5c] sm:$0xf] %v2880
    %3009 = vst [vmem:[%s6 + $0x60] sm:$0xf] %v2881
    %3010 = vst [vmem:[%s6 + $0x64] sm:$0xf] %v2882
    %3011 = vst [vmem:[%s6 + $0x68] sm:$0xf] %v2883
    %3012 = vst [vmem:[%s6 + $0x6c] sm:$0xf] %v2884
    %3013 = vst [vmem:[%s6 + $0x70] sm:$0xf] %v2885
    %3014 = vst [vmem:[%s6 + $0x74] sm:$0xf] %v2886
    %3015 = vst [vmem:[%s6 + $0x78] sm:$0xf] %v2887
    %3016 = vst [vmem:[%s6 + $0x7c] sm:$0xf] %v2888
    %3017 = vst [vmem:[%s6 + $0x80] sm:$0xf] %v2889
    %3018 = vst [vmem:[%s6 + $0x84] sm:$0xf] %v2890
    %3019 = vst [vmem:[%s6 + $0x88] sm:$0xf] %v2891
    %3020 = vst [vmem:[%s6 + $0x8c] sm:$0xf] %v2892
    %3021 = vst [vmem:[%s6 + $0x90] sm:$0xf] %v2893
    %3022 = vst [vmem:[%s6 + $0x94] sm:$0xf] %v2894
    %3023 = vst [vmem:[%s6 + $0x98] sm:$0xf] %v2895
    %3024 = vst [vmem:[%s6 + $0x9c] sm:$0xf] %v2896
    %3025 = vst [vmem:[%s6 + $0xa0] sm:$0xf] %v2897
    %3026 = vst [vmem:[%s6 + $0xa4] sm:$0xf] %v2898
    %3027 = vst [vmem:[%s6 + $0xa8] sm:$0xf] %v2899
    %3028 = vst [vmem:[%s6 + $0xac] sm:$0xf] %v2900
    %3029 = vst [vmem:[%s6 + $0xb0] sm:$0xf] %v2901
    %3030 = vst [vmem:[%s6 + $0xb4] sm:$0xf] %v2902
    %3031 = vst [vmem:[%s6 + $0xb8] sm:$0xf] %v2903
    %3032 = vst [vmem:[%s6 + $0xbc] sm:$0xf] %v2904
    %3033 = vst [vmem:[%s6 + $0xc0] sm:$0xf] %v2905
    %3034 = vst [vmem:[%s6 + $0xc4] sm:$0xf] %v2906
    %3035 = vst [vmem:[%s6 + $0xc8] sm:$0xf] %v2907
    %3036 = vst [vmem:[%s6 + $0xcc] sm:$0xf] %v2908
    %3037 = vst [vmem:[%s6 + $0xd0] sm:$0xf] %v2909
    %3038 = vst [vmem:[%s6 + $0xd4] sm:$0xf] %v2910
    %3039 = vst [vmem:[%s6 + $0xd8] sm:$0xf] %v2911
    %3040 = vst [vmem:[%s6 + $0xdc] sm:$0xf] %v2912
    %3041 = vst [vmem:[%s6 + $0xe0] sm:$0xf] %v2913
    %3042 = vst [vmem:[%s6 + $0xe4] sm:$0xf] %v2914
    %3043 = vst [vmem:[%s6 + $0xe8] sm:$0xf] %v2915
    %3044 = vst [vmem:[%s6 + $0xec] sm:$0xf] %v2916
    %3045 = vst [vmem:[%s6 + $0xf0] sm:$0xf] %v2917
    %3046 = vst [vmem:[%s6 + $0xf4] sm:$0xf] %v2918
    %3047 = vst [vmem:[%s6 + $0xf8] sm:$0xf] %v2919
    %3048 = vst [vmem:[%s6 + $0xfc] sm:$0xf] %v2920
  $region33: #{td_rumor_gcn_forward.4} parent=0 // pred_fallthru
    _
  // Predicated region
  $region34: #{td_rumor_gcn_forward.4} parent=0 // pred_check
    _
  $region35: #{td_rumor_gcn_forward.4} parent=0 // pred_check_branch
    %3050 = sbr.rel (0) target = $region37
  $region36: #{td_rumor_gcn_forward.4} parent=0 // pred_region
    _
  $region37: #{td_rumor_gcn_forward.4} parent=0 // pred_fallthru
    _
  // Predicated region
  $region38: #{td_rumor_gcn_forward.4} parent=0 // pred_check
    _
  $region39: #{td_rumor_gcn_forward.4} parent=0 // pred_check_branch
    %3052 = sbr.rel (0) target = $region41
  $region40: #{td_rumor_gcn_forward.4} parent=0 // pred_region
    _
  $region41: #{td_rumor_gcn_forward.4} parent=0 // pred_fallthru
    _

</llo_original>
